<compile_context>
chip_gen: v7x
topology: tpu7x:2x2x1
jax: 0.10.0
libtpu: 0.0.40
codegen_flags: <defaults>
</compile_context>

<pallas_src>
import functools

import jax
import jax.numpy as jnp
from jax import lax
from jax.experimental import pallas as pl
from jax.experimental.pallas import tpu as pltpu

EPS = 1e-5
_VMEM_LIMIT = 48 * 1024 * 1024  # explicit scoped-VMEM budget (fits all gens)


# ---------------------------------------------------------------------------
# Helpers
# ---------------------------------------------------------------------------
def _pick_rows(m, target):
    """Largest power-of-two row tile (>=8, <=target) dividing m, else m."""
    best = None
    d = 8
    while d <= min(m, target):
        if m % d == 0:
            best = d
        d *= 2
    return best if best is not None else m


def _cparams(grid_rank):
    return pltpu.CompilerParams(
        dimension_semantics=("parallel",) * grid_rank,
        vmem_limit_bytes=_VMEM_LIMIT)


def _row_stats(y_f32):
    """[sum; sumsq] over rows -> (2, C)."""
    return jnp.concatenate(
        [jnp.sum(y_f32, axis=0, keepdims=True),
         jnp.sum(y_f32 * y_f32, axis=0, keepdims=True)], axis=0)


def _finalize_bn(partial_stats, gamma, beta, count):
    """(tiles, 2, C) per-tile partials -> per-channel BN (scale, shift), f32."""
    s = jnp.sum(partial_stats[:, 0, :], axis=0)
    s2 = jnp.sum(partial_stats[:, 1, :], axis=0)
    mean = s / count
    var = s2 / count - mean * mean
    scale = gamma * lax.rsqrt(var + EPS)
    shift = beta - mean * scale
    return scale.reshape(1, -1), shift.reshape(1, -1)


# ---------------------------------------------------------------------------
# Kernel 1: conv1 (1x1) + downsample conv (1x1) fused; emits BN partial stats.
# ---------------------------------------------------------------------------
def _k1_conv1_ds(x_ref, w1_ref, b1_ref, wd_ref, bd_ref,
                 y1_ref, yd_ref, s1_ref, sd_ref):
    x = x_ref[...]                                            # (TM, Cin) bf16
    y1 = jnp.dot(x, w1_ref[...], preferred_element_type=jnp.float32) + b1_ref[...]
    yd = jnp.dot(x, wd_ref[...], preferred_element_type=jnp.float32) + bd_ref[...]
    y1b = y1.astype(jnp.bfloat16)
    ydb = yd.astype(jnp.bfloat16)
    y1_ref[...] = y1b
    yd_ref[...] = ydb
    s1_ref[0] = _row_stats(y1b.astype(jnp.float32))
    sd_ref[0] = _row_stats(ydb.astype(jnp.float32))


def conv1_and_downsample(x2d, w1, b1, wd, bd, block_rows):
    m, cin = x2d.shape
    mid = w1.shape[1]
    cout = wd.shape[1]
    tm = _pick_rows(m, block_rows)
    nt = m // tm
    return pl.pallas_call(
        _k1_conv1_ds,
        grid=(nt,),
        in_specs=[
            pl.BlockSpec((tm, cin), lambda i: (i, 0)),
            pl.BlockSpec((cin, mid), lambda i: (0, 0)),
            pl.BlockSpec((1, mid), lambda i: (0, 0)),
            pl.BlockSpec((cin, cout), lambda i: (0, 0)),
            pl.BlockSpec((1, cout), lambda i: (0, 0)),
        ],
        out_specs=[
            pl.BlockSpec((tm, mid), lambda i: (i, 0)),
            pl.BlockSpec((tm, cout), lambda i: (i, 0)),
            pl.BlockSpec((1, 2, mid), lambda i: (i, 0, 0)),
            pl.BlockSpec((1, 2, cout), lambda i: (i, 0, 0)),
        ],
        out_shape=[
            jax.ShapeDtypeStruct((m, mid), jnp.bfloat16),
            jax.ShapeDtypeStruct((m, cout), jnp.bfloat16),
            jax.ShapeDtypeStruct((nt, 2, mid), jnp.float32),
            jax.ShapeDtypeStruct((nt, 2, cout), jnp.float32),
        ],
        compiler_params=_cparams(1),
    )(x2d, w1, b1.reshape(1, -1), wd, bd.reshape(1, -1))


# ---------------------------------------------------------------------------
# Kernel 2: BN1+ReLU (applied on the fly) + grouped 3x3 conv (pad=1, stride=1).
# Per-image grid; zero-halo handled with a VMEM scratch (no host pad, no
# full-activation shifted copies); emits BN2 partial stats.
# ---------------------------------------------------------------------------
def _k2_bn1_gconv3x3(h, w, y1_ref, sc_ref, sh_ref, w2_ref, b2_ref,
                     y2_ref, st_ref, pad_scr):
    mid = y1_ref.shape[-1]
    a1 = jnp.maximum(
        y1_ref[0].astype(jnp.float32) * sc_ref[...] + sh_ref[...], 0.0)
    a1b = a1.astype(jnp.bfloat16)                             # (H, W, mid)
    zcol = jnp.zeros((h, 1, mid), jnp.bfloat16)
    a1p = jnp.concatenate([zcol, a1b, zcol], axis=1)          # (H, W+2, mid)
    zrow = jnp.zeros((1, w + 2, mid), jnp.bfloat16)
    pad_scr[0:1] = zrow                                       # top halo
    pad_scr[h + 1:h + 2] = zrow                               # bottom halo
    pad_scr[1:h + 1] = a1p                                    # interior

    acc = jnp.zeros((h * w, mid), jnp.float32)
    for t in range(9):
        ky, kx = t // 3, t % 3
        xs = pad_scr[ky:ky + h, kx:kx + w, :]                 # (H, W, mid) bf16
        acc = acc + jnp.dot(xs.reshape(h * w, mid), w2_ref[t],
                            preferred_element_type=jnp.float32)
    y2 = acc + b2_ref[...]
    y2b = y2.astype(jnp.bfloat16)
    y2_ref[0] = y2b
    st_ref[0] = _row_stats(y2b.astype(jnp.float32))


def grouped_conv3x3(y1_4d, scale1, shift1, w2_dense, b2):
    n, h, w, mid = y1_4d.shape
    kern = functools.partial(_k2_bn1_gconv3x3, h, w)
    y2, st2 = pl.pallas_call(
        kern,
        grid=(n,),
        in_specs=[
            pl.BlockSpec((1, h, w, mid), lambda i: (i, 0, 0, 0)),
            pl.BlockSpec((1, mid), lambda i: (0, 0)),
            pl.BlockSpec((1, mid), lambda i: (0, 0)),
            pl.BlockSpec((9, mid, mid), lambda i: (0, 0, 0)),
            pl.BlockSpec((1, mid), lambda i: (0, 0)),
        ],
        out_specs=[
            pl.BlockSpec((1, h * w, mid), lambda i: (i, 0, 0)),
            pl.BlockSpec((1, 2, mid), lambda i: (i, 0, 0)),
        ],
        out_shape=[
            jax.ShapeDtypeStruct((n, h * w, mid), jnp.bfloat16),
            jax.ShapeDtypeStruct((n, 2, mid), jnp.float32),
        ],
        scratch_shapes=[pltpu.VMEM((h + 2, w + 2, mid), jnp.bfloat16)],
        compiler_params=_cparams(1),
    )(y1_4d, scale1, shift1, w2_dense, b2.reshape(1, -1))
    return y2.reshape(n * h * w, mid), st2


# ---------------------------------------------------------------------------
# Kernel 3: BN2+ReLU (on the fly) + conv3 (1x1); emits BN3 partial stats.
# ---------------------------------------------------------------------------
def _k3_bn2_conv3(y2_ref, sc_ref, sh_ref, w3_ref, b3_ref, y3_ref, s3_ref):
    a2 = jnp.maximum(
        y2_ref[...].astype(jnp.float32) * sc_ref[...] + sh_ref[...], 0.0)
    y3 = jnp.dot(a2.astype(jnp.bfloat16), w3_ref[...],
                 preferred_element_type=jnp.float32) + b3_ref[...]
    y3b = y3.astype(jnp.bfloat16)
    y3_ref[...] = y3b
    s3_ref[0] = _row_stats(y3b.astype(jnp.float32))


def conv3(y2, scale2, shift2, w3, b3, block_rows):
    m, mid = y2.shape
    cout = w3.shape[1]
    tm = _pick_rows(m, block_rows)
    nt = m // tm
    return pl.pallas_call(
        _k3_bn2_conv3,
        grid=(nt,),
        in_specs=[
            pl.BlockSpec((tm, mid), lambda i: (i, 0)),
            pl.BlockSpec((1, mid), lambda i: (0, 0)),
            pl.BlockSpec((1, mid), lambda i: (0, 0)),
            pl.BlockSpec((mid, cout), lambda i: (0, 0)),
            pl.BlockSpec((1, cout), lambda i: (0, 0)),
        ],
        out_specs=[
            pl.BlockSpec((tm, cout), lambda i: (i, 0)),
            pl.BlockSpec((1, 2, cout), lambda i: (i, 0, 0)),
        ],
        out_shape=[
            jax.ShapeDtypeStruct((m, cout), jnp.bfloat16),
            jax.ShapeDtypeStruct((nt, 2, cout), jnp.float32),
        ],
        compiler_params=_cparams(1),
    )(y2, scale2, shift2, w3, b3.reshape(1, -1))


# ---------------------------------------------------------------------------
# Kernel 4: BN3 + BN_downsample + residual add + final ReLU.
# ---------------------------------------------------------------------------
def _k4_bn_add_relu(y3_ref, yd_ref, s3_ref, t3_ref, sd_ref, td_ref, o_ref):
    o = (y3_ref[...].astype(jnp.float32) * s3_ref[...] + t3_ref[...]
         + yd_ref[...].astype(jnp.float32) * sd_ref[...] + td_ref[...])
    o_ref[...] = jnp.maximum(o, 0.0)


def final_add_relu(y3, yd, s3, t3, sd, td, block_rows):
    m, cout = y3.shape
    tm = _pick_rows(m, block_rows)
    nt = m // tm
    return pl.pallas_call(
        _k4_bn_add_relu,
        grid=(nt,),
        in_specs=[
            pl.BlockSpec((tm, cout), lambda i: (i, 0)),
            pl.BlockSpec((tm, cout), lambda i: (i, 0)),
            pl.BlockSpec((1, cout), lambda i: (0, 0)),
            pl.BlockSpec((1, cout), lambda i: (0, 0)),
            pl.BlockSpec((1, cout), lambda i: (0, 0)),
            pl.BlockSpec((1, cout), lambda i: (0, 0)),
        ],
        out_specs=pl.BlockSpec((tm, cout), lambda i: (i, 0)),
        out_shape=jax.ShapeDtypeStruct((m, cout), jnp.float32),
        compiler_params=_cparams(1),
    )(y3, yd, s3, t3, sd, td)


# ---------------------------------------------------------------------------
# Full Bottleneck forward (NCHW in / NCHW out)
# ---------------------------------------------------------------------------
def bottleneck_forward(x_nchw, p, block_rows=512):
    x = jnp.transpose(x_nchw, (0, 2, 3, 1))                   # NCHW -> NHWC
    n, h, w, cin = x.shape
    mid = p["w1"].shape[1]
    cout = p["w3"].shape[1]
    m = n * h * w
    xb = x.reshape(m, cin).astype(jnp.bfloat16)

    w1 = p["w1"].astype(jnp.bfloat16)
    wd = p["wd"].astype(jnp.bfloat16)
    w2 = p["w2_dense"].astype(jnp.bfloat16)
    w3 = p["w3"].astype(jnp.bfloat16)

    # conv1 + downsample fused (single read of x), pre-BN outputs + partials.
    y1, yd, st1, std_ = conv1_and_downsample(xb, w1, p["b1"], wd, p["bd"],
                                             block_rows)
    s1, t1 = _finalize_bn(st1, p["g1"], p["be1"], m)
    sd, td = _finalize_bn(std_, p["gd"], p["bed"], m)

    # BN1+ReLU fused into the grouped 3x3 conv (per-image tiles, VMEM halo).
    y2, st2 = grouped_conv3x3(y1.reshape(n, h, w, mid), s1, t1, w2, p["b2"])
    s2, t2 = _finalize_bn(st2, p["g2"], p["be2"], m)

    # BN2+ReLU fused into conv3.
    y3, st3 = conv3(y2, s2, t2, w3, p["b3"], block_rows)
    s3, t3 = _finalize_bn(st3, p["g3"], p["be3"], m)

    # BN3 + BN_downsample + add + ReLU.
    out = final_add_relu(y3, yd, s3, t3, sd, td, block_rows)
    return jnp.transpose(out.reshape(n, h, w, cout), (0, 3, 1, 2))


# ---------------------------------------------------------------------------
# Reference (mirrors the kernel arithmetic: bf16 convs, f32 accumulate,
# train-mode BatchNorm over bf16-rounded pre-BN activations).
# ---------------------------------------------------------------------------
def reference_forward(x_nchw, p):
    def conv(inp, w_oihw, b, padding, groups=1):
        y = lax.conv_general_dilated(
            inp.astype(jnp.bfloat16), w_oihw.astype(jnp.bfloat16),
            window_strides=(1, 1), padding=padding,
            dimension_numbers=("NCHW", "OIHW", "NCHW"),
            feature_group_count=groups,
            preferred_element_type=jnp.float32)
        return (y + b[None, :, None, None]).astype(jnp.bfloat16)

    def bn(yb, g, be):
        y = yb.astype(jnp.float32)
        mean = y.mean(axis=(0, 2, 3), keepdims=True)
        var = jnp.square(y - mean).mean(axis=(0, 2, 3), keepdims=True)
        return (g[None, :, None, None] * (y - mean) * lax.rsqrt(var + EPS)
                + be[None, :, None, None])

    w1 = jnp.transpose(p["w1"])[:, :, None, None]
    w3 = jnp.transpose(p["w3"])[:, :, None, None]
    wd = jnp.transpose(p["wd"])[:, :, None, None]

    y1 = conv(x_nchw, w1, p["b1"], "VALID")
    a1 = jnp.maximum(bn(y1, p["g1"], p["be1"]), 0.0)
    y2 = conv(a1, p["w2_oihw"], p["b2"], ((1, 1), (1, 1)), groups=p["groups"])
    a2 = jnp.maximum(bn(y2, p["g2"], p["be2"]), 0.0)
    y3 = conv(a2, w3, p["b3"], "VALID")
    yd = conv(x_nchw, wd, p["bd"], "VALID")
    return jnp.maximum(bn(y3, p["g3"], p["be3"]) + bn(yd, p["gd"], p["bed"]),
                       0.0)


# ---------------------------------------------------------------------------
# Deterministic parameter construction
# ---------------------------------------------------------------------------
def make_params(key, in_channels, out_channels, groups=32):
    mid = out_channels // 2
    cin_g, cout_g = mid // groups, mid // groups
    ks = jax.random.split(key, 16)

    def n(k, shape, s=0.1):
        return s * jax.random.normal(k, shape, jnp.float32)

    p = {
        "groups": groups,
        "w1": n(ks[0], (in_channels, mid)), "b1": n(ks[1], (mid,), 0.05),
        "g1": 1.0 + n(ks[2], (mid,)),       "be1": n(ks[3], (mid,), 0.05),
        "b2": n(ks[4], (mid,), 0.05),
        "g2": 1.0 + n(ks[5], (mid,)),       "be2": n(ks[6], (mid,), 0.05),
        "w3": n(ks[7], (mid, out_channels)), "b3": n(ks[8], (out_channels,), 0.05),
        "g3": 1.0 + n(ks[9], (out_channels,)), "be3": n(ks[10], (out_channels,), 0.05),
        "wd": n(ks[11], (in_channels, out_channels)),
        "bd": n(ks[12], (out_channels,), 0.05),
        "gd": 1.0 + n(ks[13], (out_channels,)),
        "bed": n(ks[14], (out_channels,), 0.05),
    }

    # Grouped 3x3 weight: per-group [G, cin_g, cout_g, 3, 3].
    wg = n(ks[15], (groups, cin_g, cout_g, 3, 3))
    # Torch OIHW grouped layout for the reference conv.
    p["w2_oihw"] = jnp.transpose(wg, (0, 2, 1, 3, 4)).reshape(mid, cin_g, 3, 3)
    # Block-diagonal dense [9, mid, mid] (cin, cout) weight used by the kernel.
    dense = jnp.zeros((3, 3, groups, cin_g, groups, cout_g), jnp.float32)
    idx = jnp.arange(groups)
    val = jnp.transpose(wg, (0, 3, 4, 1, 2))            # [G, 3, 3, cin_g, cout_g]
    dense = dense.at[:, :, idx, :, idx, :].set(val)
    p["w2_dense"] = dense.reshape(3, 3, mid, mid).reshape(9, mid, mid)
    return p


if __name__ == "__main__":
    # groups=32 forces mid = out/2 to be a multiple of 32.
    N, Cin, H, W = 2, 64, 8, 8
    Cout = 128            # mid_channels = 64, group size = 2; stride=1, first=True

    key = jax.random.PRNGKey(0)
    kx, kp = jax.random.split(key)
    x = jax.random.normal(kx, (N, Cin, H, W), jnp.float32)
    params = make_params(kp, Cin, Cout)

    fwd = jax.jit(functools.partial(bottleneck_forward, block_rows=64))
    out = jax.block_until_ready(fwd(x, params))
    ref = jax.block_until_ready(reference_forward(x, params))

    assert out.shape == (N, Cout, H, W), out.shape
    err = float(jnp.max(jnp.abs(out - ref)))
    assert jnp.allclose(out, ref, atol=2e-2, rtol=2e-2), err
    print("KERNEL_OK")
</pallas_src>

<mosaic_0001>
module attributes {stable_mosaic.version = 11 : i64} {
  func.func @_k1_conv1_ds(%arg0: i32, %arg1: memref<64x64xbf16, #tpu.memory_space<vmem>>, %arg2: memref<64x64xbf16, #tpu.memory_space<vmem>>, %arg3: memref<1x64xf32, #tpu.memory_space<vmem>>, %arg4: memref<64x128xbf16, #tpu.memory_space<vmem>>, %arg5: memref<1x128xf32, #tpu.memory_space<vmem>>, %arg6: memref<64x64xbf16, #tpu.memory_space<vmem>>, %arg7: memref<64x128xbf16, #tpu.memory_space<vmem>>, %arg8: memref<1x2x64xf32, #tpu.memory_space<vmem>>, %arg9: memref<1x2x128xf32, #tpu.memory_space<vmem>>) attributes {dimension_semantics = [#tpu.dimension_semantics<parallel>], iteration_bounds = array<i64: 2>, scalar_prefetch = 0 : i64, scratch_operands = 0 : i64, tpu.core_type = #tpu.core_type<tc>, window_params = [{transform_indices = @transform_0, window_bounds = array<i64: 64, 64>}, {pipeline_mode = #tpu.pipeline_mode<synchronous>, transform_indices = @transform_1, window_bounds = array<i64: 64, 64>}, {pipeline_mode = #tpu.pipeline_mode<synchronous>, transform_indices = @transform_2, window_bounds = array<i64: 1, 64>}, {pipeline_mode = #tpu.pipeline_mode<synchronous>, transform_indices = @transform_3, window_bounds = array<i64: 64, 128>}, {pipeline_mode = #tpu.pipeline_mode<synchronous>, transform_indices = @transform_4, window_bounds = array<i64: 1, 128>}, {transform_indices = @transform_5, window_bounds = array<i64: 64, 64>}, {transform_indices = @transform_6, window_bounds = array<i64: 64, 128>}, {transform_indices = @transform_7, window_bounds = array<i64: 1, 2, 64>}, {transform_indices = @transform_8, window_bounds = array<i64: 1, 2, 128>}]} {
    %c0 = arith.constant 0 : index
    %c0_0 = arith.constant 0 : index
    %0 = vector.load %arg1[%c0, %c0_0] : memref<64x64xbf16, #tpu.memory_space<vmem>>, vector<64x64xbf16>
    %c0_1 = arith.constant 0 : index
    %c0_2 = arith.constant 0 : index
    %1 = vector.load %arg2[%c0_1, %c0_2] : memref<64x64xbf16, #tpu.memory_space<vmem>>, vector<64x64xbf16>
    %cst = arith.constant dense<0.000000e+00> : vector<64x64xf32>
    %2 = tpu.matmul %0, %1, %cst {dimension_numbers = #tpu.dot_dimension_numbers<[1], [0], [0], [1], [0, 0, 1, 1], [], []>} : vector<64x64xbf16>, vector<64x64xbf16>, vector<64x64xf32> -> vector<64x64xf32>
    %c0_3 = arith.constant 0 : index
    %c0_4 = arith.constant 0 : index
    %3 = vector.load %arg3[%c0_3, %c0_4] : memref<1x64xf32, #tpu.memory_space<vmem>>, vector<1x64xf32>
    %4 = vector.broadcast %3 : vector<1x64xf32> to vector<64x64xf32>
    %5 = arith.addf %2, %4 : vector<64x64xf32>
    %c0_5 = arith.constant 0 : index
    %c0_6 = arith.constant 0 : index
    %6 = vector.load %arg4[%c0_5, %c0_6] : memref<64x128xbf16, #tpu.memory_space<vmem>>, vector<64x128xbf16>
    %cst_7 = arith.constant dense<0.000000e+00> : vector<64x128xf32>
    %7 = tpu.matmul %0, %6, %cst_7 {dimension_numbers = #tpu.dot_dimension_numbers<[1], [0], [0], [1], [0, 0, 1, 1], [], []>} : vector<64x64xbf16>, vector<64x128xbf16>, vector<64x128xf32> -> vector<64x128xf32>
    %c0_8 = arith.constant 0 : index
    %c0_9 = arith.constant 0 : index
    %8 = vector.load %arg5[%c0_8, %c0_9] : memref<1x128xf32, #tpu.memory_space<vmem>>, vector<1x128xf32>
    %9 = vector.broadcast %8 : vector<1x128xf32> to vector<64x128xf32>
    %10 = arith.addf %7, %9 : vector<64x128xf32>
    %11 = arith.truncf %5 : vector<64x64xf32> to vector<64x64xbf16>
    %12 = arith.truncf %10 : vector<64x128xf32> to vector<64x128xbf16>
    %c0_10 = arith.constant 0 : index
    %c0_11 = arith.constant 0 : index
    %13 = vector.load %arg6[%c0_10, %c0_11] : memref<64x64xbf16, #tpu.memory_space<vmem>>, vector<64x64xbf16>
    tpu.vector_store %arg6[%c0_10, %c0_11], %11 {strides = array<i32>} : memref<64x64xbf16, #tpu.memory_space<vmem>>, vector<64x64xbf16>,
    %c0_12 = arith.constant 0 : index
    %c0_13 = arith.constant 0 : index
    %14 = vector.load %arg7[%c0_12, %c0_13] : memref<64x128xbf16, #tpu.memory_space<vmem>>, vector<64x128xbf16>
    tpu.vector_store %arg7[%c0_12, %c0_13], %12 {strides = array<i32>} : memref<64x128xbf16, #tpu.memory_space<vmem>>, vector<64x128xbf16>,
    %15 = arith.extf %11 : vector<64x64xbf16> to vector<64x64xf32>
    %cst_14 = arith.constant dense<0.000000e+00> : vector<64xf32>
    %16 = vector.multi_reduction <add>, %15, %cst_14 [0] : vector<64x64xf32> to vector<64xf32>
    %17 = vector.shape_cast %16 : vector<64xf32> to vector<1x64xf32>
    %18 = arith.mulf %15, %15 : vector<64x64xf32>
    %cst_15 = arith.constant dense<0.000000e+00> : vector<64xf32>
    %19 = vector.multi_reduction <add>, %18, %cst_15 [0] : vector<64x64xf32> to vector<64xf32>
    %20 = vector.shape_cast %19 : vector<64xf32> to vector<1x64xf32>
    %21 = tpu.concatenate %17, %20 in 0 : vector<1x64xf32>, vector<1x64xf32> -> vector<2x64xf32>
    %c0_16 = arith.constant 0 : index
    %c0_17 = arith.constant 0 : index
    %c0_18 = arith.constant 0 : index
    %22 = vector.load %arg8[%c0_16, %c0_17, %c0_18] : memref<1x2x64xf32, #tpu.memory_space<vmem>>, vector<1x2x64xf32>
    %23 = vector.shape_cast %22 : vector<1x2x64xf32> to vector<2x64xf32>
    %24 = vector.shape_cast %21 : vector<2x64xf32> to vector<1x2x64xf32>
    tpu.vector_store %arg8[%c0_16, %c0_17, %c0_18], %24 {strides = array<i32>} : memref<1x2x64xf32, #tpu.memory_space<vmem>>, vector<1x2x64xf32>,
    %25 = arith.extf %12 : vector<64x128xbf16> to vector<64x128xf32>
    %cst_19 = arith.constant dense<0.000000e+00> : vector<128xf32>
    %26 = vector.multi_reduction <add>, %25, %cst_19 [0] : vector<64x128xf32> to vector<128xf32>
    %27 = vector.shape_cast %26 : vector<128xf32> to vector<1x128xf32>
    %28 = arith.mulf %25, %25 : vector<64x128xf32>
    %cst_20 = arith.constant dense<0.000000e+00> : vector<128xf32>
    %29 = vector.multi_reduction <add>, %28, %cst_20 [0] : vector<64x128xf32> to vector<128xf32>
    %30 = vector.shape_cast %29 : vector<128xf32> to vector<1x128xf32>
    %31 = tpu.concatenate %27, %30 in 0 : vector<1x128xf32>, vector<1x128xf32> -> vector<2x128xf32>
    %c0_21 = arith.constant 0 : index
    %c0_22 = arith.constant 0 : index
    %c0_23 = arith.constant 0 : index
    %32 = vector.load %arg9[%c0_21, %c0_22, %c0_23] : memref<1x2x128xf32, #tpu.memory_space<vmem>>, vector<1x2x128xf32>
    %33 = vector.shape_cast %32 : vector<1x2x128xf32> to vector<2x128xf32>
    %34 = vector.shape_cast %31 : vector<2x128xf32> to vector<1x2x128xf32>
    tpu.vector_store %arg9[%c0_21, %c0_22, %c0_23], %34 {strides = array<i32>} : memref<1x2x128xf32, #tpu.memory_space<vmem>>, vector<1x2x128xf32>,
    return
  }
  func.func @transform_0(%arg0: i32) -> (i32, i32) {
    %c0_i32 = arith.constant 0 : i32
    %c0_i32_0 = arith.constant 0 : i32
    return %arg0, %c0_i32 : i32, i32
  }
  func.func @transform_1(%arg0: i32) -> (i32, i32) {
    %c0_i32 = arith.constant 0 : i32
    %c0_i32_0 = arith.constant 0 : i32
    %c0_i32_1 = arith.constant 0 : i32
    return %c0_i32, %c0_i32_0 : i32, i32
  }
  func.func @transform_2(%arg0: i32) -> (i32, i32) {
    %c0_i32 = arith.constant 0 : i32
    %c0_i32_0 = arith.constant 0 : i32
    %c0_i32_1 = arith.constant 0 : i32
    return %c0_i32, %c0_i32_0 : i32, i32
  }
  func.func @transform_3(%arg0: i32) -> (i32, i32) {
    %c0_i32 = arith.constant 0 : i32
    %c0_i32_0 = arith.constant 0 : i32
    %c0_i32_1 = arith.constant 0 : i32
    return %c0_i32, %c0_i32_0 : i32, i32
  }
  func.func @transform_4(%arg0: i32) -> (i32, i32) {
    %c0_i32 = arith.constant 0 : i32
    %c0_i32_0 = arith.constant 0 : i32
    %c0_i32_1 = arith.constant 0 : i32
    return %c0_i32, %c0_i32_0 : i32, i32
  }
  func.func @transform_5(%arg0: i32) -> (i32, i32) {
    %c0_i32 = arith.constant 0 : i32
    %c0_i32_0 = arith.constant 0 : i32
    return %arg0, %c0_i32 : i32, i32
  }
  func.func @transform_6(%arg0: i32) -> (i32, i32) {
    %c0_i32 = arith.constant 0 : i32
    %c0_i32_0 = arith.constant 0 : i32
    return %arg0, %c0_i32 : i32, i32
  }
  func.func @transform_7(%arg0: i32) -> (i32, i32, i32) {
    %c0_i32 = arith.constant 0 : i32
    %c0_i32_0 = arith.constant 0 : i32
    %c0_i32_1 = arith.constant 0 : i32
    return %arg0, %c0_i32, %c0_i32_0 : i32, i32, i32
  }
  func.func @transform_8(%arg0: i32) -> (i32, i32, i32) {
    %c0_i32 = arith.constant 0 : i32
    %c0_i32_0 = arith.constant 0 : i32
    %c0_i32_1 = arith.constant 0 : i32
    return %arg0, %c0_i32, %c0_i32_0 : i32, i32, i32
  }
}

module attributes {stable_mosaic.version = 11 : i64} {
  func.func @_k2_bn1_gconv3x3(%arg0: i32, %arg1: memref<1x8x8x64xbf16, #tpu.memory_space<vmem>>, %arg2: memref<1x64xf32, #tpu.memory_space<vmem>>, %arg3: memref<1x64xf32, #tpu.memory_space<vmem>>, %arg4: memref<9x64x64xbf16, #tpu.memory_space<vmem>>, %arg5: memref<1x64xf32, #tpu.memory_space<vmem>>, %arg6: memref<1x64x64xbf16, #tpu.memory_space<vmem>>, %arg7: memref<1x2x64xf32, #tpu.memory_space<vmem>>, %arg8: memref<10x10x64xbf16, #tpu.memory_space<vmem>>) attributes {dimension_semantics = [#tpu.dimension_semantics<parallel>], iteration_bounds = array<i64: 2>, scalar_prefetch = 0 : i64, scratch_operands = 1 : i64, tpu.core_type = #tpu.core_type<tc>, window_params = [{transform_indices = @transform_0, window_bounds = array<i64: 1, 8, 8, 64>}, {pipeline_mode = #tpu.pipeline_mode<synchronous>, transform_indices = @transform_1, window_bounds = array<i64: 1, 64>}, {pipeline_mode = #tpu.pipeline_mode<synchronous>, transform_indices = @transform_2, window_bounds = array<i64: 1, 64>}, {pipeline_mode = #tpu.pipeline_mode<synchronous>, transform_indices = @transform_3, window_bounds = array<i64: 9, 64, 64>}, {pipeline_mode = #tpu.pipeline_mode<synchronous>, transform_indices = @transform_4, window_bounds = array<i64: 1, 64>}, {transform_indices = @transform_5, window_bounds = array<i64: 1, 64, 64>}, {transform_indices = @transform_6, window_bounds = array<i64: 1, 2, 64>}]} {
    %c0 = arith.constant 0 : index
    %c0_0 = arith.constant 0 : index
    %c0_1 = arith.constant 0 : index
    %c0_2 = arith.constant 0 : index
    %0 = vector.load %arg1[%c0, %c0_0, %c0_1, %c0_2] : memref<1x8x8x64xbf16, #tpu.memory_space<vmem>>, vector<1x8x8x64xbf16>
    %1 = vector.shape_cast %0 : vector<1x8x8x64xbf16> to vector<8x8x64xbf16>
    %2 = arith.extf %1 : vector<8x8x64xbf16> to vector<8x8x64xf32>
    %c0_3 = arith.constant 0 : index
    %c0_4 = arith.constant 0 : index
    %3 = vector.load %arg2[%c0_3, %c0_4] : memref<1x64xf32, #tpu.memory_space<vmem>>, vector<1x64xf32>
    %4 = vector.shape_cast %3 : vector<1x64xf32> to vector<1x1x64xf32>
    %5 = vector.broadcast %4 : vector<1x1x64xf32> to vector<8x8x64xf32>
    %6 = arith.mulf %2, %5 : vector<8x8x64xf32>
    %c0_5 = arith.constant 0 : index
    %c0_6 = arith.constant 0 : index
    %7 = vector.load %arg3[%c0_5, %c0_6] : memref<1x64xf32, #tpu.memory_space<vmem>>, vector<1x64xf32>
    %8 = vector.shape_cast %7 : vector<1x64xf32> to vector<1x1x64xf32>
    %9 = vector.broadcast %8 : vector<1x1x64xf32> to vector<8x8x64xf32>
    %10 = arith.addf %6, %9 : vector<8x8x64xf32>
    %cst = arith.constant 0.000000e+00 : f32
    %11 = vector.broadcast %cst : f32 to vector<8x8x64xf32>
    %12 = arith.maximumf %10, %11 : vector<8x8x64xf32>
    %13 = arith.truncf %12 : vector<8x8x64xf32> to vector<8x8x64xbf16>
    %cst_7 = arith.constant 0.000000e+00 : bf16
    %14 = vector.broadcast %cst_7 : bf16 to vector<8x1x64xbf16>
    %15 = tpu.concatenate %14, %13, %14 in 1 : vector<8x1x64xbf16>, vector<8x8x64xbf16>, vector<8x1x64xbf16> -> vector<8x10x64xbf16>
    %cst_8 = arith.constant 0.000000e+00 : bf16
    %16 = vector.broadcast %cst_8 : bf16 to vector<1x10x64xbf16>
    %c0_9 = arith.constant 0 : index
    %c0_10 = arith.constant 0 : index
    %c0_11 = arith.constant 0 : index
    %17 = vector.load %arg8[%c0_9, %c0_10, %c0_11] : memref<10x10x64xbf16, #tpu.memory_space<vmem>>, vector<1x10x64xbf16>
    tpu.vector_store %arg8[%c0_9, %c0_10, %c0_11], %16 {strides = array<i32>} : memref<10x10x64xbf16, #tpu.memory_space<vmem>>, vector<1x10x64xbf16>,
    %c9 = arith.constant 9 : index
    %c0_12 = arith.constant 0 : index
    %c0_13 = arith.constant 0 : index
    %18 = vector.load %arg8[%c9, %c0_12, %c0_13] : memref<10x10x64xbf16, #tpu.memory_space<vmem>>, vector<1x10x64xbf16>
    tpu.vector_store %arg8[%c9, %c0_12, %c0_13], %16 {strides = array<i32>} : memref<10x10x64xbf16, #tpu.memory_space<vmem>>, vector<1x10x64xbf16>,
    %c1 = arith.constant 1 : index
    %c0_14 = arith.constant 0 : index
    %c0_15 = arith.constant 0 : index
    %19 = vector.load %arg8[%c1, %c0_14, %c0_15] : memref<10x10x64xbf16, #tpu.memory_space<vmem>>, vector<8x10x64xbf16>
    tpu.vector_store %arg8[%c1, %c0_14, %c0_15], %15 {strides = array<i32>} : memref<10x10x64xbf16, #tpu.memory_space<vmem>>, vector<8x10x64xbf16>,
    %cst_16 = arith.constant 0.000000e+00 : f32
    %20 = vector.broadcast %cst_16 : f32 to vector<64x64xf32>
    %c0_17 = arith.constant 0 : index
    %c0_18 = arith.constant 0 : index
    %c0_19 = arith.constant 0 : index
    %21 = vector.load %arg8[%c0_17, %c0_18, %c0_19] : memref<10x10x64xbf16, #tpu.memory_space<vmem>>, vector<8x8x64xbf16>
    %22 = vector.shape_cast %21 : vector<8x8x64xbf16> to vector<64x64xbf16>
    %c0_20 = arith.constant 0 : index
    %c0_21 = arith.constant 0 : index
    %c0_22 = arith.constant 0 : index
    %23 = vector.load %arg4[%c0_20, %c0_21, %c0_22] : memref<9x64x64xbf16, #tpu.memory_space<vmem>>, vector<1x64x64xbf16>
    %24 = vector.shape_cast %23 : vector<1x64x64xbf16> to vector<64x64xbf16>
    %cst_23 = arith.constant dense<0.000000e+00> : vector<64x64xf32>
    %25 = tpu.matmul %22, %24, %cst_23 {dimension_numbers = #tpu.dot_dimension_numbers<[1], [0], [0], [1], [0, 0, 1, 1], [], []>} : vector<64x64xbf16>, vector<64x64xbf16>, vector<64x64xf32> -> vector<64x64xf32>
    %26 = arith.addf %20, %25 : vector<64x64xf32>
    %c0_24 = arith.constant 0 : index
    %c1_25 = arith.constant 1 : index
    %c0_26 = arith.constant 0 : index
    %27 = vector.load %arg8[%c0_24, %c1_25, %c0_26] : memref<10x10x64xbf16, #tpu.memory_space<vmem>>, vector<8x8x64xbf16>
    %28 = vector.shape_cast %27 : vector<8x8x64xbf16> to vector<64x64xbf16>
    %c1_27 = arith.constant 1 : index
    %c0_28 = arith.constant 0 : index
    %c0_29 = arith.constant 0 : index
    %29 = vector.load %arg4[%c1_27, %c0_28, %c0_29] : memref<9x64x64xbf16, #tpu.memory_space<vmem>>, vector<1x64x64xbf16>
    %30 = vector.shape_cast %29 : vector<1x64x64xbf16> to vector<64x64xbf16>
    %cst_30 = arith.constant dense<0.000000e+00> : vector<64x64xf32>
    %31 = tpu.matmul %28, %30, %cst_30 {dimension_numbers = #tpu.dot_dimension_numbers<[1], [0], [0], [1], [0, 0, 1, 1], [], []>} : vector<64x64xbf16>, vector<64x64xbf16>, vector<64x64xf32> -> vector<64x64xf32>
    %32 = arith.addf %26, %31 : vector<64x64xf32>
    %c0_31 = arith.constant 0 : index
    %c2 = arith.constant 2 : index
    %c0_32 = arith.constant 0 : index
    %33 = vector.load %arg8[%c0_31, %c2, %c0_32] : memref<10x10x64xbf16, #tpu.memory_space<vmem>>, vector<8x8x64xbf16>
    %34 = vector.shape_cast %33 : vector<8x8x64xbf16> to vector<64x64xbf16>
    %c2_33 = arith.constant 2 : index
    %c0_34 = arith.constant 0 : index
    %c0_35 = arith.constant 0 : index
    %35 = vector.load %arg4[%c2_33, %c0_34, %c0_35] : memref<9x64x64xbf16, #tpu.memory_space<vmem>>, vector<1x64x64xbf16>
    %36 = vector.shape_cast %35 : vector<1x64x64xbf16> to vector<64x64xbf16>
    %cst_36 = arith.constant dense<0.000000e+00> : vector<64x64xf32>
    %37 = tpu.matmul %34, %36, %cst_36 {dimension_numbers = #tpu.dot_dimension_numbers<[1], [0], [0], [1], [0, 0, 1, 1], [], []>} : vector<64x64xbf16>, vector<64x64xbf16>, vector<64x64xf32> -> vector<64x64xf32>
    %38 = arith.addf %32, %37 : vector<64x64xf32>
    %c1_37 = arith.constant 1 : index
    %c0_38 = arith.constant 0 : index
    %c0_39 = arith.constant 0 : index
    %39 = vector.load %arg8[%c1_37, %c0_38, %c0_39] : memref<10x10x64xbf16, #tpu.memory_space<vmem>>, vector<8x8x64xbf16>
    %40 = vector.shape_cast %39 : vector<8x8x64xbf16> to vector<64x64xbf16>
    %c3 = arith.constant 3 : index
    %c0_40 = arith.constant 0 : index
    %c0_41 = arith.constant 0 : index
    %41 = vector.load %arg4[%c3, %c0_40, %c0_41] : memref<9x64x64xbf16, #tpu.memory_space<vmem>>, vector<1x64x64xbf16>
    %42 = vector.shape_cast %41 : vector<1x64x64xbf16> to vector<64x64xbf16>
    %cst_42 = arith.constant dense<0.000000e+00> : vector<64x64xf32>
    %43 = tpu.matmul %40, %42, %cst_42 {dimension_numbers = #tpu.dot_dimension_numbers<[1], [0], [0], [1], [0, 0, 1, 1], [], []>} : vector<64x64xbf16>, vector<64x64xbf16>, vector<64x64xf32> -> vector<64x64xf32>
    %44 = arith.addf %38, %43 : vector<64x64xf32>
    %c1_43 = arith.constant 1 : index
    %c1_44 = arith.constant 1 : index
    %c0_45 = arith.constant 0 : index
    %45 = vector.load %arg8[%c1_43, %c1_44, %c0_45] : memref<10x10x64xbf16, #tpu.memory_space<vmem>>, vector<8x8x64xbf16>
    %46 = vector.shape_cast %45 : vector<8x8x64xbf16> to vector<64x64xbf16>
    %c4 = arith.constant 4 : index
    %c0_46 = arith.constant 0 : index
    %c0_47 = arith.constant 0 : index
    %47 = vector.load %arg4[%c4, %c0_46, %c0_47] : memref<9x64x64xbf16, #tpu.memory_space<vmem>>, vector<1x64x64xbf16>
    %48 = vector.shape_cast %47 : vector<1x64x64xbf16> to vector<64x64xbf16>
    %cst_48 = arith.constant dense<0.000000e+00> : vector<64x64xf32>
    %49 = tpu.matmul %46, %48, %cst_48 {dimension_numbers = #tpu.dot_dimension_numbers<[1], [0], [0], [1], [0, 0, 1, 1], [], []>} : vector<64x64xbf16>, vector<64x64xbf16>, vector<64x64xf32> -> vector<64x64xf32>
    %50 = arith.addf %44, %49 : vector<64x64xf32>
    %c1_49 = arith.constant 1 : index
    %c2_50 = arith.constant 2 : index
    %c0_51 = arith.constant 0 : index
    %51 = vector.load %arg8[%c1_49, %c2_50, %c0_51] : memref<10x10x64xbf16, #tpu.memory_space<vmem>>, vector<8x8x64xbf16>
    %52 = vector.shape_cast %51 : vector<8x8x64xbf16> to vector<64x64xbf16>
    %c5 = arith.constant 5 : index
    %c0_52 = arith.constant 0 : index
    %c0_53 = arith.constant 0 : index
    %53 = vector.load %arg4[%c5, %c0_52, %c0_53] : memref<9x64x64xbf16, #tpu.memory_space<vmem>>, vector<1x64x64xbf16>
    %54 = vector.shape_cast %53 : vector<1x64x64xbf16> to vector<64x64xbf16>
    %cst_54 = arith.constant dense<0.000000e+00> : vector<64x64xf32>
    %55 = tpu.matmul %52, %54, %cst_54 {dimension_numbers = #tpu.dot_dimension_numbers<[1], [0], [0], [1], [0, 0, 1, 1], [], []>} : vector<64x64xbf16>, vector<64x64xbf16>, vector<64x64xf32> -> vector<64x64xf32>
    %56 = arith.addf %50, %55 : vector<64x64xf32>
    %c2_55 = arith.constant 2 : index
    %c0_56 = arith.constant 0 : index
    %c0_57 = arith.constant 0 : index
    %57 = vector.load %arg8[%c2_55, %c0_56, %c0_57] : memref<10x10x64xbf16, #tpu.memory_space<vmem>>, vector<8x8x64xbf16>
    %58 = vector.shape_cast %57 : vector<8x8x64xbf16> to vector<64x64xbf16>
    %c6 = arith.constant 6 : index
    %c0_58 = arith.constant 0 : index
    %c0_59 = arith.constant 0 : index
    %59 = vector.load %arg4[%c6, %c0_58, %c0_59] : memref<9x64x64xbf16, #tpu.memory_space<vmem>>, vector<1x64x64xbf16>
    %60 = vector.shape_cast %59 : vector<1x64x64xbf16> to vector<64x64xbf16>
    %cst_60 = arith.constant dense<0.000000e+00> : vector<64x64xf32>
    %61 = tpu.matmul %58, %60, %cst_60 {dimension_numbers = #tpu.dot_dimension_numbers<[1], [0], [0], [1], [0, 0, 1, 1], [], []>} : vector<64x64xbf16>, vector<64x64xbf16>, vector<64x64xf32> -> vector<64x64xf32>
    %62 = arith.addf %56, %61 : vector<64x64xf32>
    %c2_61 = arith.constant 2 : index
    %c1_62 = arith.constant 1 : index
    %c0_63 = arith.constant 0 : index
    %63 = vector.load %arg8[%c2_61, %c1_62, %c0_63] : memref<10x10x64xbf16, #tpu.memory_space<vmem>>, vector<8x8x64xbf16>
    %64 = vector.shape_cast %63 : vector<8x8x64xbf16> to vector<64x64xbf16>
    %c7 = arith.constant 7 : index
    %c0_64 = arith.constant 0 : index
    %c0_65 = arith.constant 0 : index
    %65 = vector.load %arg4[%c7, %c0_64, %c0_65] : memref<9x64x64xbf16, #tpu.memory_space<vmem>>, vector<1x64x64xbf16>
    %66 = vector.shape_cast %65 : vector<1x64x64xbf16> to vector<64x64xbf16>
    %cst_66 = arith.constant dense<0.000000e+00> : vector<64x64xf32>
    %67 = tpu.matmul %64, %66, %cst_66 {dimension_numbers = #tpu.dot_dimension_numbers<[1], [0], [0], [1], [0, 0, 1, 1], [], []>} : vector<64x64xbf16>, vector<64x64xbf16>, vector<64x64xf32> -> vector<64x64xf32>
    %68 = arith.addf %62, %67 : vector<64x64xf32>
    %c2_67 = arith.constant 2 : index
    %c2_68 = arith.constant 2 : index
    %c0_69 = arith.constant 0 : index
    %69 = vector.load %arg8[%c2_67, %c2_68, %c0_69] : memref<10x10x64xbf16, #tpu.memory_space<vmem>>, vector<8x8x64xbf16>
    %70 = vector.shape_cast %69 : vector<8x8x64xbf16> to vector<64x64xbf16>
    %c8 = arith.constant 8 : index
    %c0_70 = arith.constant 0 : index
    %c0_71 = arith.constant 0 : index
    %71 = vector.load %arg4[%c8, %c0_70, %c0_71] : memref<9x64x64xbf16, #tpu.memory_space<vmem>>, vector<1x64x64xbf16>
    %72 = vector.shape_cast %71 : vector<1x64x64xbf16> to vector<64x64xbf16>
    %cst_72 = arith.constant dense<0.000000e+00> : vector<64x64xf32>
    %73 = tpu.matmul %70, %72, %cst_72 {dimension_numbers = #tpu.dot_dimension_numbers<[1], [0], [0], [1], [0, 0, 1, 1], [], []>} : vector<64x64xbf16>, vector<64x64xbf16>, vector<64x64xf32> -> vector<64x64xf32>
    %74 = arith.addf %68, %73 : vector<64x64xf32>
    %c0_73 = arith.constant 0 : index
    %c0_74 = arith.constant 0 : index
    %75 = vector.load %arg5[%c0_73, %c0_74] : memref<1x64xf32, #tpu.memory_space<vmem>>, vector<1x64xf32>
    %76 = vector.broadcast %75 : vector<1x64xf32> to vector<64x64xf32>
    %77 = arith.addf %74, %76 : vector<64x64xf32>
    %78 = arith.truncf %77 : vector<64x64xf32> to vector<64x64xbf16>
    %c0_75 = arith.constant 0 : index
    %c0_76 = arith.constant 0 : index
    %c0_77 = arith.constant 0 : index
    %79 = vector.load %arg6[%c0_75, %c0_76, %c0_77] : memref<1x64x64xbf16, #tpu.memory_space<vmem>>, vector<1x64x64xbf16>
    %80 = vector.shape_cast %79 : vector<1x64x64xbf16> to vector<64x64xbf16>
    %81 = vector.shape_cast %78 : vector<64x64xbf16> to vector<1x64x64xbf16>
    tpu.vector_store %arg6[%c0_75, %c0_76, %c0_77], %81 {strides = array<i32>} : memref<1x64x64xbf16, #tpu.memory_space<vmem>>, vector<1x64x64xbf16>,
    %82 = arith.extf %78 : vector<64x64xbf16> to vector<64x64xf32>
    %cst_78 = arith.constant dense<0.000000e+00> : vector<64xf32>
    %83 = vector.multi_reduction <add>, %82, %cst_78 [0] : vector<64x64xf32> to vector<64xf32>
    %84 = vector.shape_cast %83 : vector<64xf32> to vector<1x64xf32>
    %85 = arith.mulf %82, %82 : vector<64x64xf32>
    %cst_79 = arith.constant dense<0.000000e+00> : vector<64xf32>
    %86 = vector.multi_reduction <add>, %85, %cst_79 [0] : vector<64x64xf32> to vector<64xf32>
    %87 = vector.shape_cast %86 : vector<64xf32> to vector<1x64xf32>
    %88 = tpu.concatenate %84, %87 in 0 : vector<1x64xf32>, vector<1x64xf32> -> vector<2x64xf32>
    %c0_80 = arith.constant 0 : index
    %c0_81 = arith.constant 0 : index
    %c0_82 = arith.constant 0 : index
    %89 = vector.load %arg7[%c0_80, %c0_81, %c0_82] : memref<1x2x64xf32, #tpu.memory_space<vmem>>, vector<1x2x64xf32>
    %90 = vector.shape_cast %89 : vector<1x2x64xf32> to vector<2x64xf32>
    %91 = vector.shape_cast %88 : vector<2x64xf32> to vector<1x2x64xf32>
    tpu.vector_store %arg7[%c0_80, %c0_81, %c0_82], %91 {strides = array<i32>} : memref<1x2x64xf32, #tpu.memory_space<vmem>>, vector<1x2x64xf32>,
    return
  }
  func.func @transform_0(%arg0: i32) -> (i32, i32, i32, i32) {
    %c0_i32 = arith.constant 0 : i32
    %c0_i32_0 = arith.constant 0 : i32
    %c0_i32_1 = arith.constant 0 : i32
    %c0_i32_2 = arith.constant 0 : i32
    return %arg0, %c0_i32, %c0_i32_0, %c0_i32_1 : i32, i32, i32, i32
  }
  func.func @transform_1(%arg0: i32) -> (i32, i32) {
    %c0_i32 = arith.constant 0 : i32
    %c0_i32_0 = arith.constant 0 : i32
    %c0_i32_1 = arith.constant 0 : i32
    return %c0_i32, %c0_i32_0 : i32, i32
  }
  func.func @transform_2(%arg0: i32) -> (i32, i32) {
    %c0_i32 = arith.constant 0 : i32
    %c0_i32_0 = arith.constant 0 : i32
    %c0_i32_1 = arith.constant 0 : i32
    return %c0_i32, %c0_i32_0 : i32, i32
  }
  func.func @transform_3(%arg0: i32) -> (i32, i32, i32) {
    %c0_i32 = arith.constant 0 : i32
    %c0_i32_0 = arith.constant 0 : i32
    %c0_i32_1 = arith.constant 0 : i32
    %c0_i32_2 = arith.constant 0 : i32
    return %c0_i32, %c0_i32_0, %c0_i32_1 : i32, i32, i32
  }
  func.func @transform_4(%arg0: i32) -> (i32, i32) {
    %c0_i32 = arith.constant 0 : i32
    %c0_i32_0 = arith.constant 0 : i32
    %c0_i32_1 = arith.constant 0 : i32
    return %c0_i32, %c0_i32_0 : i32, i32
  }
  func.func @transform_5(%arg0: i32) -> (i32, i32, i32) {
    %c0_i32 = arith.constant 0 : i32
    %c0_i32_0 = arith.constant 0 : i32
    %c0_i32_1 = arith.constant 0 : i32
    return %arg0, %c0_i32, %c0_i32_0 : i32, i32, i32
  }
  func.func @transform_6(%arg0: i32) -> (i32, i32, i32) {
    %c0_i32 = arith.constant 0 : i32
    %c0_i32_0 = arith.constant 0 : i32
    %c0_i32_1 = arith.constant 0 : i32
    return %arg0, %c0_i32, %c0_i32_0 : i32, i32, i32
  }
}

module attributes {stable_mosaic.version = 11 : i64} {
  func.func @_k4_bn_add_relu(%arg0: i32, %arg1: memref<64x128xbf16, #tpu.memory_space<vmem>>, %arg2: memref<64x128xbf16, #tpu.memory_space<vmem>>, %arg3: memref<1x128xf32, #tpu.memory_space<vmem>>, %arg4: memref<1x128xf32, #tpu.memory_space<vmem>>, %arg5: memref<1x128xf32, #tpu.memory_space<vmem>>, %arg6: memref<1x128xf32, #tpu.memory_space<vmem>>, %arg7: memref<64x128xf32, #tpu.memory_space<vmem>>) attributes {dimension_semantics = [#tpu.dimension_semantics<parallel>], iteration_bounds = array<i64: 2>, scalar_prefetch = 0 : i64, scratch_operands = 0 : i64, tpu.core_type = #tpu.core_type<tc>, window_params = [{transform_indices = @transform_0, window_bounds = array<i64: 64, 128>}, {transform_indices = @transform_1, window_bounds = array<i64: 64, 128>}, {pipeline_mode = #tpu.pipeline_mode<synchronous>, transform_indices = @transform_2, window_bounds = array<i64: 1, 128>}, {pipeline_mode = #tpu.pipeline_mode<synchronous>, transform_indices = @transform_3, window_bounds = array<i64: 1, 128>}, {pipeline_mode = #tpu.pipeline_mode<synchronous>, transform_indices = @transform_4, window_bounds = array<i64: 1, 128>}, {pipeline_mode = #tpu.pipeline_mode<synchronous>, transform_indices = @transform_5, window_bounds = array<i64: 1, 128>}, {transform_indices = @transform_6, window_bounds = array<i64: 64, 128>}]} {
    %c0 = arith.constant 0 : index
    %c0_0 = arith.constant 0 : index
    %0 = vector.load %arg1[%c0, %c0_0] : memref<64x128xbf16, #tpu.memory_space<vmem>>, vector<64x128xbf16>
    %1 = arith.extf %0 : vector<64x128xbf16> to vector<64x128xf32>
    %c0_1 = arith.constant 0 : index
    %c0_2 = arith.constant 0 : index
    %2 = vector.load %arg3[%c0_1, %c0_2] : memref<1x128xf32, #tpu.memory_space<vmem>>, vector<1x128xf32>
    %3 = vector.broadcast %2 : vector<1x128xf32> to vector<64x128xf32>
    %4 = arith.mulf %1, %3 : vector<64x128xf32>
    %c0_3 = arith.constant 0 : index
    %c0_4 = arith.constant 0 : index
    %5 = vector.load %arg4[%c0_3, %c0_4] : memref<1x128xf32, #tpu.memory_space<vmem>>, vector<1x128xf32>
    %6 = vector.broadcast %5 : vector<1x128xf32> to vector<64x128xf32>
    %7 = arith.addf %4, %6 : vector<64x128xf32>
    %c0_5 = arith.constant 0 : index
    %c0_6 = arith.constant 0 : index
    %8 = vector.load %arg2[%c0_5, %c0_6] : memref<64x128xbf16, #tpu.memory_space<vmem>>, vector<64x128xbf16>
    %9 = arith.extf %8 : vector<64x128xbf16> to vector<64x128xf32>
    %c0_7 = arith.constant 0 : index
    %c0_8 = arith.constant 0 : index
    %10 = vector.load %arg5[%c0_7, %c0_8] : memref<1x128xf32, #tpu.memory_space<vmem>>, vector<1x128xf32>
    %11 = vector.broadcast %10 : vector<1x128xf32> to vector<64x128xf32>
    %12 = arith.mulf %9, %11 : vector<64x128xf32>
    %13 = arith.addf %7, %12 : vector<64x128xf32>
    %c0_9 = arith.constant 0 : index
    %c0_10 = arith.constant 0 : index
    %14 = vector.load %arg6[%c0_9, %c0_10] : memref<1x128xf32, #tpu.memory_space<vmem>>, vector<1x128xf32>
    %15 = vector.broadcast %14 : vector<1x128xf32> to vector<64x128xf32>
    %16 = arith.addf %13, %15 : vector<64x128xf32>
    %cst = arith.constant 0.000000e+00 : f32
    %17 = vector.broadcast %cst : f32 to vector<64x128xf32>
    %18 = arith.maximumf %16, %17 : vector<64x128xf32>
    %c0_11 = arith.constant 0 : index
    %c0_12 = arith.constant 0 : index
    %19 = vector.load %arg7[%c0_11, %c0_12] : memref<64x128xf32, #tpu.memory_space<vmem>>, vector<64x128xf32>
    tpu.vector_store %arg7[%c0_11, %c0_12], %18 {strides = array<i32>} : memref<64x128xf32, #tpu.memory_space<vmem>>, vector<64x128xf32>,
    return
  }
  func.func @transform_0(%arg0: i32) -> (i32, i32) {
    %c0_i32 = arith.constant 0 : i32
    %c0_i32_0 = arith.constant 0 : i32
    return %arg0, %c0_i32 : i32, i32
  }
  func.func @transform_1(%arg0: i32) -> (i32, i32) {
    %c0_i32 = arith.constant 0 : i32
    %c0_i32_0 = arith.constant 0 : i32
    return %arg0, %c0_i32 : i32, i32
  }
  func.func @transform_2(%arg0: i32) -> (i32, i32) {
    %c0_i32 = arith.constant 0 : i32
    %c0_i32_0 = arith.constant 0 : i32
    %c0_i32_1 = arith.constant 0 : i32
    return %c0_i32, %c0_i32_0 : i32, i32
  }
  func.func @transform_3(%arg0: i32) -> (i32, i32) {
    %c0_i32 = arith.constant 0 : i32
    %c0_i32_0 = arith.constant 0 : i32
    %c0_i32_1 = arith.constant 0 : i32
    return %c0_i32, %c0_i32_0 : i32, i32
  }
  func.func @transform_4(%arg0: i32) -> (i32, i32) {
    %c0_i32 = arith.constant 0 : i32
    %c0_i32_0 = arith.constant 0 : i32
    %c0_i32_1 = arith.constant 0 : i32
    return %c0_i32, %c0_i32_0 : i32, i32
  }
  func.func @transform_5(%arg0: i32) -> (i32, i32) {
    %c0_i32 = arith.constant 0 : i32
    %c0_i32_0 = arith.constant 0 : i32
    %c0_i32_1 = arith.constant 0 : i32
    return %c0_i32, %c0_i32_0 : i32, i32
  }
  func.func @transform_6(%arg0: i32) -> (i32, i32) {
    %c0_i32 = arith.constant 0 : i32
    %c0_i32_0 = arith.constant 0 : i32
    return %arg0, %c0_i32 : i32, i32
  }
}

module attributes {stable_mosaic.version = 11 : i64} {
  func.func @_k3_bn2_conv3(%arg0: i32, %arg1: memref<64x64xbf16, #tpu.memory_space<vmem>>, %arg2: memref<1x64xf32, #tpu.memory_space<vmem>>, %arg3: memref<1x64xf32, #tpu.memory_space<vmem>>, %arg4: memref<64x128xbf16, #tpu.memory_space<vmem>>, %arg5: memref<1x128xf32, #tpu.memory_space<vmem>>, %arg6: memref<64x128xbf16, #tpu.memory_space<vmem>>, %arg7: memref<1x2x128xf32, #tpu.memory_space<vmem>>) attributes {dimension_semantics = [#tpu.dimension_semantics<parallel>], iteration_bounds = array<i64: 2>, scalar_prefetch = 0 : i64, scratch_operands = 0 : i64, tpu.core_type = #tpu.core_type<tc>, window_params = [{transform_indices = @transform_0, window_bounds = array<i64: 64, 64>}, {pipeline_mode = #tpu.pipeline_mode<synchronous>, transform_indices = @transform_1, window_bounds = array<i64: 1, 64>}, {pipeline_mode = #tpu.pipeline_mode<synchronous>, transform_indices = @transform_2, window_bounds = array<i64: 1, 64>}, {pipeline_mode = #tpu.pipeline_mode<synchronous>, transform_indices = @transform_3, window_bounds = array<i64: 64, 128>}, {pipeline_mode = #tpu.pipeline_mode<synchronous>, transform_indices = @transform_4, window_bounds = array<i64: 1, 128>}, {transform_indices = @transform_5, window_bounds = array<i64: 64, 128>}, {transform_indices = @transform_6, window_bounds = array<i64: 1, 2, 128>}]} {
    %c0 = arith.constant 0 : index
    %c0_0 = arith.constant 0 : index
    %0 = vector.load %arg1[%c0, %c0_0] : memref<64x64xbf16, #tpu.memory_space<vmem>>, vector<64x64xbf16>
    %1 = arith.extf %0 : vector<64x64xbf16> to vector<64x64xf32>
    %c0_1 = arith.constant 0 : index
    %c0_2 = arith.constant 0 : index
    %2 = vector.load %arg2[%c0_1, %c0_2] : memref<1x64xf32, #tpu.memory_space<vmem>>, vector<1x64xf32>
    %3 = vector.broadcast %2 : vector<1x64xf32> to vector<64x64xf32>
    %4 = arith.mulf %1, %3 : vector<64x64xf32>
    %c0_3 = arith.constant 0 : index
    %c0_4 = arith.constant 0 : index
    %5 = vector.load %arg3[%c0_3, %c0_4] : memref<1x64xf32, #tpu.memory_space<vmem>>, vector<1x64xf32>
    %6 = vector.broadcast %5 : vector<1x64xf32> to vector<64x64xf32>
    %7 = arith.addf %4, %6 : vector<64x64xf32>
    %cst = arith.constant 0.000000e+00 : f32
    %8 = vector.broadcast %cst : f32 to vector<64x64xf32>
    %9 = arith.maximumf %7, %8 : vector<64x64xf32>
    %10 = arith.truncf %9 : vector<64x64xf32> to vector<64x64xbf16>
    %c0_5 = arith.constant 0 : index
    %c0_6 = arith.constant 0 : index
    %11 = vector.load %arg4[%c0_5, %c0_6] : memref<64x128xbf16, #tpu.memory_space<vmem>>, vector<64x128xbf16>
    %cst_7 = arith.constant dense<0.000000e+00> : vector<64x128xf32>
    %12 = tpu.matmul %10, %11, %cst_7 {dimension_numbers = #tpu.dot_dimension_numbers<[1], [0], [0], [1], [0, 0, 1, 1], [], []>} : vector<64x64xbf16>, vector<64x128xbf16>, vector<64x128xf32> -> vector<64x128xf32>
    %c0_8 = arith.constant 0 : index
    %c0_9 = arith.constant 0 : index
    %13 = vector.load %arg5[%c0_8, %c0_9] : memref<1x128xf32, #tpu.memory_space<vmem>>, vector<1x128xf32>
    %14 = vector.broadcast %13 : vector<1x128xf32> to vector<64x128xf32>
    %15 = arith.addf %12, %14 : vector<64x128xf32>
    %16 = arith.truncf %15 : vector<64x128xf32> to vector<64x128xbf16>
    %c0_10 = arith.constant 0 : index
    %c0_11 = arith.constant 0 : index
    %17 = vector.load %arg6[%c0_10, %c0_11] : memref<64x128xbf16, #tpu.memory_space<vmem>>, vector<64x128xbf16>
    tpu.vector_store %arg6[%c0_10, %c0_11], %16 {strides = array<i32>} : memref<64x128xbf16, #tpu.memory_space<vmem>>, vector<64x128xbf16>,
    %18 = arith.extf %16 : vector<64x128xbf16> to vector<64x128xf32>
    %cst_12 = arith.constant dense<0.000000e+00> : vector<128xf32>
    %19 = vector.multi_reduction <add>, %18, %cst_12 [0] : vector<64x128xf32> to vector<128xf32>
    %20 = vector.shape_cast %19 : vector<128xf32> to vector<1x128xf32>
    %21 = arith.mulf %18, %18 : vector<64x128xf32>
    %cst_13 = arith.constant dense<0.000000e+00> : vector<128xf32>
    %22 = vector.multi_reduction <add>, %21, %cst_13 [0] : vector<64x128xf32> to vector<128xf32>
    %23 = vector.shape_cast %22 : vector<128xf32> to vector<1x128xf32>
    %24 = tpu.concatenate %20, %23 in 0 : vector<1x128xf32>, vector<1x128xf32> -> vector<2x128xf32>
    %c0_14 = arith.constant 0 : index
    %c0_15 = arith.constant 0 : index
    %c0_16 = arith.constant 0 : index
    %25 = vector.load %arg7[%c0_14, %c0_15, %c0_16] : memref<1x2x128xf32, #tpu.memory_space<vmem>>, vector<1x2x128xf32>
    %26 = vector.shape_cast %25 : vector<1x2x128xf32> to vector<2x128xf32>
    %27 = vector.shape_cast %24 : vector<2x128xf32> to vector<1x2x128xf32>
    tpu.vector_store %arg7[%c0_14, %c0_15, %c0_16], %27 {strides = array<i32>} : memref<1x2x128xf32, #tpu.memory_space<vmem>>, vector<1x2x128xf32>,
    return
  }
  func.func @transform_0(%arg0: i32) -> (i32, i32) {
    %c0_i32 = arith.constant 0 : i32
    %c0_i32_0 = arith.constant 0 : i32
    return %arg0, %c0_i32 : i32, i32
  }
  func.func @transform_1(%arg0: i32) -> (i32, i32) {
    %c0_i32 = arith.constant 0 : i32
    %c0_i32_0 = arith.constant 0 : i32
    %c0_i32_1 = arith.constant 0 : i32
    return %c0_i32, %c0_i32_0 : i32, i32
  }
  func.func @transform_2(%arg0: i32) -> (i32, i32) {
    %c0_i32 = arith.constant 0 : i32
    %c0_i32_0 = arith.constant 0 : i32
    %c0_i32_1 = arith.constant 0 : i32
    return %c0_i32, %c0_i32_0 : i32, i32
  }
  func.func @transform_3(%arg0: i32) -> (i32, i32) {
    %c0_i32 = arith.constant 0 : i32
    %c0_i32_0 = arith.constant 0 : i32
    %c0_i32_1 = arith.constant 0 : i32
    return %c0_i32, %c0_i32_0 : i32, i32
  }
  func.func @transform_4(%arg0: i32) -> (i32, i32) {
    %c0_i32 = arith.constant 0 : i32
    %c0_i32_0 = arith.constant 0 : i32
    %c0_i32_1 = arith.constant 0 : i32
    return %c0_i32, %c0_i32_0 : i32, i32
  }
  func.func @transform_5(%arg0: i32) -> (i32, i32) {
    %c0_i32 = arith.constant 0 : i32
    %c0_i32_0 = arith.constant 0 : i32
    return %arg0, %c0_i32 : i32, i32
  }
  func.func @transform_6(%arg0: i32) -> (i32, i32, i32) {
    %c0_i32 = arith.constant 0 : i32
    %c0_i32_0 = arith.constant 0 : i32
    %c0_i32_1 = arith.constant 0 : i32
    return %arg0, %c0_i32, %c0_i32_0 : i32, i32, i32
  }
}

</mosaic_0001>

<llo_original>
// kernel: bottleneck_forward.4
$region0: #{bottleneck_forward.4}
  #allocation0 [shape = 'u32[]', space=smem, size = 0x4, offset = 0x4, fixed_abs, tag = 'smem constant byte address 0x4 - core index']
  #allocation1 [shape = 'u32[144,128]{1,0:T(1,128)}', space=vmem, size = 0x12000, scoped, tag = 'internal scratch']
  %s0 = inlined_call_operand.vmem [shape: bf16[128,64], index: 0, kind: input, shape index: {}]
  %s1 = inlined_call_operand.vmem [shape: bf16[64,64], index: 1, kind: input, shape index: {}]
  %s2 = inlined_call_operand.vmem [shape: f32[1,64], index: 2, kind: input, shape index: {}]
  %s3 = inlined_call_operand.vmem [shape: bf16[64,128], index: 3, kind: input, shape index: {}]
  %s4 = inlined_call_operand.vmem [shape: f32[1,128], index: 4, kind: input, shape index: {}]
  %s5 = inlined_call_operand.vmem [shape: bf16[128,64], index: 5, kind: output, shape index: {0}]
  %s6 = inlined_call_operand.vmem [shape: bf16[128,128], index: 6, kind: output, shape index: {1}]
  %s7 = inlined_call_operand.vmem [shape: f32[2,2,64], index: 7, kind: output, shape index: {2}]
  %s8 = inlined_call_operand.vmem [shape: f32[2,2,128], index: 8, kind: output, shape index: {3}]
  %9 = xla_tuple %s5, %s6, %s7, %s8
  %s10 = sld [smem:[#allocation0]]
  $region77: #{bottleneck_forward.4} parent=0
    _
  %s12 = ssub.s32 1, %s10
  %s13 = scalar_select 0, %s12, %s10
  loop: start=0, step=1, limit=4
  $region2: #{bottleneck_forward.4} parent=0 // loop_pre_header
    _
  $region3: #{bottleneck_forward.4} parent=0 // loop_header
    %s15 = sphi 0, %s19
    %p16 = scmp.ge.s32.totalorder %s15, 4
    %s25 = sphi 0, %s27
    %s28 = sphi 0, %s25
    %s29 = sphi 0, %s28
    %s45 = sphi 0, %s29
    %s49 = sphi 0, %s49
    %s51 = sphi 0, %s49
    %s52 = sphi 0, %s51
    %s66 = sphi 0, %s52
    %s70 = sphi 0, %s70
    %s72 = sphi 0, %s70
    %s73 = sphi 0, %s72
    %s87 = sphi 0, %s73
    %s91 = sphi 0, %s91
    %s93 = sphi 0, %s91
    %s94 = sphi 0, %s93
    %s108 = sphi 0, %s94
    %s112 = sphi 0, %s112
    %s114 = sphi 0, %s112
    %s115 = sphi 0, %s114
    %s129 = sphi 0, %s115
    %s135 = sphi 0, %s137
    %s138 = sphi 0, %s135
    %s139 = sphi 0, %s138
    %s155 = sphi 0, %s139
    %s161 = sphi 0, %s163
    %s164 = sphi 0, %s161
    %s165 = sphi 0, %s164
    %s181 = sphi 0, %s165
    %s187 = sphi 0, %s189
    %s190 = sphi 0, %s187
    %s191 = sphi 0, %s190
    %s207 = sphi 0, %s191
    %s213 = sphi 0, %s215
    %s216 = sphi 0, %s213
    %s217 = sphi 0, %s216
    %s233 = sphi 0, %s217
  $region4: #{bottleneck_forward.4} parent=0 // loop_header_branch
    %18 = sbr.rel (%p16) target = $region8
  $region5: #{bottleneck_forward.4} parent=0 // loop_body
    %s20 = ssub.s32 %s15, 1
    %s21 = ssub.s32 %s15, 2
    %s22 = sadd.s32 %s15, 1
    %s23 = ssub.s32 %s15, %s22
    %p24 = scmp.eq.s32.totalorder %s23, 0
    %s26 = sadd.s32 %s25, 1
    %s27 = scalar_select %p24, %s25, %s26
    %p30 = pneg %p24
    %p31 = scmp.eq.s32.totalorder %s15, 1
    %p32 = por %p30, %p31
    %p33 = scmp.ne.s32.totalorder %s25, %s28
    %p34 = scmp.eq.s32.totalorder %s15, 0
    %p35 = por %p33, %p34
    %p36 = scmp.ne.s32.totalorder %s25, %s28
    %p37 = scmp.eq.s32.totalorder %s20, 1
    %p38 = por %p36, %p37
    %p39 = scmp.ne.s32.totalorder %s28, %s29
    %p40 = scmp.eq.s32.totalorder %s20, 0
    %p41 = por %p39, %p40
    %p42 = scmp.ne.s32.totalorder %s28, %s29
    %p43 = scmp.eq.s32.totalorder %s21, 1
    %p44 = por %p42, %p43
    %p46 = scmp.ne.s32.totalorder %s29, %s45
    %p47 = scmp.eq.s32.totalorder %s21, 0
    %p48 = por %p46, %p47
    %s50 = sadd.s32 %s49, 1
    %p53 = scmp.eq.s32.totalorder %s15, 1
    %p54 = scmp.ne.s32.totalorder %s49, %s51
    %p55 = scmp.eq.s32.totalorder %s15, 0
    %p56 = por %p54, %p55
    %p57 = scmp.ne.s32.totalorder %s49, %s51
    %p58 = scmp.eq.s32.totalorder %s20, 1
    %p59 = por %p57, %p58
    %p60 = scmp.ne.s32.totalorder %s51, %s52
    %p61 = scmp.eq.s32.totalorder %s20, 0
    %p62 = por %p60, %p61
    %p63 = scmp.ne.s32.totalorder %s51, %s52
    %p64 = scmp.eq.s32.totalorder %s21, 1
    %p65 = por %p63, %p64
    %p67 = scmp.ne.s32.totalorder %s52, %s66
    %p68 = scmp.eq.s32.totalorder %s21, 0
    %p69 = por %p67, %p68
    %s71 = sadd.s32 %s70, 1
    %p74 = scmp.eq.s32.totalorder %s15, 1
    %p75 = scmp.ne.s32.totalorder %s70, %s72
    %p76 = scmp.eq.s32.totalorder %s15, 0
    %p77 = por %p75, %p76
    %p78 = scmp.ne.s32.totalorder %s70, %s72
    %p79 = scmp.eq.s32.totalorder %s20, 1
    %p80 = por %p78, %p79
    %p81 = scmp.ne.s32.totalorder %s72, %s73
    %p82 = scmp.eq.s32.totalorder %s20, 0
    %p83 = por %p81, %p82
    %p84 = scmp.ne.s32.totalorder %s72, %s73
    %p85 = scmp.eq.s32.totalorder %s21, 1
    %p86 = por %p84, %p85
    %p88 = scmp.ne.s32.totalorder %s73, %s87
    %p89 = scmp.eq.s32.totalorder %s21, 0
    %p90 = por %p88, %p89
    %s92 = sadd.s32 %s91, 1
    %p95 = scmp.eq.s32.totalorder %s15, 1
    %p96 = scmp.ne.s32.totalorder %s91, %s93
    %p97 = scmp.eq.s32.totalorder %s15, 0
    %p98 = por %p96, %p97
    %p99 = scmp.ne.s32.totalorder %s91, %s93
    %p100 = scmp.eq.s32.totalorder %s20, 1
    %p101 = por %p99, %p100
    %p102 = scmp.ne.s32.totalorder %s93, %s94
    %p103 = scmp.eq.s32.totalorder %s20, 0
    %p104 = por %p102, %p103
    %p105 = scmp.ne.s32.totalorder %s93, %s94
    %p106 = scmp.eq.s32.totalorder %s21, 1
    %p107 = por %p105, %p106
    %p109 = scmp.ne.s32.totalorder %s94, %s108
    %p110 = scmp.eq.s32.totalorder %s21, 0
    %p111 = por %p109, %p110
    %s113 = sadd.s32 %s112, 1
    %p116 = scmp.eq.s32.totalorder %s15, 1
    %p117 = scmp.ne.s32.totalorder %s112, %s114
    %p118 = scmp.eq.s32.totalorder %s15, 0
    %p119 = por %p117, %p118
    %p120 = scmp.ne.s32.totalorder %s112, %s114
    %p121 = scmp.eq.s32.totalorder %s20, 1
    %p122 = por %p120, %p121
    %p123 = scmp.ne.s32.totalorder %s114, %s115
    %p124 = scmp.eq.s32.totalorder %s20, 0
    %p125 = por %p123, %p124
    %p126 = scmp.ne.s32.totalorder %s114, %s115
    %p127 = scmp.eq.s32.totalorder %s21, 1
    %p128 = por %p126, %p127
    %p130 = scmp.ne.s32.totalorder %s115, %s129
    %p131 = scmp.eq.s32.totalorder %s21, 0
    %p132 = por %p130, %p131
    %s133 = ssub.s32 %s15, %s22
    %p134 = scmp.eq.s32.totalorder %s133, 0
    %s136 = sadd.s32 %s135, 1
    %s137 = scalar_select %p134, %s135, %s136
    %p140 = pneg %p134
    %p141 = scmp.eq.s32.totalorder %s15, 1
    %p142 = por %p140, %p141
    %p143 = scmp.ne.s32.totalorder %s135, %s138
    %p144 = scmp.eq.s32.totalorder %s15, 0
    %p145 = por %p143, %p144
    %p146 = scmp.ne.s32.totalorder %s135, %s138
    %p147 = scmp.eq.s32.totalorder %s20, 1
    %p148 = por %p146, %p147
    %p149 = scmp.ne.s32.totalorder %s138, %s139
    %p150 = scmp.eq.s32.totalorder %s20, 0
    %p151 = por %p149, %p150
    %p152 = scmp.ne.s32.totalorder %s138, %s139
    %p153 = scmp.eq.s32.totalorder %s21, 1
    %p154 = por %p152, %p153
    %p156 = scmp.ne.s32.totalorder %s139, %s155
    %p157 = scmp.eq.s32.totalorder %s21, 0
    %p158 = por %p156, %p157
    %s159 = ssub.s32 %s15, %s22
    %p160 = scmp.eq.s32.totalorder %s159, 0
    %s162 = sadd.s32 %s161, 1
    %s163 = scalar_select %p160, %s161, %s162
    %p166 = pneg %p160
    %p167 = scmp.eq.s32.totalorder %s15, 1
    %p168 = por %p166, %p167
    %p169 = scmp.ne.s32.totalorder %s161, %s164
    %p170 = scmp.eq.s32.totalorder %s15, 0
    %p171 = por %p169, %p170
    %p172 = scmp.ne.s32.totalorder %s161, %s164
    %p173 = scmp.eq.s32.totalorder %s20, 1
    %p174 = por %p172, %p173
    %p175 = scmp.ne.s32.totalorder %s164, %s165
    %p176 = scmp.eq.s32.totalorder %s20, 0
    %p177 = por %p175, %p176
    %p178 = scmp.ne.s32.totalorder %s164, %s165
    %p179 = scmp.eq.s32.totalorder %s21, 1
    %p180 = por %p178, %p179
    %p182 = scmp.ne.s32.totalorder %s165, %s181
    %p183 = scmp.eq.s32.totalorder %s21, 0
    %p184 = por %p182, %p183
    %s185 = ssub.s32 %s15, %s22
    %p186 = scmp.eq.s32.totalorder %s185, 0
    %s188 = sadd.s32 %s187, 1
    %s189 = scalar_select %p186, %s187, %s188
    %p192 = pneg %p186
    %p193 = scmp.eq.s32.totalorder %s15, 1
    %p194 = por %p192, %p193
    %p195 = scmp.ne.s32.totalorder %s187, %s190
    %p196 = scmp.eq.s32.totalorder %s15, 0
    %p197 = por %p195, %p196
    %p198 = scmp.ne.s32.totalorder %s187, %s190
    %p199 = scmp.eq.s32.totalorder %s20, 1
    %p200 = por %p198, %p199
    %p201 = scmp.ne.s32.totalorder %s190, %s191
    %p202 = scmp.eq.s32.totalorder %s20, 0
    %p203 = por %p201, %p202
    %p204 = scmp.ne.s32.totalorder %s190, %s191
    %p205 = scmp.eq.s32.totalorder %s21, 1
    %p206 = por %p204, %p205
    %p208 = scmp.ne.s32.totalorder %s191, %s207
    %p209 = scmp.eq.s32.totalorder %s21, 0
    %p210 = por %p208, %p209
    %s211 = ssub.s32 %s15, %s22
    %p212 = scmp.eq.s32.totalorder %s211, 0
    %s214 = sadd.s32 %s213, 1
    %s215 = scalar_select %p212, %s213, %s214
    %p218 = pneg %p212
    %p219 = scmp.eq.s32.totalorder %s15, 1
    %p220 = por %p218, %p219
    %p221 = scmp.ne.s32.totalorder %s213, %s216
    %p222 = scmp.eq.s32.totalorder %s15, 0
    %p223 = por %p221, %p222
    %p224 = scmp.ne.s32.totalorder %s213, %s216
    %p225 = scmp.eq.s32.totalorder %s20, 1
    %p226 = por %p224, %p225
    %p227 = scmp.ne.s32.totalorder %s216, %s217
    %p228 = scmp.eq.s32.totalorder %s20, 0
    %p229 = por %p227, %p228
    %p230 = scmp.ne.s32.totalorder %s216, %s217
    %p231 = scmp.eq.s32.totalorder %s21, 1
    %p232 = por %p230, %p231
    %p234 = scmp.ne.s32.totalorder %s217, %s233
    %p235 = scmp.eq.s32.totalorder %s21, 0
    %p236 = por %p234, %p235
    %p237 = scmp.le.s32.totalorder 1, %s15
    %p238 = scmp.lt.s32.totalorder %s15, 3
    %p239 = pnand %p237, %p238
    %p240 = pneg %p239
    // Predicated region
    $region9: #{bottleneck_forward.4} parent=5 // pred_check
      _
    $region10: #{bottleneck_forward.4} parent=5 // pred_check_branch
      %242 = sbr.rel (%p239) target = $region12
    $region11: #{bottleneck_forward.4} parent=5 // pred_region
      %s243 = ssub.s32 %s15, 1
      // Predicated region
      $region13: #{bottleneck_forward.4} parent=11 // pred_check
        %p244 = pneg %p62
      $region14: #{bottleneck_forward.4} parent=11 // pred_check_branch
        %246 = sbr.rel (%p244) target = $region16
      $region15: #{bottleneck_forward.4} parent=11 // pred_region
        _
      $region16: #{bottleneck_forward.4} parent=11 // pred_fallthru
        _
      // Predicated region
      $region17: #{bottleneck_forward.4} parent=11 // pred_check
        %p247 = pneg %p83
      $region18: #{bottleneck_forward.4} parent=11 // pred_check_branch
        %249 = sbr.rel (%p247) target = $region20
      $region19: #{bottleneck_forward.4} parent=11 // pred_region
        _
      $region20: #{bottleneck_forward.4} parent=11 // pred_fallthru
        _
      // Predicated region
      $region21: #{bottleneck_forward.4} parent=11 // pred_check
        %p250 = pneg %p104
      $region22: #{bottleneck_forward.4} parent=11 // pred_check_branch
        %252 = sbr.rel (%p250) target = $region24
      $region23: #{bottleneck_forward.4} parent=11 // pred_region
        _
      $region24: #{bottleneck_forward.4} parent=11 // pred_fallthru
        _
      // Predicated region
      $region25: #{bottleneck_forward.4} parent=11 // pred_check
        %p253 = pneg %p125
      $region26: #{bottleneck_forward.4} parent=11 // pred_check_branch
        %255 = sbr.rel (%p253) target = $region28
      $region27: #{bottleneck_forward.4} parent=11 // pred_region
        _
      $region28: #{bottleneck_forward.4} parent=11 // pred_fallthru
        _
    $region12: #{bottleneck_forward.4} parent=5 // pred_fallthru
      _
    %p256 = scmp.lt.s32.totalorder %s15, 2
    // Predicated region
    $region29: #{bottleneck_forward.4} parent=5 // pred_check
      %p257 = pneg %p256
    $region30: #{bottleneck_forward.4} parent=5 // pred_check_branch
      %259 = sbr.rel (%p257) target = $region32
    $region31: #{bottleneck_forward.4} parent=5 // pred_region
      // Predicated region
      $region33: #{bottleneck_forward.4} parent=31 // pred_check
        %p260 = pneg %p35
      $region34: #{bottleneck_forward.4} parent=31 // pred_check_branch
        %262 = sbr.rel (%p260) target = $region36
      $region35: #{bottleneck_forward.4} parent=31 // pred_region
        %s263 = smul.u32 8, %s15
        %p264 = scmp.lt.s32.totalorder %s263, 15
        %s265 = scalar_select %p264, %s263, 15
        %s266 = smul.addr %s265, 4
        %s267 = scalar_lea.vmem %s0, %s266
        %s268 = smul.u32 8, %s15
      $region36: #{bottleneck_forward.4} parent=31 // pred_fallthru
        _
    $region32: #{bottleneck_forward.4} parent=5 // pred_fallthru
      _
    %p269 = scmp.le.s32.totalorder 1, %s15
    %p270 = scmp.lt.s32.totalorder %s15, 3
    %p271 = pnand %p269, %p270
    %p272 = pneg %p271
    // Predicated region
    $region37: #{bottleneck_forward.4} parent=5 // pred_check
      _
    $region38: #{bottleneck_forward.4} parent=5 // pred_check_branch
      %274 = sbr.rel (%p271) target = $region40
    $region39: #{bottleneck_forward.4} parent=5 // pred_region
      %s275 = ssub.s32 %s15, 1
      %s276 = smul.u32 8, %s20
      %p277 = scmp.lt.s32.totalorder %s276, 15
      %s278 = scalar_select %p277, %s276, 15
      %s279 = smul.addr %s278, 4
      %s280 = scalar_lea.vmem %s0, %s279
      %p281 = pneg %p41
      %p282 = pneg %p38
      %p283 = pneg %p62
      %p284 = pneg %p59
      %p285 = pneg %p83
      %p286 = pneg %p80
      %p287 = pneg %p104
      %p288 = pneg %p101
      %p289 = pneg %p125
      %p290 = pneg %p122
      %p291 = pneg %p151
      %p292 = pneg %p148
      %s293 = smul.u32 8, %s20
      %p294 = scmp.lt.s32.totalorder %s293, 15
      %s295 = scalar_select %p294, %s293, 15
      %s296 = smul.addr %s295, 4
      %s297 = scalar_lea.vmem %s5, %s296
      %p298 = pneg %p177
      %p299 = pneg %p174
      %s300 = smul.u32 8, %s20
      %p301 = scmp.lt.s32.totalorder %s300, 15
      %s302 = scalar_select %p301, %s300, 15
      %s303 = smul.addr %s302, 4
      %s304 = scalar_lea.vmem %s6, %s303
      %p305 = pneg %p203
      %p306 = pneg %p200
      %p307 = scmp.lt.s32.totalorder %s20, 1
      %s308 = scalar_select %p307, %s20, 1
      %s309 = smul.addr %s308, 2
      %s310 = scalar_lea.vmem %s7, %s309
      %p311 = pneg %p229
      %p312 = pneg %p226
      %p313 = scmp.lt.s32.totalorder %s20, 1
      %s314 = scalar_select %p313, %s20, 1
      %s315 = smul.addr %s314, 2
      %s316 = scalar_lea.vmem %s8, %s315
      %s317 = smul.u32 8, %s20
      %p318 = scmp.lt.s32.totalorder %s317, 15
      %s319 = scalar_select %p318, %s317, 15
      %s320 = smul.addr %s319, 4
      %s321 = scalar_lea.vmem %s0, %s320
      %s322 = smul.u32 8, %s20
      %s323 = smul.u32 8, %s20
      %p324 = scmp.lt.s32.totalorder %s323, 15
      %s325 = scalar_select %p324, %s323, 15
      %s326 = smul.addr %s325, 4
      %s327 = scalar_lea.vmem %s5, %s326
      %s328 = smul.u32 8, %s20
      %s329 = smul.u32 8, %s20
      %p330 = scmp.lt.s32.totalorder %s329, 15
      %s331 = scalar_select %p330, %s329, 15
      %s332 = smul.addr %s331, 4
      %s333 = scalar_lea.vmem %s6, %s332
      %s334 = smul.u32 8, %s20
      %p335 = scmp.lt.s32.totalorder %s20, 1
      %s336 = scalar_select %p335, %s20, 1
      %s337 = smul.addr %s336, 2
      %s338 = scalar_lea.vmem %s7, %s337
      %p339 = scmp.lt.s32.totalorder %s20, 1
      %s340 = scalar_select %p339, %s20, 1
      %s341 = smul.addr %s340, 2
      %s342 = scalar_lea.vmem %s8, %s341
      %v344 = vld [vmem:[%s321] sm:$0xf]
      %v345 = vld [vmem:[%s321 + $0x4] sm:$0xf]
      %v346 = vld [vmem:[%s321 + $0x8] sm:$0xf]
      %v347 = vld [vmem:[%s321 + $0xc] sm:$0xf]
      %v348 = vld [vmem:[%s321 + $0x10] sm:$0xf]
      %v349 = vld [vmem:[%s321 + $0x14] sm:$0xf]
      %v350 = vld [vmem:[%s321 + $0x18] sm:$0xf]
      %v351 = vld [vmem:[%s321 + $0x1c] sm:$0xf]
      %v352 = vld [vmem:[%s1] sm:$0xf]
      %v353 = vld [vmem:[%s1 + $0x4] sm:$0xf]
      %v354 = vld [vmem:[%s1 + $0x8] sm:$0xf]
      %v355 = vld [vmem:[%s1 + $0xc] sm:$0xf]
      %v356 = vld [vmem:[%s1 + $0x10] sm:$0xf]
      %v357 = vld [vmem:[%s1 + $0x14] sm:$0xf]
      %v358 = vld [vmem:[%s1 + $0x18] sm:$0xf]
      %v359 = vld [vmem:[%s1 + $0x1c] sm:$0xf]
      %v360 = vld [vmem:[%s2] sm:$0x1]
      %v362 = vlaneseq
      %v363 = vshrl.u32 %v362, 7
      %v364 = vsub.s32 0, %v363
      %v365 = vrot.slane %v360, %v364
      %v375 = vunpack.c.l.b16 %v344
      %v376 = vunpack.c.l.b16 %v345
      %v377 = vunpack.c.l.b16 %v346
      %v378 = vunpack.c.l.b16 %v347
      %v379 = vunpack.c.l.b16 %v348
      %v380 = vunpack.c.l.b16 %v349
      %v381 = vunpack.c.l.b16 %v350
      %v382 = vunpack.c.l.b16 %v351
      %v383 = vpack.c.b16 %v376, %v375
      %v384 = vpack.c.b16 %v378, %v377
      %v385 = vpack.c.b16 %v380, %v379
      %v386 = vpack.c.b16 %v382, %v381
      %v395 = vunpack.c.l.b16 %v352
      %v396 = vunpack.c.l.b16 %v353
      %v397 = vunpack.c.l.b16 %v354
      %v398 = vunpack.c.l.b16 %v355
      %v399 = vunpack.c.l.b16 %v356
      %v400 = vunpack.c.l.b16 %v357
      %v401 = vunpack.c.l.b16 %v358
      %v402 = vunpack.c.l.b16 %v359
      %v403 = vpack.c.b16 %v396, %v395
      %v404 = vpack.c.b16 %v398, %v397
      %v405 = vpack.c.b16 %v400, %v399
      %v406 = vpack.c.b16 %v402, %v401
      %vm411 = vcmask 523264
      %v413 = vsel %vm411, %v383, 0
      %v416 = vsel %vm411, %v384, 0
      %v419 = vsel %vm411, %v385, 0
      %v422 = vsel %vm411, %v386, 0
      %424 = vmatprep.subr.bf16.mxu0 0
      %425 = vmatpush1.bf16.msra.mxu0 %v403
      %426 = vmatprep.subr.bf16.mxu0 0
      %427 = vmatpush1.bf16.msra.mxu0 %v404
      %428 = vmatprep.subr.bf16.mxu0 0
      %429 = vmatpush1.bf16.msra.mxu0 %v405
      %430 = vmatprep.subr.bf16.mxu0 0
      %431 = vmatpush1.bf16.msra.mxu0 %v406
      %432 = vmatprep.subr.bf16.mxu0 0
      %433 = vmatpush1.bf16.msra.mxu0 0
      %434 = vmatprep.subr.bf16.mxu0 0
      %435 = vmatpush1.bf16.msra.mxu0 0
      %436 = vmatprep.subr.bf16.mxu0 0
      %437 = vmatpush1.bf16.msra.mxu0 0
      %438 = vmatprep.subr.bf16.mxu0 0
      %439 = vmatpush1.bf16.msra.mxu0 0
      %440 = vmatprep.subr.bf16.mxu0 0
      %441 = vmatpush1.bf16.msra.mxu0 0
      %442 = vmatprep.subr.bf16.mxu0 0
      %443 = vmatpush1.bf16.msra.mxu0 0
      %444 = vmatprep.subr.bf16.mxu0 0
      %445 = vmatpush1.bf16.msra.mxu0 0
      %446 = vmatprep.subr.bf16.mxu0 0
      %447 = vmatpush1.bf16.msra.mxu0 0
      %448 = vmatprep.subr.bf16.mxu0 0
      %449 = vmatpush1.bf16.msra.mxu0 0
      %450 = vmatprep.subr.bf16.mxu0 0
      %451 = vmatpush1.bf16.msra.mxu0 0
      %452 = vmatprep.subr.bf16.mxu0 0
      %453 = vmatpush1.bf16.msra.mxu0 0
      %454 = vmatprep.subr.bf16.mxu0 0
      %455 = vmatpush1.bf16.msra.mxu0 0
      %456 = vmatprep.mubr.bf16.mxu0 0
      %457 = vmatmul.mubr.bf16.gmra.mrb[0].mxu0 %v413
      %v458 = vpop.f32.mrb[0].mxu0
      %v459 = vadd.f32 %v365, %v458
      %v460 = vpop.f32.mrb[0].mxu0
      %v461 = vpop.f32.mrb[0].mxu0
      %v462 = vadd.f32 %v365, %v461
      %v463 = vpop.f32.mrb[0].mxu0
      %464 = vmatprep.mubr.bf16.mxu0 0
      %465 = vmatmul.mubr.bf16.gmra.mrb[0].mxu0 %v416
      %v466 = vpop.f32.mrb[0].mxu0
      %v467 = vadd.f32 %v365, %v466
      %v468 = vpop.f32.mrb[0].mxu0
      %v469 = vpop.f32.mrb[0].mxu0
      %v470 = vadd.f32 %v365, %v469
      %v471 = vpop.f32.mrb[0].mxu0
      %472 = vmatprep.mubr.bf16.mxu0 0
      %473 = vmatmul.mubr.bf16.gmra.mrb[0].mxu0 %v419
      %v474 = vpop.f32.mrb[0].mxu0
      %v475 = vadd.f32 %v365, %v474
      %v476 = vpop.f32.mrb[0].mxu0
      %v477 = vpop.f32.mrb[0].mxu0
      %v478 = vadd.f32 %v365, %v477
      %v479 = vpop.f32.mrb[0].mxu0
      %480 = vmatprep.mubr.bf16.mxu0 0
      %481 = vmatmul.mubr.bf16.gmra.mrb[0].mxu0 %v422
      %v482 = vpop.f32.mrb[0].mxu0
      %v483 = vadd.f32 %v365, %v482
      %v484 = vpop.f32.mrb[0].mxu0
      %v485 = vpop.f32.mrb[0].mxu0
      %v486 = vadd.f32 %v365, %v485
      %v487 = vpop.f32.mrb[0].mxu0
      %488 = vdwg.mxu0
      %v489 = vld [vmem:[%s3] sm:$0xf]
      %v490 = vld [vmem:[%s3 + $0x4] sm:$0xf]
      %v491 = vld [vmem:[%s3 + $0x8] sm:$0xf]
      %v492 = vld [vmem:[%s3 + $0xc] sm:$0xf]
      %v493 = vld [vmem:[%s3 + $0x10] sm:$0xf]
      %v494 = vld [vmem:[%s3 + $0x14] sm:$0xf]
      %v495 = vld [vmem:[%s3 + $0x18] sm:$0xf]
      %v496 = vld [vmem:[%s3 + $0x1c] sm:$0xf]
      %v497 = vld [vmem:[%s4] sm:$0x1]
      %v499 = vlaneseq
      %v500 = vshrl.u32 %v499, 7
      %v501 = vsub.s32 0, %v500
      %v502 = vrot.slane %v497, %v501
      %v512 = vunpack.c.l.b16 %v489
      %v513 = vunpack.c.l.b16 %v490
      %v514 = vunpack.c.l.b16 %v491
      %v515 = vunpack.c.l.b16 %v492
      %v516 = vunpack.c.l.b16 %v493
      %v517 = vunpack.c.l.b16 %v494
      %v518 = vunpack.c.l.b16 %v495
      %v519 = vunpack.c.l.b16 %v496
      %v520 = vpack.c.b16 %v513, %v512
      %v521 = vpack.c.b16 %v515, %v514
      %v522 = vpack.c.b16 %v517, %v516
      %v523 = vpack.c.b16 %v519, %v518
      %528 = vmatprep.subr.bf16.mxu0 0
      %529 = vmatpush1.bf16.msra.mxu0 %v520
      %530 = vmatprep.subr.bf16.mxu0 0
      %531 = vmatpush1.bf16.msra.mxu0 %v521
      %532 = vmatprep.subr.bf16.mxu0 0
      %533 = vmatpush1.bf16.msra.mxu0 %v522
      %534 = vmatprep.subr.bf16.mxu0 0
      %535 = vmatpush1.bf16.msra.mxu0 %v523
      %536 = vmatprep.subr.bf16.mxu0 0
      %537 = vmatpush1.bf16.msra.mxu0 0
      %538 = vmatprep.subr.bf16.mxu0 0
      %539 = vmatpush1.bf16.msra.mxu0 0
      %540 = vmatprep.subr.bf16.mxu0 0
      %541 = vmatpush1.bf16.msra.mxu0 0
      %542 = vmatprep.subr.bf16.mxu0 0
      %543 = vmatpush1.bf16.msra.mxu0 0
      %544 = vmatprep.subr.bf16.mxu0 0
      %545 = vmatpush1.bf16.msra.mxu0 0
      %546 = vmatprep.subr.bf16.mxu0 0
      %547 = vmatpush1.bf16.msra.mxu0 0
      %548 = vmatprep.subr.bf16.mxu0 0
      %549 = vmatpush1.bf16.msra.mxu0 0
      %550 = vmatprep.subr.bf16.mxu0 0
      %551 = vmatpush1.bf16.msra.mxu0 0
      %552 = vmatprep.subr.bf16.mxu0 0
      %553 = vmatpush1.bf16.msra.mxu0 0
      %554 = vmatprep.subr.bf16.mxu0 0
      %555 = vmatpush1.bf16.msra.mxu0 0
      %556 = vmatprep.subr.bf16.mxu0 0
      %557 = vmatpush1.bf16.msra.mxu0 0
      %558 = vmatprep.subr.bf16.mxu0 0
      %559 = vmatpush1.bf16.msra.mxu0 0
      %560 = vmatprep.mubr.bf16.mxu0 0
      %561 = vmatmul.mubr.bf16.gmra.mrb[0].mxu0 %v413
      %v562 = vpop.f32.mrb[0].mxu0
      %v563 = vadd.f32 %v502, %v562
      %v564 = vpop.f32.mrb[0].mxu0
      %v565 = vpop.f32.mrb[0].mxu0
      %v566 = vadd.f32 %v502, %v565
      %v567 = vpop.f32.mrb[0].mxu0
      %568 = vmatprep.mubr.bf16.mxu0 0
      %569 = vmatmul.mubr.bf16.gmra.mrb[0].mxu0 %v416
      %v570 = vpop.f32.mrb[0].mxu0
      %v571 = vadd.f32 %v502, %v570
      %v572 = vpop.f32.mrb[0].mxu0
      %v573 = vpop.f32.mrb[0].mxu0
      %v574 = vadd.f32 %v502, %v573
      %v575 = vpop.f32.mrb[0].mxu0
      %576 = vmatprep.mubr.bf16.mxu0 0
      %577 = vmatmul.mubr.bf16.gmra.mrb[0].mxu0 %v419
      %v578 = vpop.f32.mrb[0].mxu0
      %v579 = vadd.f32 %v502, %v578
      %v580 = vpop.f32.mrb[0].mxu0
      %v581 = vpop.f32.mrb[0].mxu0
      %v582 = vadd.f32 %v502, %v581
      %v583 = vpop.f32.mrb[0].mxu0
      %584 = vmatprep.mubr.bf16.mxu0 0
      %585 = vmatmul.mubr.bf16.gmra.mrb[0].mxu0 %v422
      %v586 = vpop.f32.mrb[0].mxu0
      %v587 = vadd.f32 %v502, %v586
      %v588 = vpop.f32.mrb[0].mxu0
      %v589 = vpop.f32.mrb[0].mxu0
      %v590 = vadd.f32 %v502, %v589
      %v591 = vpop.f32.mrb[0].mxu0
      %592 = vdwg.mxu0
      %v593 = vpack.c.bf16 %v462, %v459
      %v594 = vpack.c.bf16 %v470, %v467
      %v595 = vpack.c.bf16 %v478, %v475
      %v596 = vpack.c.bf16 %v486, %v483
      %v597 = vpack.c.bf16 %v566, %v563
      %v598 = vpack.c.bf16 %v574, %v571
      %v599 = vpack.c.bf16 %v582, %v579
      %v600 = vpack.c.bf16 %v590, %v587
      %v605 = vunpack.c.l.b16 %v593
      %v606 = vunpack.c.h.b16 %v593
      %v607 = vunpack.c.l.b16 %v594
      %v608 = vunpack.c.h.b16 %v594
      %v609 = vunpack.c.l.b16 %v595
      %v610 = vunpack.c.h.b16 %v595
      %v611 = vunpack.c.l.b16 %v596
      %v612 = vunpack.c.h.b16 %v596
      %v613 = vpack.c.b16 %v605, %v605
      %v614 = vpack.c.b16 %v606, %v606
      %v615 = vpack.c.b16 %v607, %v607
      %v616 = vpack.c.b16 %v608, %v608
      %v617 = vpack.c.b16 %v609, %v609
      %v618 = vpack.c.b16 %v610, %v610
      %v619 = vpack.c.b16 %v611, %v611
      %v620 = vpack.c.b16 %v612, %v612
      %vm629 = vcmask 519168
      %630 = vst.msk [vmem:[%s327] sm:$0xf] %vm629, %v613
      %631 = vst.msk [vmem:[%s327 + $0x4] sm:$0xf] %vm629, %v614
      %632 = vst.msk [vmem:[%s327 + $0x8] sm:$0xf] %vm629, %v615
      %633 = vst.msk [vmem:[%s327 + $0xc] sm:$0xf] %vm629, %v616
      %634 = vst.msk [vmem:[%s327 + $0x10] sm:$0xf] %vm629, %v617
      %635 = vst.msk [vmem:[%s327 + $0x14] sm:$0xf] %vm629, %v618
      %636 = vst.msk [vmem:[%s327 + $0x18] sm:$0xf] %vm629, %v619
      %637 = vst.msk [vmem:[%s327 + $0x1c] sm:$0xf] %vm629, %v620
      %v642 = vunpack.c.l.b16 %v597
      %v643 = vunpack.c.h.b16 %v597
      %v644 = vunpack.c.l.b16 %v598
      %v645 = vunpack.c.h.b16 %v598
      %v646 = vunpack.c.l.b16 %v599
      %v647 = vunpack.c.h.b16 %v599
      %v648 = vunpack.c.l.b16 %v600
      %v649 = vunpack.c.h.b16 %v600
      %v650 = vpack.c.b16 %v642, %v642
      %v651 = vpack.c.b16 %v643, %v643
      %v652 = vpack.c.b16 %v644, %v644
      %v653 = vpack.c.b16 %v645, %v645
      %v654 = vpack.c.b16 %v646, %v646
      %v655 = vpack.c.b16 %v647, %v647
      %v656 = vpack.c.b16 %v648, %v648
      %v657 = vpack.c.b16 %v649, %v649
      %666 = vst [vmem:[%s333] sm:$0xf] %v650
      %667 = vst [vmem:[%s333 + $0x4] sm:$0xf] %v651
      %668 = vst [vmem:[%s333 + $0x8] sm:$0xf] %v652
      %669 = vst [vmem:[%s333 + $0xc] sm:$0xf] %v653
      %670 = vst [vmem:[%s333 + $0x10] sm:$0xf] %v654
      %671 = vst [vmem:[%s333 + $0x14] sm:$0xf] %v655
      %672 = vst [vmem:[%s333 + $0x18] sm:$0xf] %v656
      %673 = vst [vmem:[%s333 + $0x1c] sm:$0xf] %v657
      %v674 = vunpack.c.l.bf16 %v593
      %v675 = vunpack.c.h.bf16 %v593
      %v676 = vunpack.c.l.bf16 %v594
      %v677 = vunpack.c.h.bf16 %v594
      %v678 = vunpack.c.l.bf16 %v595
      %v679 = vunpack.c.h.bf16 %v595
      %v680 = vunpack.c.l.bf16 %v596
      %v681 = vunpack.c.h.bf16 %v596
      %v682 = vsel %vm411, %v674, 0.0
      %v683 = vsel %vm411, %v675, 0.0
      %v684 = vadd.f32 %v682, %v683
      %v685 = vsel %vm411, %v676, 0.0
      %v686 = vadd.f32 %v684, %v685
      %v687 = vsel %vm411, %v677, 0.0
      %v688 = vadd.f32 %v686, %v687
      %v689 = vsel %vm411, %v678, 0.0
      %v690 = vadd.f32 %v688, %v689
      %v691 = vsel %vm411, %v679, 0.0
      %v692 = vadd.f32 %v690, %v691
      %v693 = vsel %vm411, %v680, 0.0
      %v694 = vadd.f32 %v692, %v693
      %v695 = vsel %vm411, %v681, 0.0
      %v696 = vadd.f32 %v694, %v695
      %v697 = vrot.slane %v696, 4
      %v698 = vadd.f32 %v696, %v697
      %v699 = vrot.slane %v698, 2
      %v700 = vadd.f32 %v698, %v699
      %v701 = vrot.slane %v700, 1
      %v702 = vadd.f32 %v700, %v701
      %v703 = vmul.f32 %v674, %v674
      %v704 = vmul.f32 %v675, %v675
      %v705 = vmul.f32 %v676, %v676
      %v706 = vmul.f32 %v677, %v677
      %v707 = vmul.f32 %v678, %v678
      %v708 = vmul.f32 %v679, %v679
      %v709 = vmul.f32 %v680, %v680
      %v710 = vmul.f32 %v681, %v681
      %v711 = vsel %vm411, %v703, 0.0
      %v712 = vsel %vm411, %v704, 0.0
      %v713 = vadd.f32 %v711, %v712
      %v714 = vsel %vm411, %v705, 0.0
      %v715 = vadd.f32 %v713, %v714
      %v716 = vsel %vm411, %v706, 0.0
      %v717 = vadd.f32 %v715, %v716
      %v718 = vsel %vm411, %v707, 0.0
      %v719 = vadd.f32 %v717, %v718
      %v720 = vsel %vm411, %v708, 0.0
      %v721 = vadd.f32 %v719, %v720
      %v722 = vsel %vm411, %v709, 0.0
      %v723 = vadd.f32 %v721, %v722
      %v724 = vsel %vm411, %v710, 0.0
      %v725 = vadd.f32 %v723, %v724
      %v726 = vrot.slane %v725, 4
      %v727 = vadd.f32 %v725, %v726
      %v728 = vrot.slane %v727, 2
      %v729 = vadd.f32 %v727, %v728
      %v730 = vrot.slane %v729, 1
      %v731 = vadd.f32 %v729, %v730
      %vm732 = vcmask 1040384
      %v733 = vsel %vm732, %v702, %v731
      %vm734 = vcmask 517120
      %735 = vst.msk [vmem:[%s338] sm:$0x3] %vm734, %v733
      %v736 = vunpack.c.l.bf16 %v597
      %v737 = vunpack.c.h.bf16 %v597
      %v738 = vunpack.c.l.bf16 %v598
      %v739 = vunpack.c.h.bf16 %v598
      %v740 = vunpack.c.l.bf16 %v599
      %v741 = vunpack.c.h.bf16 %v599
      %v742 = vunpack.c.l.bf16 %v600
      %v743 = vunpack.c.h.bf16 %v600
      %v744 = vadd.f32 %v736, %v737
      %v745 = vadd.f32 %v744, %v738
      %v746 = vadd.f32 %v745, %v739
      %v747 = vadd.f32 %v746, %v740
      %v748 = vadd.f32 %v747, %v741
      %v749 = vadd.f32 %v748, %v742
      %v750 = vadd.f32 %v749, %v743
      %v751 = vrot.slane %v750, 4
      %v752 = vadd.f32 %v750, %v751
      %v753 = vrot.slane %v752, 2
      %v754 = vadd.f32 %v752, %v753
      %v755 = vrot.slane %v754, 1
      %v756 = vadd.f32 %v754, %v755
      %v757 = vmul.f32 %v736, %v736
      %v758 = vmul.f32 %v737, %v737
      %v759 = vmul.f32 %v738, %v738
      %v760 = vmul.f32 %v739, %v739
      %v761 = vmul.f32 %v740, %v740
      %v762 = vmul.f32 %v741, %v741
      %v763 = vmul.f32 %v742, %v742
      %v764 = vmul.f32 %v743, %v743
      %v765 = vadd.f32 %v757, %v758
      %v766 = vadd.f32 %v765, %v759
      %v767 = vadd.f32 %v766, %v760
      %v768 = vadd.f32 %v767, %v761
      %v769 = vadd.f32 %v768, %v762
      %v770 = vadd.f32 %v769, %v763
      %v771 = vadd.f32 %v770, %v764
      %v772 = vrot.slane %v771, 4
      %v773 = vadd.f32 %v771, %v772
      %v774 = vrot.slane %v773, 2
      %v775 = vadd.f32 %v773, %v774
      %v776 = vrot.slane %v775, 1
      %v777 = vadd.f32 %v775, %v776
      %v778 = vsel %vm732, %v756, %v777
      %779 = vst [vmem:[%s342] sm:$0x3] %v778
      %s780 = smul.u32 8, %s20
      %p781 = scmp.lt.s32.totalorder %s780, 15
      %s782 = scalar_select %p781, %s780, 15
      %s783 = smul.addr %s782, 4
      %s784 = scalar_lea.vmem %s5, %s783
      %s785 = smul.u32 8, %s20
      %p786 = scmp.lt.s32.totalorder %s785, 15
      %s787 = scalar_select %p786, %s785, 15
      %s788 = smul.addr %s787, 4
      %s789 = scalar_lea.vmem %s6, %s788
      %p790 = scmp.lt.s32.totalorder %s20, 1
      %s791 = scalar_select %p790, %s20, 1
      %s792 = smul.addr %s791, 2
      %s793 = scalar_lea.vmem %s7, %s792
      %p794 = scmp.lt.s32.totalorder %s20, 1
      %s795 = scalar_select %p794, %s20, 1
      %s796 = smul.addr %s795, 2
      %s797 = scalar_lea.vmem %s8, %s796
      // Predicated region
      $region41: #{bottleneck_forward.4} parent=39 // pred_check
        %p798 = pneg %p148
      $region42: #{bottleneck_forward.4} parent=39 // pred_check_branch
        %800 = sbr.rel (%p798) target = $region44
      $region43: #{bottleneck_forward.4} parent=39 // pred_region
        %s801 = smul.u32 8, %s20
      $region44: #{bottleneck_forward.4} parent=39 // pred_fallthru
        _
      // Predicated region
      $region45: #{bottleneck_forward.4} parent=39 // pred_check
        %p802 = pneg %p174
      $region46: #{bottleneck_forward.4} parent=39 // pred_check_branch
        %804 = sbr.rel (%p802) target = $region48
      $region47: #{bottleneck_forward.4} parent=39 // pred_region
        %s805 = smul.u32 8, %s20
      $region48: #{bottleneck_forward.4} parent=39 // pred_fallthru
        _
      // Predicated region
      $region49: #{bottleneck_forward.4} parent=39 // pred_check
        %p806 = pneg %p200
      $region50: #{bottleneck_forward.4} parent=39 // pred_check_branch
        %808 = sbr.rel (%p806) target = $region52
      $region51: #{bottleneck_forward.4} parent=39 // pred_region
        _
      $region52: #{bottleneck_forward.4} parent=39 // pred_fallthru
        _
      // Predicated region
      $region53: #{bottleneck_forward.4} parent=39 // pred_check
        %p809 = pneg %p226
      $region54: #{bottleneck_forward.4} parent=39 // pred_check_branch
        %811 = sbr.rel (%p809) target = $region56
      $region55: #{bottleneck_forward.4} parent=39 // pred_region
        _
      $region56: #{bottleneck_forward.4} parent=39 // pred_fallthru
        _
    $region40: #{bottleneck_forward.4} parent=5 // pred_fallthru
      _
    %p812 = scmp.le.s32.totalorder 2, %s15
    // Predicated region
    $region57: #{bottleneck_forward.4} parent=5 // pred_check
      %p813 = pneg %p812
    $region58: #{bottleneck_forward.4} parent=5 // pred_check_branch
      %815 = sbr.rel (%p813) target = $region60
    $region59: #{bottleneck_forward.4} parent=5 // pred_region
      %s816 = ssub.s32 %s15, 2
      // Predicated region
      $region61: #{bottleneck_forward.4} parent=59 // pred_check
        %p817 = pneg %p154
      $region62: #{bottleneck_forward.4} parent=59 // pred_check_branch
        %819 = sbr.rel (%p817) target = $region64
      $region63: #{bottleneck_forward.4} parent=59 // pred_region
        %s820 = smul.u32 8, %s21
        %p821 = scmp.lt.s32.totalorder %s820, 15
        %s822 = scalar_select %p821, %s820, 15
        %s823 = smul.addr %s822, 4
        %s824 = scalar_lea.vmem %s5, %s823
      $region64: #{bottleneck_forward.4} parent=59 // pred_fallthru
        _
      // Predicated region
      $region65: #{bottleneck_forward.4} parent=59 // pred_check
        %p825 = pneg %p180
      $region66: #{bottleneck_forward.4} parent=59 // pred_check_branch
        %827 = sbr.rel (%p825) target = $region68
      $region67: #{bottleneck_forward.4} parent=59 // pred_region
        %s828 = smul.u32 8, %s21
        %p829 = scmp.lt.s32.totalorder %s828, 15
        %s830 = scalar_select %p829, %s828, 15
        %s831 = smul.addr %s830, 4
        %s832 = scalar_lea.vmem %s6, %s831
      $region68: #{bottleneck_forward.4} parent=59 // pred_fallthru
        _
      // Predicated region
      $region69: #{bottleneck_forward.4} parent=59 // pred_check
        %p833 = pneg %p206
      $region70: #{bottleneck_forward.4} parent=59 // pred_check_branch
        %835 = sbr.rel (%p833) target = $region72
      $region71: #{bottleneck_forward.4} parent=59 // pred_region
        %p836 = scmp.lt.s32.totalorder %s21, 1
        %s837 = scalar_select %p836, %s21, 1
        %s838 = smul.addr %s837, 2
        %s839 = scalar_lea.vmem %s7, %s838
      $region72: #{bottleneck_forward.4} parent=59 // pred_fallthru
        _
      // Predicated region
      $region73: #{bottleneck_forward.4} parent=59 // pred_check
        %p840 = pneg %p232
      $region74: #{bottleneck_forward.4} parent=59 // pred_check_branch
        %842 = sbr.rel (%p840) target = $region76
      $region75: #{bottleneck_forward.4} parent=59 // pred_region
        %p843 = scmp.lt.s32.totalorder %s21, 1
        %s844 = scalar_select %p843, %s21, 1
        %s845 = smul.addr %s844, 2
        %s846 = scalar_lea.vmem %s8, %s845
      $region76: #{bottleneck_forward.4} parent=59 // pred_fallthru
        _
    $region60: #{bottleneck_forward.4} parent=5 // pred_fallthru
      _
  $region6: #{bottleneck_forward.4} parent=0 // loop_footer
    %s19 = sadd.s32 1, %s15
  $region7: #{bottleneck_forward.4} parent=0 // loop_footer_branch
    %14 = sbr.rel target = $region3
  $region8: #{bottleneck_forward.4} parent=0 // loop_exit
    _

// kernel: bottleneck_forward.7
$region0: #{bottleneck_forward.7}
  #allocation0 [shape = 'u32[]', space=smem, size = 0x4, offset = 0x4, fixed_abs, tag = 'smem constant byte address 0x4 - core index']
  #allocation1 [shape = 'u32[144,128]{1,0:T(1,128)}', space=vmem, size = 0x12000, scoped, tag = 'internal scratch']
  %s0 = inlined_call_operand.vmem [shape: bf16[128,128], index: 0, kind: input, shape index: {}]
  %s1 = inlined_call_operand.vmem [shape: bf16[128,128], index: 1, kind: input, shape index: {}]
  %s2 = inlined_call_operand.vmem [shape: f32[1,128], index: 2, kind: input, shape index: {}]
  %s3 = inlined_call_operand.vmem [shape: f32[1,128], index: 3, kind: input, shape index: {}]
  %s4 = inlined_call_operand.vmem [shape: f32[1,128], index: 4, kind: input, shape index: {}]
  %s5 = inlined_call_operand.vmem [shape: f32[1,128], index: 5, kind: input, shape index: {}]
  %s6 = inlined_call_operand.hbm [shape: f32[128,128], index: 6, kind: output, shape index: {}]
  %s7 = sld [smem:[#allocation0]]
  $region57: #{bottleneck_forward.7} parent=0
    _
  %s9 = ssub.s32 1, %s7
  %s10 = scalar_select 0, %s9, %s7
  $region1: #{bottleneck_forward.7} parent=0
    #allocation2 [shape = 'u8[65536]{0}', space=vmem, size = 0x10000, scoped, tag = 'output window, operand 0']
    #allocation3 [shape = 's32[2]{0}', space=sflag, size = 0x8, scoped, tag = 'scoped memory for bottleneck_forward.7']
    %11 = vsyncpa [#allocation3], 0
    %s12 = scalar_lea.sflag [#allocation3], 1
    %13 = vsyncpa %s12, 0
    loop: start=0, step=1, limit=4
    $region2: #{bottleneck_forward.7} parent=1 // loop_pre_header
      _
    $region3: #{bottleneck_forward.7} parent=1 // loop_header
      %s15 = sphi 0, %s19
      %p16 = scmp.ge.s32.totalorder %s15, 4
      %s25 = sphi 0, %s27
      %s28 = sphi 0, %s25
      %s29 = sphi 0, %s28
      %s45 = sphi 0, %s29
      %s51 = sphi 0, %s53
      %s54 = sphi 0, %s51
      %s55 = sphi 0, %s54
      %s71 = sphi 0, %s55
      %s75 = sphi 0, %s75
      %s77 = sphi 0, %s75
      %s78 = sphi 0, %s77
      %s92 = sphi 0, %s78
      %s96 = sphi 0, %s96
      %s98 = sphi 0, %s96
      %s99 = sphi 0, %s98
      %s113 = sphi 0, %s99
      %s117 = sphi 0, %s117
      %s119 = sphi 0, %s117
      %s120 = sphi 0, %s119
      %s134 = sphi 0, %s120
      %s138 = sphi 0, %s138
      %s140 = sphi 0, %s138
      %s141 = sphi 0, %s140
      %s155 = sphi 0, %s141
      %s161 = sphi 0, %s163
      %s164 = sphi 0, %s161
      %s165 = sphi 0, %s164
      %s181 = sphi 0, %s165
    $region4: #{bottleneck_forward.7} parent=1 // loop_header_branch
      %18 = sbr.rel (%p16) target = $region8
    $region5: #{bottleneck_forward.7} parent=1 // loop_body
      %s20 = ssub.s32 %s15, 1
      %s21 = ssub.s32 %s15, 2
      %s22 = sadd.s32 %s15, 1
      %s23 = ssub.s32 %s15, %s22
      %p24 = scmp.eq.s32.totalorder %s23, 0
      %s26 = sadd.s32 %s25, 1
      %s27 = scalar_select %p24, %s25, %s26
      %p30 = pneg %p24
      %p31 = scmp.eq.s32.totalorder %s15, 1
      %p32 = por %p30, %p31
      %p33 = scmp.ne.s32.totalorder %s25, %s28
      %p34 = scmp.eq.s32.totalorder %s15, 0
      %p35 = por %p33, %p34
      %p36 = scmp.ne.s32.totalorder %s25, %s28
      %p37 = scmp.eq.s32.totalorder %s20, 1
      %p38 = por %p36, %p37
      %p39 = scmp.ne.s32.totalorder %s28, %s29
      %p40 = scmp.eq.s32.totalorder %s20, 0
      %p41 = por %p39, %p40
      %p42 = scmp.ne.s32.totalorder %s28, %s29
      %p43 = scmp.eq.s32.totalorder %s21, 1
      %p44 = por %p42, %p43
      %p46 = scmp.ne.s32.totalorder %s29, %s45
      %p47 = scmp.eq.s32.totalorder %s21, 0
      %p48 = por %p46, %p47
      %s49 = ssub.s32 %s15, %s22
      %p50 = scmp.eq.s32.totalorder %s49, 0
      %s52 = sadd.s32 %s51, 1
      %s53 = scalar_select %p50, %s51, %s52
      %p56 = pneg %p50
      %p57 = scmp.eq.s32.totalorder %s15, 1
      %p58 = por %p56, %p57
      %p59 = scmp.ne.s32.totalorder %s51, %s54
      %p60 = scmp.eq.s32.totalorder %s15, 0
      %p61 = por %p59, %p60
      %p62 = scmp.ne.s32.totalorder %s51, %s54
      %p63 = scmp.eq.s32.totalorder %s20, 1
      %p64 = por %p62, %p63
      %p65 = scmp.ne.s32.totalorder %s54, %s55
      %p66 = scmp.eq.s32.totalorder %s20, 0
      %p67 = por %p65, %p66
      %p68 = scmp.ne.s32.totalorder %s54, %s55
      %p69 = scmp.eq.s32.totalorder %s21, 1
      %p70 = por %p68, %p69
      %p72 = scmp.ne.s32.totalorder %s55, %s71
      %p73 = scmp.eq.s32.totalorder %s21, 0
      %p74 = por %p72, %p73
      %s76 = sadd.s32 %s75, 1
      %p79 = scmp.eq.s32.totalorder %s15, 1
      %p80 = scmp.ne.s32.totalorder %s75, %s77
      %p81 = scmp.eq.s32.totalorder %s15, 0
      %p82 = por %p80, %p81
      %p83 = scmp.ne.s32.totalorder %s75, %s77
      %p84 = scmp.eq.s32.totalorder %s20, 1
      %p85 = por %p83, %p84
      %p86 = scmp.ne.s32.totalorder %s77, %s78
      %p87 = scmp.eq.s32.totalorder %s20, 0
      %p88 = por %p86, %p87
      %p89 = scmp.ne.s32.totalorder %s77, %s78
      %p90 = scmp.eq.s32.totalorder %s21, 1
      %p91 = por %p89, %p90
      %p93 = scmp.ne.s32.totalorder %s78, %s92
      %p94 = scmp.eq.s32.totalorder %s21, 0
      %p95 = por %p93, %p94
      %s97 = sadd.s32 %s96, 1
      %p100 = scmp.eq.s32.totalorder %s15, 1
      %p101 = scmp.ne.s32.totalorder %s96, %s98
      %p102 = scmp.eq.s32.totalorder %s15, 0
      %p103 = por %p101, %p102
      %p104 = scmp.ne.s32.totalorder %s96, %s98
      %p105 = scmp.eq.s32.totalorder %s20, 1
      %p106 = por %p104, %p105
      %p107 = scmp.ne.s32.totalorder %s98, %s99
      %p108 = scmp.eq.s32.totalorder %s20, 0
      %p109 = por %p107, %p108
      %p110 = scmp.ne.s32.totalorder %s98, %s99
      %p111 = scmp.eq.s32.totalorder %s21, 1
      %p112 = por %p110, %p111
      %p114 = scmp.ne.s32.totalorder %s99, %s113
      %p115 = scmp.eq.s32.totalorder %s21, 0
      %p116 = por %p114, %p115
      %s118 = sadd.s32 %s117, 1
      %p121 = scmp.eq.s32.totalorder %s15, 1
      %p122 = scmp.ne.s32.totalorder %s117, %s119
      %p123 = scmp.eq.s32.totalorder %s15, 0
      %p124 = por %p122, %p123
      %p125 = scmp.ne.s32.totalorder %s117, %s119
      %p126 = scmp.eq.s32.totalorder %s20, 1
      %p127 = por %p125, %p126
      %p128 = scmp.ne.s32.totalorder %s119, %s120
      %p129 = scmp.eq.s32.totalorder %s20, 0
      %p130 = por %p128, %p129
      %p131 = scmp.ne.s32.totalorder %s119, %s120
      %p132 = scmp.eq.s32.totalorder %s21, 1
      %p133 = por %p131, %p132
      %p135 = scmp.ne.s32.totalorder %s120, %s134
      %p136 = scmp.eq.s32.totalorder %s21, 0
      %p137 = por %p135, %p136
      %s139 = sadd.s32 %s138, 1
      %p142 = scmp.eq.s32.totalorder %s15, 1
      %p143 = scmp.ne.s32.totalorder %s138, %s140
      %p144 = scmp.eq.s32.totalorder %s15, 0
      %p145 = por %p143, %p144
      %p146 = scmp.ne.s32.totalorder %s138, %s140
      %p147 = scmp.eq.s32.totalorder %s20, 1
      %p148 = por %p146, %p147
      %p149 = scmp.ne.s32.totalorder %s140, %s141
      %p150 = scmp.eq.s32.totalorder %s20, 0
      %p151 = por %p149, %p150
      %p152 = scmp.ne.s32.totalorder %s140, %s141
      %p153 = scmp.eq.s32.totalorder %s21, 1
      %p154 = por %p152, %p153
      %p156 = scmp.ne.s32.totalorder %s141, %s155
      %p157 = scmp.eq.s32.totalorder %s21, 0
      %p158 = por %p156, %p157
      %s159 = ssub.s32 %s15, %s22
      %p160 = scmp.eq.s32.totalorder %s159, 0
      %s162 = sadd.s32 %s161, 1
      %s163 = scalar_select %p160, %s161, %s162
      %p166 = pneg %p160
      %p167 = scmp.eq.s32.totalorder %s15, 1
      %p168 = por %p166, %p167
      %p169 = scmp.ne.s32.totalorder %s161, %s164
      %p170 = scmp.eq.s32.totalorder %s15, 0
      %p171 = por %p169, %p170
      %p172 = scmp.ne.s32.totalorder %s161, %s164
      %p173 = scmp.eq.s32.totalorder %s20, 1
      %p174 = por %p172, %p173
      %p175 = scmp.ne.s32.totalorder %s164, %s165
      %p176 = scmp.eq.s32.totalorder %s20, 0
      %p177 = por %p175, %p176
      %p178 = scmp.ne.s32.totalorder %s164, %s165
      %p179 = scmp.eq.s32.totalorder %s21, 1
      %p180 = por %p178, %p179
      %p182 = scmp.ne.s32.totalorder %s165, %s181
      %p183 = scmp.eq.s32.totalorder %s21, 0
      %p184 = por %p182, %p183
      %p185 = scmp.le.s32.totalorder 1, %s15
      %p186 = scmp.lt.s32.totalorder %s15, 3
      %p187 = pnand %p185, %p186
      %p188 = pneg %p187
      // Predicated region
      $region9: #{bottleneck_forward.7} parent=5 // pred_check
        _
      $region10: #{bottleneck_forward.7} parent=5 // pred_check_branch
        %190 = sbr.rel (%p187) target = $region12
      $region11: #{bottleneck_forward.7} parent=5 // pred_region
        %s191 = ssub.s32 %s15, 1
        // Predicated region
        $region13: #{bottleneck_forward.7} parent=11 // pred_check
          %p192 = pneg %p88
        $region14: #{bottleneck_forward.7} parent=11 // pred_check_branch
          %194 = sbr.rel (%p192) target = $region16
        $region15: #{bottleneck_forward.7} parent=11 // pred_region
          _
        $region16: #{bottleneck_forward.7} parent=11 // pred_fallthru
          _
        // Predicated region
        $region17: #{bottleneck_forward.7} parent=11 // pred_check
          %p195 = pneg %p109
        $region18: #{bottleneck_forward.7} parent=11 // pred_check_branch
          %197 = sbr.rel (%p195) target = $region20
        $region19: #{bottleneck_forward.7} parent=11 // pred_region
          _
        $region20: #{bottleneck_forward.7} parent=11 // pred_fallthru
          _
        // Predicated region
        $region21: #{bottleneck_forward.7} parent=11 // pred_check
          %p198 = pneg %p130
        $region22: #{bottleneck_forward.7} parent=11 // pred_check_branch
          %200 = sbr.rel (%p198) target = $region24
        $region23: #{bottleneck_forward.7} parent=11 // pred_region
          _
        $region24: #{bottleneck_forward.7} parent=11 // pred_fallthru
          _
        // Predicated region
        $region25: #{bottleneck_forward.7} parent=11 // pred_check
          %p201 = pneg %p151
        $region26: #{bottleneck_forward.7} parent=11 // pred_check_branch
          %203 = sbr.rel (%p201) target = $region28
        $region27: #{bottleneck_forward.7} parent=11 // pred_region
          _
        $region28: #{bottleneck_forward.7} parent=11 // pred_fallthru
          _
      $region12: #{bottleneck_forward.7} parent=5 // pred_fallthru
        _
      %p204 = scmp.lt.s32.totalorder %s15, 2
      // Predicated region
      $region29: #{bottleneck_forward.7} parent=5 // pred_check
        %p205 = pneg %p204
      $region30: #{bottleneck_forward.7} parent=5 // pred_check_branch
        %207 = sbr.rel (%p205) target = $region32
      $region31: #{bottleneck_forward.7} parent=5 // pred_region
        // Predicated region
        $region33: #{bottleneck_forward.7} parent=31 // pred_check
          %p208 = pneg %p35
        $region34: #{bottleneck_forward.7} parent=31 // pred_check_branch
          %210 = sbr.rel (%p208) target = $region36
        $region35: #{bottleneck_forward.7} parent=31 // pred_region
          %s211 = smul.u32 8, %s15
          %p212 = scmp.lt.s32.totalorder %s211, 15
          %s213 = scalar_select %p212, %s211, 15
          %s214 = smul.addr %s213, 4
          %s215 = scalar_lea.vmem %s0, %s214
          %s216 = smul.u32 8, %s15
        $region36: #{bottleneck_forward.7} parent=31 // pred_fallthru
          _
        // Predicated region
        $region37: #{bottleneck_forward.7} parent=31 // pred_check
          %p217 = pneg %p61
        $region38: #{bottleneck_forward.7} parent=31 // pred_check_branch
          %219 = sbr.rel (%p217) target = $region40
        $region39: #{bottleneck_forward.7} parent=31 // pred_region
          %s220 = smul.u32 8, %s15
          %p221 = scmp.lt.s32.totalorder %s220, 15
          %s222 = scalar_select %p221, %s220, 15
          %s223 = smul.addr %s222, 4
          %s224 = scalar_lea.vmem %s1, %s223
          %s225 = smul.u32 8, %s15
        $region40: #{bottleneck_forward.7} parent=31 // pred_fallthru
          _
      $region32: #{bottleneck_forward.7} parent=5 // pred_fallthru
        _
      %p226 = scmp.le.s32.totalorder 1, %s15
      %p227 = scmp.lt.s32.totalorder %s15, 3
      %p228 = pnand %p226, %p227
      %p229 = pneg %p228
      // Predicated region
      $region41: #{bottleneck_forward.7} parent=5 // pred_check
        _
      $region42: #{bottleneck_forward.7} parent=5 // pred_check_branch
        %231 = sbr.rel (%p228) target = $region44
      $region43: #{bottleneck_forward.7} parent=5 // pred_region
        %s232 = ssub.s32 %s15, 1
        %s233 = smul.u32 8, %s20
        %p234 = scmp.lt.s32.totalorder %s233, 15
        %s235 = scalar_select %p234, %s233, 15
        %s236 = smul.addr %s235, 4
        %s237 = scalar_lea.vmem %s0, %s236
        %p238 = pneg %p41
        %p239 = pneg %p38
        %s240 = smul.u32 8, %s20
        %p241 = scmp.lt.s32.totalorder %s240, 15
        %s242 = scalar_select %p241, %s240, 15
        %s243 = smul.addr %s242, 4
        %s244 = scalar_lea.vmem %s1, %s243
        %p245 = pneg %p67
        %p246 = pneg %p64
        %p247 = pneg %p88
        %p248 = pneg %p85
        %p249 = pneg %p109
        %p250 = pneg %p106
        %p251 = pneg %p130
        %p252 = pneg %p127
        %p253 = pneg %p151
        %p254 = pneg %p148
        %p255 = pneg %p177
        %p256 = pneg %p174
        %s257 = sand.u32 %s164, 1
        %s258 = scalar_lea.sflag [#allocation3], %s257
        %s259 = sand.u32 %s164, 1
        %s260 = smul.addr %s259, 64
        %s261 = scalar_lea.vmem [#allocation2], %s260
        %s262 = smul.u32 8, %s20
        %p263 = scmp.lt.s32.totalorder %s262, 15
        %s264 = scalar_select %p263, %s262, 15
        %s265 = smul.addr %s264, 4
        %s266 = scalar_lea.vmem %s0, %s265
        %s267 = smul.u32 8, %s20
        %s268 = smul.u32 8, %s20
        %p269 = scmp.lt.s32.totalorder %s268, 15
        %s270 = scalar_select %p269, %s268, 15
        %s271 = smul.addr %s270, 4
        %s272 = scalar_lea.vmem %s1, %s271
        %s273 = smul.u32 8, %s20
        %s274 = smul.u32 8, %s20
        %v275 = vld [vmem:[%s266] sm:$0xf]
        %v276 = vld [vmem:[%s266 + $0x4] sm:$0xf]
        %v277 = vld [vmem:[%s266 + $0x8] sm:$0xf]
        %v278 = vld [vmem:[%s266 + $0xc] sm:$0xf]
        %v279 = vld [vmem:[%s266 + $0x10] sm:$0xf]
        %v280 = vld [vmem:[%s266 + $0x14] sm:$0xf]
        %v281 = vld [vmem:[%s266 + $0x18] sm:$0xf]
        %v282 = vld [vmem:[%s266 + $0x1c] sm:$0xf]
        %v283 = vunpack.c.l.bf16 %v275
        %v284 = vunpack.c.l.bf16 %v276
        %v285 = vunpack.c.l.bf16 %v277
        %v286 = vunpack.c.l.bf16 %v278
        %v287 = vunpack.c.l.bf16 %v279
        %v288 = vunpack.c.l.bf16 %v280
        %v289 = vunpack.c.l.bf16 %v281
        %v290 = vunpack.c.l.bf16 %v282
        %v291 = vld [vmem:[%s2] sm:$0x1]
        %v293 = vlaneseq
        %v294 = vshrl.u32 %v293, 7
        %v295 = vsub.s32 0, %v294
        %v296 = vrot.slane %v291, %v295
        %v298 = vmul.f32 %v283, %v296
        %v299 = vmul.f32 %v284, %v296
        %v300 = vmul.f32 %v285, %v296
        %v301 = vmul.f32 %v286, %v296
        %v302 = vmul.f32 %v287, %v296
        %v303 = vmul.f32 %v288, %v296
        %v304 = vmul.f32 %v289, %v296
        %v305 = vmul.f32 %v290, %v296
        %v306 = vld [vmem:[%s3] sm:$0x1]
        %v308 = vlaneseq
        %v309 = vshrl.u32 %v308, 7
        %v310 = vsub.s32 0, %v309
        %v311 = vrot.slane %v306, %v310
        %v313 = vadd.f32 %v298, %v311
        %v314 = vadd.f32 %v299, %v311
        %v315 = vadd.f32 %v300, %v311
        %v316 = vadd.f32 %v301, %v311
        %v317 = vadd.f32 %v302, %v311
        %v318 = vadd.f32 %v303, %v311
        %v319 = vadd.f32 %v304, %v311
        %v320 = vadd.f32 %v305, %v311
        %v321 = vld [vmem:[%s272] sm:$0xf]
        %v322 = vld [vmem:[%s272 + $0x4] sm:$0xf]
        %v323 = vld [vmem:[%s272 + $0x8] sm:$0xf]
        %v324 = vld [vmem:[%s272 + $0xc] sm:$0xf]
        %v325 = vld [vmem:[%s272 + $0x10] sm:$0xf]
        %v326 = vld [vmem:[%s272 + $0x14] sm:$0xf]
        %v327 = vld [vmem:[%s272 + $0x18] sm:$0xf]
        %v328 = vld [vmem:[%s272 + $0x1c] sm:$0xf]
        %v329 = vunpack.c.l.bf16 %v321
        %v330 = vunpack.c.l.bf16 %v322
        %v331 = vunpack.c.l.bf16 %v323
        %v332 = vunpack.c.l.bf16 %v324
        %v333 = vunpack.c.l.bf16 %v325
        %v334 = vunpack.c.l.bf16 %v326
        %v335 = vunpack.c.l.bf16 %v327
        %v336 = vunpack.c.l.bf16 %v328
        %v337 = vld [vmem:[%s4] sm:$0x1]
        %v339 = vlaneseq
        %v340 = vshrl.u32 %v339, 7
        %v341 = vsub.s32 0, %v340
        %v342 = vrot.slane %v337, %v341
        %v344 = vmul.f32 %v329, %v342
        %v345 = vmul.f32 %v330, %v342
        %v346 = vmul.f32 %v331, %v342
        %v347 = vmul.f32 %v332, %v342
        %v348 = vmul.f32 %v333, %v342
        %v349 = vmul.f32 %v334, %v342
        %v350 = vmul.f32 %v335, %v342
        %v351 = vmul.f32 %v336, %v342
        %v352 = vadd.f32 %v313, %v344
        %v353 = vadd.f32 %v314, %v345
        %v354 = vadd.f32 %v315, %v346
        %v355 = vadd.f32 %v316, %v347
        %v356 = vadd.f32 %v317, %v348
        %v357 = vadd.f32 %v318, %v349
        %v358 = vadd.f32 %v319, %v350
        %v359 = vadd.f32 %v320, %v351
        %v360 = vld [vmem:[%s5] sm:$0x1]
        %v362 = vlaneseq
        %v363 = vshrl.u32 %v362, 7
        %v364 = vsub.s32 0, %v363
        %v365 = vrot.slane %v360, %v364
        %v367 = vadd.f32 %v352, %v365
        %v368 = vadd.f32 %v353, %v365
        %v369 = vadd.f32 %v354, %v365
        %v370 = vadd.f32 %v355, %v365
        %v371 = vadd.f32 %v356, %v365
        %v372 = vadd.f32 %v357, %v365
        %v373 = vadd.f32 %v358, %v365
        %v374 = vadd.f32 %v359, %v365
        %v375 = vmax.f32 %v367, 0.0
        %v376 = vmax.f32 %v368, 0.0
        %v377 = vmax.f32 %v369, 0.0
        %v378 = vmax.f32 %v370, 0.0
        %v379 = vmax.f32 %v371, 0.0
        %v380 = vmax.f32 %v372, 0.0
        %v381 = vmax.f32 %v373, 0.0
        %v382 = vmax.f32 %v374, 0.0
        %383 = vst [vmem:[%s261] sm:$0xff] %v375
        %384 = vst [vmem:[%s261 + $0x8] sm:$0xff] %v376
        %385 = vst [vmem:[%s261 + $0x10] sm:$0xff] %v377
        %386 = vst [vmem:[%s261 + $0x18] sm:$0xff] %v378
        %387 = vst [vmem:[%s261 + $0x20] sm:$0xff] %v379
        %388 = vst [vmem:[%s261 + $0x28] sm:$0xff] %v380
        %389 = vst [vmem:[%s261 + $0x30] sm:$0xff] %v381
        %390 = vst [vmem:[%s261 + $0x38] sm:$0xff] %v382
        %s391 = sand.u32 %s164, 1
        %s392 = scalar_lea.sflag [#allocation3], %s391
        %s393 = sand.u32 %s164, 1
        %s394 = smul.addr %s393, 64
        %s395 = scalar_lea.vmem [#allocation2], %s394
        // Predicated region
        $region45: #{bottleneck_forward.7} parent=43 // pred_check
          %p396 = pneg %p174
        $region46: #{bottleneck_forward.7} parent=43 // pred_check_branch
          %398 = sbr.rel (%p396) target = $region48
        $region47: #{bottleneck_forward.7} parent=43 // pred_region
          %s399 = smul.u32 8, %s20
          %s401 = ssub.s32 1024, 1024
          %402 = vsyncadd %s392, %s401
          %s403 = smul.addr %s399, 128
          %s404 = scalar_lea.hbm %s6, %s403
          %s405 = sshll.u32 %s395, 4
          %s406 = int_to_ptr.vmem [resolvable:$true] %s405
          %411 = dma.vmem_to_hbm [thread:$0]  %s406, 1024, %s404, %s392, 128, 128, 8
        $region48: #{bottleneck_forward.7} parent=43 // pred_fallthru
          _
      $region44: #{bottleneck_forward.7} parent=5 // pred_fallthru
        _
      %p412 = scmp.le.s32.totalorder 2, %s15
      // Predicated region
      $region49: #{bottleneck_forward.7} parent=5 // pred_check
        %p413 = pneg %p412
      $region50: #{bottleneck_forward.7} parent=5 // pred_check_branch
        %415 = sbr.rel (%p413) target = $region52
      $region51: #{bottleneck_forward.7} parent=5 // pred_region
        %s416 = ssub.s32 %s15, 2
        // Predicated region
        $region53: #{bottleneck_forward.7} parent=51 // pred_check
          %p417 = pneg %p180
        $region54: #{bottleneck_forward.7} parent=51 // pred_check_branch
          %419 = sbr.rel (%p417) target = $region56
        $region55: #{bottleneck_forward.7} parent=51 // pred_region
          %s420 = sand.u32 %s165, 1
          %s421 = scalar_lea.sflag [#allocation3], %s420
          %s422 = sand.u32 %s165, 1
          %s423 = smul.addr %s422, 64
          %s424 = scalar_lea.vmem [#allocation2], %s423
          %425 = dma.done %s421, 1024
        $region56: #{bottleneck_forward.7} parent=51 // pred_fallthru
          _
      $region52: #{bottleneck_forward.7} parent=5 // pred_fallthru
        _
    $region6: #{bottleneck_forward.7} parent=1 // loop_footer
      %s19 = sadd.s32 1, %s15
    $region7: #{bottleneck_forward.7} parent=1 // loop_footer_branch
      %14 = sbr.rel target = $region3
    $region8: #{bottleneck_forward.7} parent=1 // loop_exit
      _
    %426 = vsyncpa [#allocation3], 1
    %s427 = scalar_lea.sflag [#allocation3], 1
    %428 = vsyncpa %s427, 1

// kernel: bottleneck_forward.6
$region0: #{bottleneck_forward.6}
  #allocation0 [shape = 'u32[]', space=smem, size = 0x4, offset = 0x4, fixed_abs, tag = 'smem constant byte address 0x4 - core index']
  #allocation1 [shape = 'u32[144,128]{1,0:T(1,128)}', space=vmem, size = 0x12000, scoped, tag = 'internal scratch']
  %s0 = inlined_call_operand.vmem [shape: bf16[128,64], index: 0, kind: input, shape index: {}]
  %s1 = inlined_call_operand.vmem [shape: f32[1,64], index: 1, kind: input, shape index: {}]
  %s2 = inlined_call_operand.vmem [shape: f32[1,64], index: 2, kind: input, shape index: {}]
  %s3 = inlined_call_operand.vmem [shape: bf16[64,128], index: 3, kind: input, shape index: {}]
  %s4 = inlined_call_operand.vmem [shape: f32[1,128], index: 4, kind: input, shape index: {}]
  %s5 = inlined_call_operand.vmem [shape: bf16[128,128], index: 5, kind: output, shape index: {0}]
  %s6 = inlined_call_operand.vmem [shape: f32[2,2,128], index: 6, kind: output, shape index: {1}]
  %7 = xla_tuple %s5, %s6
  %s8 = sld [smem:[#allocation0]]
  $region61: #{bottleneck_forward.6} parent=0
    _
  %s10 = ssub.s32 1, %s8
  %s11 = scalar_select 0, %s10, %s8
  loop: start=0, step=1, limit=4
  $region2: #{bottleneck_forward.6} parent=0 // loop_pre_header
    _
  $region3: #{bottleneck_forward.6} parent=0 // loop_header
    %s13 = sphi 0, %s17
    %p14 = scmp.ge.s32.totalorder %s13, 4
    %s23 = sphi 0, %s25
    %s26 = sphi 0, %s23
    %s27 = sphi 0, %s26
    %s43 = sphi 0, %s27
    %s47 = sphi 0, %s47
    %s49 = sphi 0, %s47
    %s50 = sphi 0, %s49
    %s64 = sphi 0, %s50
    %s68 = sphi 0, %s68
    %s70 = sphi 0, %s68
    %s71 = sphi 0, %s70
    %s85 = sphi 0, %s71
    %s89 = sphi 0, %s89
    %s91 = sphi 0, %s89
    %s92 = sphi 0, %s91
    %s106 = sphi 0, %s92
    %s110 = sphi 0, %s110
    %s112 = sphi 0, %s110
    %s113 = sphi 0, %s112
    %s127 = sphi 0, %s113
    %s133 = sphi 0, %s135
    %s136 = sphi 0, %s133
    %s137 = sphi 0, %s136
    %s153 = sphi 0, %s137
    %s159 = sphi 0, %s161
    %s162 = sphi 0, %s159
    %s163 = sphi 0, %s162
    %s179 = sphi 0, %s163
  $region4: #{bottleneck_forward.6} parent=0 // loop_header_branch
    %16 = sbr.rel (%p14) target = $region8
  $region5: #{bottleneck_forward.6} parent=0 // loop_body
    %s18 = ssub.s32 %s13, 1
    %s19 = ssub.s32 %s13, 2
    %s20 = sadd.s32 %s13, 1
    %s21 = ssub.s32 %s13, %s20
    %p22 = scmp.eq.s32.totalorder %s21, 0
    %s24 = sadd.s32 %s23, 1
    %s25 = scalar_select %p22, %s23, %s24
    %p28 = pneg %p22
    %p29 = scmp.eq.s32.totalorder %s13, 1
    %p30 = por %p28, %p29
    %p31 = scmp.ne.s32.totalorder %s23, %s26
    %p32 = scmp.eq.s32.totalorder %s13, 0
    %p33 = por %p31, %p32
    %p34 = scmp.ne.s32.totalorder %s23, %s26
    %p35 = scmp.eq.s32.totalorder %s18, 1
    %p36 = por %p34, %p35
    %p37 = scmp.ne.s32.totalorder %s26, %s27
    %p38 = scmp.eq.s32.totalorder %s18, 0
    %p39 = por %p37, %p38
    %p40 = scmp.ne.s32.totalorder %s26, %s27
    %p41 = scmp.eq.s32.totalorder %s19, 1
    %p42 = por %p40, %p41
    %p44 = scmp.ne.s32.totalorder %s27, %s43
    %p45 = scmp.eq.s32.totalorder %s19, 0
    %p46 = por %p44, %p45
    %s48 = sadd.s32 %s47, 1
    %p51 = scmp.eq.s32.totalorder %s13, 1
    %p52 = scmp.ne.s32.totalorder %s47, %s49
    %p53 = scmp.eq.s32.totalorder %s13, 0
    %p54 = por %p52, %p53
    %p55 = scmp.ne.s32.totalorder %s47, %s49
    %p56 = scmp.eq.s32.totalorder %s18, 1
    %p57 = por %p55, %p56
    %p58 = scmp.ne.s32.totalorder %s49, %s50
    %p59 = scmp.eq.s32.totalorder %s18, 0
    %p60 = por %p58, %p59
    %p61 = scmp.ne.s32.totalorder %s49, %s50
    %p62 = scmp.eq.s32.totalorder %s19, 1
    %p63 = por %p61, %p62
    %p65 = scmp.ne.s32.totalorder %s50, %s64
    %p66 = scmp.eq.s32.totalorder %s19, 0
    %p67 = por %p65, %p66
    %s69 = sadd.s32 %s68, 1
    %p72 = scmp.eq.s32.totalorder %s13, 1
    %p73 = scmp.ne.s32.totalorder %s68, %s70
    %p74 = scmp.eq.s32.totalorder %s13, 0
    %p75 = por %p73, %p74
    %p76 = scmp.ne.s32.totalorder %s68, %s70
    %p77 = scmp.eq.s32.totalorder %s18, 1
    %p78 = por %p76, %p77
    %p79 = scmp.ne.s32.totalorder %s70, %s71
    %p80 = scmp.eq.s32.totalorder %s18, 0
    %p81 = por %p79, %p80
    %p82 = scmp.ne.s32.totalorder %s70, %s71
    %p83 = scmp.eq.s32.totalorder %s19, 1
    %p84 = por %p82, %p83
    %p86 = scmp.ne.s32.totalorder %s71, %s85
    %p87 = scmp.eq.s32.totalorder %s19, 0
    %p88 = por %p86, %p87
    %s90 = sadd.s32 %s89, 1
    %p93 = scmp.eq.s32.totalorder %s13, 1
    %p94 = scmp.ne.s32.totalorder %s89, %s91
    %p95 = scmp.eq.s32.totalorder %s13, 0
    %p96 = por %p94, %p95
    %p97 = scmp.ne.s32.totalorder %s89, %s91
    %p98 = scmp.eq.s32.totalorder %s18, 1
    %p99 = por %p97, %p98
    %p100 = scmp.ne.s32.totalorder %s91, %s92
    %p101 = scmp.eq.s32.totalorder %s18, 0
    %p102 = por %p100, %p101
    %p103 = scmp.ne.s32.totalorder %s91, %s92
    %p104 = scmp.eq.s32.totalorder %s19, 1
    %p105 = por %p103, %p104
    %p107 = scmp.ne.s32.totalorder %s92, %s106
    %p108 = scmp.eq.s32.totalorder %s19, 0
    %p109 = por %p107, %p108
    %s111 = sadd.s32 %s110, 1
    %p114 = scmp.eq.s32.totalorder %s13, 1
    %p115 = scmp.ne.s32.totalorder %s110, %s112
    %p116 = scmp.eq.s32.totalorder %s13, 0
    %p117 = por %p115, %p116
    %p118 = scmp.ne.s32.totalorder %s110, %s112
    %p119 = scmp.eq.s32.totalorder %s18, 1
    %p120 = por %p118, %p119
    %p121 = scmp.ne.s32.totalorder %s112, %s113
    %p122 = scmp.eq.s32.totalorder %s18, 0
    %p123 = por %p121, %p122
    %p124 = scmp.ne.s32.totalorder %s112, %s113
    %p125 = scmp.eq.s32.totalorder %s19, 1
    %p126 = por %p124, %p125
    %p128 = scmp.ne.s32.totalorder %s113, %s127
    %p129 = scmp.eq.s32.totalorder %s19, 0
    %p130 = por %p128, %p129
    %s131 = ssub.s32 %s13, %s20
    %p132 = scmp.eq.s32.totalorder %s131, 0
    %s134 = sadd.s32 %s133, 1
    %s135 = scalar_select %p132, %s133, %s134
    %p138 = pneg %p132
    %p139 = scmp.eq.s32.totalorder %s13, 1
    %p140 = por %p138, %p139
    %p141 = scmp.ne.s32.totalorder %s133, %s136
    %p142 = scmp.eq.s32.totalorder %s13, 0
    %p143 = por %p141, %p142
    %p144 = scmp.ne.s32.totalorder %s133, %s136
    %p145 = scmp.eq.s32.totalorder %s18, 1
    %p146 = por %p144, %p145
    %p147 = scmp.ne.s32.totalorder %s136, %s137
    %p148 = scmp.eq.s32.totalorder %s18, 0
    %p149 = por %p147, %p148
    %p150 = scmp.ne.s32.totalorder %s136, %s137
    %p151 = scmp.eq.s32.totalorder %s19, 1
    %p152 = por %p150, %p151
    %p154 = scmp.ne.s32.totalorder %s137, %s153
    %p155 = scmp.eq.s32.totalorder %s19, 0
    %p156 = por %p154, %p155
    %s157 = ssub.s32 %s13, %s20
    %p158 = scmp.eq.s32.totalorder %s157, 0
    %s160 = sadd.s32 %s159, 1
    %s161 = scalar_select %p158, %s159, %s160
    %p164 = pneg %p158
    %p165 = scmp.eq.s32.totalorder %s13, 1
    %p166 = por %p164, %p165
    %p167 = scmp.ne.s32.totalorder %s159, %s162
    %p168 = scmp.eq.s32.totalorder %s13, 0
    %p169 = por %p167, %p168
    %p170 = scmp.ne.s32.totalorder %s159, %s162
    %p171 = scmp.eq.s32.totalorder %s18, 1
    %p172 = por %p170, %p171
    %p173 = scmp.ne.s32.totalorder %s162, %s163
    %p174 = scmp.eq.s32.totalorder %s18, 0
    %p175 = por %p173, %p174
    %p176 = scmp.ne.s32.totalorder %s162, %s163
    %p177 = scmp.eq.s32.totalorder %s19, 1
    %p178 = por %p176, %p177
    %p180 = scmp.ne.s32.totalorder %s163, %s179
    %p181 = scmp.eq.s32.totalorder %s19, 0
    %p182 = por %p180, %p181
    %p183 = scmp.le.s32.totalorder 1, %s13
    %p184 = scmp.lt.s32.totalorder %s13, 3
    %p185 = pnand %p183, %p184
    %p186 = pneg %p185
    // Predicated region
    $region9: #{bottleneck_forward.6} parent=5 // pred_check
      _
    $region10: #{bottleneck_forward.6} parent=5 // pred_check_branch
      %188 = sbr.rel (%p185) target = $region12
    $region11: #{bottleneck_forward.6} parent=5 // pred_region
      %s189 = ssub.s32 %s13, 1
      // Predicated region
      $region13: #{bottleneck_forward.6} parent=11 // pred_check
        %p190 = pneg %p60
      $region14: #{bottleneck_forward.6} parent=11 // pred_check_branch
        %192 = sbr.rel (%p190) target = $region16
      $region15: #{bottleneck_forward.6} parent=11 // pred_region
        _
      $region16: #{bottleneck_forward.6} parent=11 // pred_fallthru
        _
      // Predicated region
      $region17: #{bottleneck_forward.6} parent=11 // pred_check
        %p193 = pneg %p81
      $region18: #{bottleneck_forward.6} parent=11 // pred_check_branch
        %195 = sbr.rel (%p193) target = $region20
      $region19: #{bottleneck_forward.6} parent=11 // pred_region
        _
      $region20: #{bottleneck_forward.6} parent=11 // pred_fallthru
        _
      // Predicated region
      $region21: #{bottleneck_forward.6} parent=11 // pred_check
        %p196 = pneg %p102
      $region22: #{bottleneck_forward.6} parent=11 // pred_check_branch
        %198 = sbr.rel (%p196) target = $region24
      $region23: #{bottleneck_forward.6} parent=11 // pred_region
        _
      $region24: #{bottleneck_forward.6} parent=11 // pred_fallthru
        _
      // Predicated region
      $region25: #{bottleneck_forward.6} parent=11 // pred_check
        %p199 = pneg %p123
      $region26: #{bottleneck_forward.6} parent=11 // pred_check_branch
        %201 = sbr.rel (%p199) target = $region28
      $region27: #{bottleneck_forward.6} parent=11 // pred_region
        _
      $region28: #{bottleneck_forward.6} parent=11 // pred_fallthru
        _
    $region12: #{bottleneck_forward.6} parent=5 // pred_fallthru
      _
    %p202 = scmp.lt.s32.totalorder %s13, 2
    // Predicated region
    $region29: #{bottleneck_forward.6} parent=5 // pred_check
      %p203 = pneg %p202
    $region30: #{bottleneck_forward.6} parent=5 // pred_check_branch
      %205 = sbr.rel (%p203) target = $region32
    $region31: #{bottleneck_forward.6} parent=5 // pred_region
      // Predicated region
      $region33: #{bottleneck_forward.6} parent=31 // pred_check
        %p206 = pneg %p33
      $region34: #{bottleneck_forward.6} parent=31 // pred_check_branch
        %208 = sbr.rel (%p206) target = $region36
      $region35: #{bottleneck_forward.6} parent=31 // pred_region
        %s209 = smul.u32 8, %s13
        %p210 = scmp.lt.s32.totalorder %s209, 15
        %s211 = scalar_select %p210, %s209, 15
        %s212 = smul.addr %s211, 4
        %s213 = scalar_lea.vmem %s0, %s212
        %s214 = smul.u32 8, %s13
      $region36: #{bottleneck_forward.6} parent=31 // pred_fallthru
        _
    $region32: #{bottleneck_forward.6} parent=5 // pred_fallthru
      _
    %p215 = scmp.le.s32.totalorder 1, %s13
    %p216 = scmp.lt.s32.totalorder %s13, 3
    %p217 = pnand %p215, %p216
    %p218 = pneg %p217
    // Predicated region
    $region37: #{bottleneck_forward.6} parent=5 // pred_check
      _
    $region38: #{bottleneck_forward.6} parent=5 // pred_check_branch
      %220 = sbr.rel (%p217) target = $region40
    $region39: #{bottleneck_forward.6} parent=5 // pred_region
      %s221 = ssub.s32 %s13, 1
      %s222 = smul.u32 8, %s18
      %p223 = scmp.lt.s32.totalorder %s222, 15
      %s224 = scalar_select %p223, %s222, 15
      %s225 = smul.addr %s224, 4
      %s226 = scalar_lea.vmem %s0, %s225
      %p227 = pneg %p39
      %p228 = pneg %p36
      %p229 = pneg %p60
      %p230 = pneg %p57
      %p231 = pneg %p81
      %p232 = pneg %p78
      %p233 = pneg %p102
      %p234 = pneg %p99
      %p235 = pneg %p123
      %p236 = pneg %p120
      %p237 = pneg %p149
      %p238 = pneg %p146
      %s239 = smul.u32 8, %s18
      %p240 = scmp.lt.s32.totalorder %s239, 15
      %s241 = scalar_select %p240, %s239, 15
      %s242 = smul.addr %s241, 4
      %s243 = scalar_lea.vmem %s5, %s242
      %p244 = pneg %p175
      %p245 = pneg %p172
      %p246 = scmp.lt.s32.totalorder %s18, 1
      %s247 = scalar_select %p246, %s18, 1
      %s248 = smul.addr %s247, 2
      %s249 = scalar_lea.vmem %s6, %s248
      %s250 = smul.u32 8, %s18
      %p251 = scmp.lt.s32.totalorder %s250, 15
      %s252 = scalar_select %p251, %s250, 15
      %s253 = smul.addr %s252, 4
      %s254 = scalar_lea.vmem %s0, %s253
      %s255 = smul.u32 8, %s18
      %s256 = smul.u32 8, %s18
      %p257 = scmp.lt.s32.totalorder %s256, 15
      %s258 = scalar_select %p257, %s256, 15
      %s259 = smul.addr %s258, 4
      %s260 = scalar_lea.vmem %s5, %s259
      %s261 = smul.u32 8, %s18
      %p262 = scmp.lt.s32.totalorder %s18, 1
      %s263 = scalar_select %p262, %s18, 1
      %s264 = smul.addr %s263, 2
      %s265 = scalar_lea.vmem %s6, %s264
      %v267 = vld [vmem:[%s254] sm:$0xf]
      %v268 = vld [vmem:[%s254 + $0x4] sm:$0xf]
      %v269 = vld [vmem:[%s254 + $0x8] sm:$0xf]
      %v270 = vld [vmem:[%s254 + $0xc] sm:$0xf]
      %v271 = vld [vmem:[%s254 + $0x10] sm:$0xf]
      %v272 = vld [vmem:[%s254 + $0x14] sm:$0xf]
      %v273 = vld [vmem:[%s254 + $0x18] sm:$0xf]
      %v274 = vld [vmem:[%s254 + $0x1c] sm:$0xf]
      %v275 = vunpack.c.l.bf16 %v267
      %v276 = vunpack.c.l.bf16 %v268
      %v277 = vunpack.c.l.bf16 %v269
      %v278 = vunpack.c.l.bf16 %v270
      %v279 = vunpack.c.l.bf16 %v271
      %v280 = vunpack.c.l.bf16 %v272
      %v281 = vunpack.c.l.bf16 %v273
      %v282 = vunpack.c.l.bf16 %v274
      %v283 = vld [vmem:[%s1] sm:$0x1]
      %v285 = vlaneseq
      %v286 = vshrl.u32 %v285, 7
      %v287 = vsub.s32 0, %v286
      %v288 = vrot.slane %v283, %v287
      %v290 = vmul.f32 %v275, %v288
      %v291 = vmul.f32 %v276, %v288
      %v292 = vmul.f32 %v277, %v288
      %v293 = vmul.f32 %v278, %v288
      %v294 = vmul.f32 %v279, %v288
      %v295 = vmul.f32 %v280, %v288
      %v296 = vmul.f32 %v281, %v288
      %v297 = vmul.f32 %v282, %v288
      %v298 = vld [vmem:[%s2] sm:$0x1]
      %v300 = vlaneseq
      %v301 = vshrl.u32 %v300, 7
      %v302 = vsub.s32 0, %v301
      %v303 = vrot.slane %v298, %v302
      %v305 = vadd.f32 %v290, %v303
      %v306 = vadd.f32 %v291, %v303
      %v307 = vadd.f32 %v292, %v303
      %v308 = vadd.f32 %v293, %v303
      %v309 = vadd.f32 %v294, %v303
      %v310 = vadd.f32 %v295, %v303
      %v311 = vadd.f32 %v296, %v303
      %v312 = vadd.f32 %v297, %v303
      %v313 = vmax.f32 %v305, 0.0
      %v314 = vmax.f32 %v306, 0.0
      %v315 = vmax.f32 %v307, 0.0
      %v316 = vmax.f32 %v308, 0.0
      %v317 = vmax.f32 %v309, 0.0
      %v318 = vmax.f32 %v310, 0.0
      %v319 = vmax.f32 %v311, 0.0
      %v320 = vmax.f32 %v312, 0.0
      %v321 = vpack.c.bf16 %v314, %v313
      %v322 = vpack.c.bf16 %v316, %v315
      %v323 = vpack.c.bf16 %v318, %v317
      %v324 = vpack.c.bf16 %v320, %v319
      %v325 = vld [vmem:[%s3] sm:$0xf]
      %v326 = vld [vmem:[%s3 + $0x4] sm:$0xf]
      %v327 = vld [vmem:[%s3 + $0x8] sm:$0xf]
      %v328 = vld [vmem:[%s3 + $0xc] sm:$0xf]
      %v329 = vld [vmem:[%s3 + $0x10] sm:$0xf]
      %v330 = vld [vmem:[%s3 + $0x14] sm:$0xf]
      %v331 = vld [vmem:[%s3 + $0x18] sm:$0xf]
      %v332 = vld [vmem:[%s3 + $0x1c] sm:$0xf]
      %v333 = vld [vmem:[%s4] sm:$0x1]
      %v335 = vlaneseq
      %v336 = vshrl.u32 %v335, 7
      %v337 = vsub.s32 0, %v336
      %v338 = vrot.slane %v333, %v337
      %v348 = vunpack.c.l.b16 %v325
      %v349 = vunpack.c.l.b16 %v326
      %v350 = vunpack.c.l.b16 %v327
      %v351 = vunpack.c.l.b16 %v328
      %v352 = vunpack.c.l.b16 %v329
      %v353 = vunpack.c.l.b16 %v330
      %v354 = vunpack.c.l.b16 %v331
      %v355 = vunpack.c.l.b16 %v332
      %v356 = vpack.c.b16 %v349, %v348
      %v357 = vpack.c.b16 %v351, %v350
      %v358 = vpack.c.b16 %v353, %v352
      %v359 = vpack.c.b16 %v355, %v354
      %vm364 = vcmask 523264
      %v366 = vsel %vm364, %v321, 0
      %v369 = vsel %vm364, %v322, 0
      %v372 = vsel %vm364, %v323, 0
      %v375 = vsel %vm364, %v324, 0
      %377 = vmatprep.subr.bf16.mxu0 0
      %378 = vmatpush1.bf16.msra.mxu0 %v356
      %379 = vmatprep.subr.bf16.mxu0 0
      %380 = vmatpush1.bf16.msra.mxu0 %v357
      %381 = vmatprep.subr.bf16.mxu0 0
      %382 = vmatpush1.bf16.msra.mxu0 %v358
      %383 = vmatprep.subr.bf16.mxu0 0
      %384 = vmatpush1.bf16.msra.mxu0 %v359
      %385 = vmatprep.subr.bf16.mxu0 0
      %386 = vmatpush1.bf16.msra.mxu0 0
      %387 = vmatprep.subr.bf16.mxu0 0
      %388 = vmatpush1.bf16.msra.mxu0 0
      %389 = vmatprep.subr.bf16.mxu0 0
      %390 = vmatpush1.bf16.msra.mxu0 0
      %391 = vmatprep.subr.bf16.mxu0 0
      %392 = vmatpush1.bf16.msra.mxu0 0
      %393 = vmatprep.subr.bf16.mxu0 0
      %394 = vmatpush1.bf16.msra.mxu0 0
      %395 = vmatprep.subr.bf16.mxu0 0
      %396 = vmatpush1.bf16.msra.mxu0 0
      %397 = vmatprep.subr.bf16.mxu0 0
      %398 = vmatpush1.bf16.msra.mxu0 0
      %399 = vmatprep.subr.bf16.mxu0 0
      %400 = vmatpush1.bf16.msra.mxu0 0
      %401 = vmatprep.subr.bf16.mxu0 0
      %402 = vmatpush1.bf16.msra.mxu0 0
      %403 = vmatprep.subr.bf16.mxu0 0
      %404 = vmatpush1.bf16.msra.mxu0 0
      %405 = vmatprep.subr.bf16.mxu0 0
      %406 = vmatpush1.bf16.msra.mxu0 0
      %407 = vmatprep.subr.bf16.mxu0 0
      %408 = vmatpush1.bf16.msra.mxu0 0
      %409 = vmatprep.mubr.bf16.mxu0 0
      %410 = vmatmul.mubr.bf16.gmra.mrb[0].mxu0 %v366
      %v411 = vpop.f32.mrb[0].mxu0
      %v412 = vadd.f32 %v338, %v411
      %v413 = vpop.f32.mrb[0].mxu0
      %v414 = vpop.f32.mrb[0].mxu0
      %v415 = vadd.f32 %v338, %v414
      %v416 = vpop.f32.mrb[0].mxu0
      %417 = vmatprep.mubr.bf16.mxu0 0
      %418 = vmatmul.mubr.bf16.gmra.mrb[0].mxu0 %v369
      %v419 = vpop.f32.mrb[0].mxu0
      %v420 = vadd.f32 %v338, %v419
      %v421 = vpop.f32.mrb[0].mxu0
      %v422 = vpop.f32.mrb[0].mxu0
      %v423 = vadd.f32 %v338, %v422
      %v424 = vpop.f32.mrb[0].mxu0
      %425 = vmatprep.mubr.bf16.mxu0 0
      %426 = vmatmul.mubr.bf16.gmra.mrb[0].mxu0 %v372
      %v427 = vpop.f32.mrb[0].mxu0
      %v428 = vadd.f32 %v338, %v427
      %v429 = vpop.f32.mrb[0].mxu0
      %v430 = vpop.f32.mrb[0].mxu0
      %v431 = vadd.f32 %v338, %v430
      %v432 = vpop.f32.mrb[0].mxu0
      %433 = vmatprep.mubr.bf16.mxu0 0
      %434 = vmatmul.mubr.bf16.gmra.mrb[0].mxu0 %v375
      %v435 = vpop.f32.mrb[0].mxu0
      %v436 = vadd.f32 %v338, %v435
      %v437 = vpop.f32.mrb[0].mxu0
      %v438 = vpop.f32.mrb[0].mxu0
      %v439 = vadd.f32 %v338, %v438
      %v440 = vpop.f32.mrb[0].mxu0
      %441 = vdwg.mxu0
      %v442 = vpack.c.bf16 %v415, %v412
      %v443 = vpack.c.bf16 %v423, %v420
      %v444 = vpack.c.bf16 %v431, %v428
      %v445 = vpack.c.bf16 %v439, %v436
      %v450 = vunpack.c.l.b16 %v442
      %v451 = vunpack.c.h.b16 %v442
      %v452 = vunpack.c.l.b16 %v443
      %v453 = vunpack.c.h.b16 %v443
      %v454 = vunpack.c.l.b16 %v444
      %v455 = vunpack.c.h.b16 %v444
      %v456 = vunpack.c.l.b16 %v445
      %v457 = vunpack.c.h.b16 %v445
      %v458 = vpack.c.b16 %v450, %v450
      %v459 = vpack.c.b16 %v451, %v451
      %v460 = vpack.c.b16 %v452, %v452
      %v461 = vpack.c.b16 %v453, %v453
      %v462 = vpack.c.b16 %v454, %v454
      %v463 = vpack.c.b16 %v455, %v455
      %v464 = vpack.c.b16 %v456, %v456
      %v465 = vpack.c.b16 %v457, %v457
      %474 = vst [vmem:[%s260] sm:$0xf] %v458
      %475 = vst [vmem:[%s260 + $0x4] sm:$0xf] %v459
      %476 = vst [vmem:[%s260 + $0x8] sm:$0xf] %v460
      %477 = vst [vmem:[%s260 + $0xc] sm:$0xf] %v461
      %478 = vst [vmem:[%s260 + $0x10] sm:$0xf] %v462
      %479 = vst [vmem:[%s260 + $0x14] sm:$0xf] %v463
      %480 = vst [vmem:[%s260 + $0x18] sm:$0xf] %v464
      %481 = vst [vmem:[%s260 + $0x1c] sm:$0xf] %v465
      %v482 = vunpack.c.l.bf16 %v442
      %v483 = vunpack.c.h.bf16 %v442
      %v484 = vunpack.c.l.bf16 %v443
      %v485 = vunpack.c.h.bf16 %v443
      %v486 = vunpack.c.l.bf16 %v444
      %v487 = vunpack.c.h.bf16 %v444
      %v488 = vunpack.c.l.bf16 %v445
      %v489 = vunpack.c.h.bf16 %v445
      %v490 = vadd.f32 %v482, %v483
      %v491 = vadd.f32 %v490, %v484
      %v492 = vadd.f32 %v491, %v485
      %v493 = vadd.f32 %v492, %v486
      %v494 = vadd.f32 %v493, %v487
      %v495 = vadd.f32 %v494, %v488
      %v496 = vadd.f32 %v495, %v489
      %v497 = vrot.slane %v496, 4
      %v498 = vadd.f32 %v496, %v497
      %v499 = vrot.slane %v498, 2
      %v500 = vadd.f32 %v498, %v499
      %v501 = vrot.slane %v500, 1
      %v502 = vadd.f32 %v500, %v501
      %v503 = vmul.f32 %v482, %v482
      %v504 = vmul.f32 %v483, %v483
      %v505 = vmul.f32 %v484, %v484
      %v506 = vmul.f32 %v485, %v485
      %v507 = vmul.f32 %v486, %v486
      %v508 = vmul.f32 %v487, %v487
      %v509 = vmul.f32 %v488, %v488
      %v510 = vmul.f32 %v489, %v489
      %v511 = vadd.f32 %v503, %v504
      %v512 = vadd.f32 %v511, %v505
      %v513 = vadd.f32 %v512, %v506
      %v514 = vadd.f32 %v513, %v507
      %v515 = vadd.f32 %v514, %v508
      %v516 = vadd.f32 %v515, %v509
      %v517 = vadd.f32 %v516, %v510
      %v518 = vrot.slane %v517, 4
      %v519 = vadd.f32 %v517, %v518
      %v520 = vrot.slane %v519, 2
      %v521 = vadd.f32 %v519, %v520
      %v522 = vrot.slane %v521, 1
      %v523 = vadd.f32 %v521, %v522
      %vm524 = vcmask 1040384
      %v525 = vsel %vm524, %v502, %v523
      %526 = vst [vmem:[%s265] sm:$0x3] %v525
      %s527 = smul.u32 8, %s18
      %p528 = scmp.lt.s32.totalorder %s527, 15
      %s529 = scalar_select %p528, %s527, 15
      %s530 = smul.addr %s529, 4
      %s531 = scalar_lea.vmem %s5, %s530
      %p532 = scmp.lt.s32.totalorder %s18, 1
      %s533 = scalar_select %p532, %s18, 1
      %s534 = smul.addr %s533, 2
      %s535 = scalar_lea.vmem %s6, %s534
      // Predicated region
      $region41: #{bottleneck_forward.6} parent=39 // pred_check
        %p536 = pneg %p146
      $region42: #{bottleneck_forward.6} parent=39 // pred_check_branch
        %538 = sbr.rel (%p536) target = $region44
      $region43: #{bottleneck_forward.6} parent=39 // pred_region
        %s539 = smul.u32 8, %s18
      $region44: #{bottleneck_forward.6} parent=39 // pred_fallthru
        _
      // Predicated region
      $region45: #{bottleneck_forward.6} parent=39 // pred_check
        %p540 = pneg %p172
      $region46: #{bottleneck_forward.6} parent=39 // pred_check_branch
        %542 = sbr.rel (%p540) target = $region48
      $region47: #{bottleneck_forward.6} parent=39 // pred_region
        _
      $region48: #{bottleneck_forward.6} parent=39 // pred_fallthru
        _
    $region40: #{bottleneck_forward.6} parent=5 // pred_fallthru
      _
    %p543 = scmp.le.s32.totalorder 2, %s13
    // Predicated region
    $region49: #{bottleneck_forward.6} parent=5 // pred_check
      %p544 = pneg %p543
    $region50: #{bottleneck_forward.6} parent=5 // pred_check_branch
      %546 = sbr.rel (%p544) target = $region52
    $region51: #{bottleneck_forward.6} parent=5 // pred_region
      %s547 = ssub.s32 %s13, 2
      // Predicated region
      $region53: #{bottleneck_forward.6} parent=51 // pred_check
        %p548 = pneg %p152
      $region54: #{bottleneck_forward.6} parent=51 // pred_check_branch
        %550 = sbr.rel (%p548) target = $region56
      $region55: #{bottleneck_forward.6} parent=51 // pred_region
        %s551 = smul.u32 8, %s19
        %p552 = scmp.lt.s32.totalorder %s551, 15
        %s553 = scalar_select %p552, %s551, 15
        %s554 = smul.addr %s553, 4
        %s555 = scalar_lea.vmem %s5, %s554
      $region56: #{bottleneck_forward.6} parent=51 // pred_fallthru
        _
      // Predicated region
      $region57: #{bottleneck_forward.6} parent=51 // pred_check
        %p556 = pneg %p178
      $region58: #{bottleneck_forward.6} parent=51 // pred_check_branch
        %558 = sbr.rel (%p556) target = $region60
      $region59: #{bottleneck_forward.6} parent=51 // pred_region
        %p559 = scmp.lt.s32.totalorder %s19, 1
        %s560 = scalar_select %p559, %s19, 1
        %s561 = smul.addr %s560, 2
        %s562 = scalar_lea.vmem %s6, %s561
      $region60: #{bottleneck_forward.6} parent=51 // pred_fallthru
        _
    $region52: #{bottleneck_forward.6} parent=5 // pred_fallthru
      _
  $region6: #{bottleneck_forward.6} parent=0 // loop_footer
    %s17 = sadd.s32 1, %s13
  $region7: #{bottleneck_forward.6} parent=0 // loop_footer_branch
    %12 = sbr.rel target = $region3
  $region8: #{bottleneck_forward.6} parent=0 // loop_exit
    _

// kernel: bottleneck_forward.5
$region0: #{bottleneck_forward.5}
  #allocation0 [shape = 'u32[]', space=smem, size = 0x4, offset = 0x4, fixed_abs, tag = 'smem constant byte address 0x4 - core index']
  #allocation1 [shape = 'u32[144,128]{1,0:T(1,128)}', space=vmem, size = 0x12000, scoped, tag = 'internal scratch']
  #allocation2 [shape = 'bf16[10,10,64]{2,1,0:T(8,128)(2,1)}', space=vmem, size = 0xa000, scoped, tag = 'scratch operand']
  %s0 = inlined_call_operand.vmem [shape: bf16[2,8,8,64], index: 0, kind: input, shape index: {}]
  %s1 = inlined_call_operand.vmem [shape: f32[1,64], index: 1, kind: input, shape index: {}]
  %s2 = inlined_call_operand.vmem [shape: f32[1,64], index: 2, kind: input, shape index: {}]
  %s3 = inlined_call_operand.vmem [shape: bf16[9,64,64], index: 3, kind: input, shape index: {}]
  %s4 = inlined_call_operand.vmem [shape: f32[1,64], index: 4, kind: input, shape index: {}]
  %s5 = inlined_call_operand.vmem [shape: bf16[2,64,64], index: 5, kind: output, shape index: {0}]
  %s6 = inlined_call_operand.vmem [shape: f32[2,2,64], index: 6, kind: output, shape index: {1}]
  %7 = xla_tuple %s5, %s6
  %s8 = sld [smem:[#allocation0]]
  $region61: #{bottleneck_forward.5} parent=0
    _
  %s10 = ssub.s32 1, %s8
  %s11 = scalar_select 0, %s10, %s8
  loop: start=0, step=1, limit=4
  $region2: #{bottleneck_forward.5} parent=0 // loop_pre_header
    _
  $region3: #{bottleneck_forward.5} parent=0 // loop_header
    %s13 = sphi 0, %s17
    %p14 = scmp.ge.s32.totalorder %s13, 4
    %s23 = sphi 0, %s25
    %s26 = sphi 0, %s23
    %s27 = sphi 0, %s26
    %s43 = sphi 0, %s27
    %s47 = sphi 0, %s47
    %s49 = sphi 0, %s47
    %s50 = sphi 0, %s49
    %s64 = sphi 0, %s50
    %s68 = sphi 0, %s68
    %s70 = sphi 0, %s68
    %s71 = sphi 0, %s70
    %s85 = sphi 0, %s71
    %s89 = sphi 0, %s89
    %s91 = sphi 0, %s89
    %s92 = sphi 0, %s91
    %s106 = sphi 0, %s92
    %s110 = sphi 0, %s110
    %s112 = sphi 0, %s110
    %s113 = sphi 0, %s112
    %s127 = sphi 0, %s113
    %s133 = sphi 0, %s135
    %s136 = sphi 0, %s133
    %s137 = sphi 0, %s136
    %s153 = sphi 0, %s137
    %s159 = sphi 0, %s161
    %s162 = sphi 0, %s159
    %s163 = sphi 0, %s162
    %s179 = sphi 0, %s163
  $region4: #{bottleneck_forward.5} parent=0 // loop_header_branch
    %16 = sbr.rel (%p14) target = $region8
  $region5: #{bottleneck_forward.5} parent=0 // loop_body
    %s18 = ssub.s32 %s13, 1
    %s19 = ssub.s32 %s13, 2
    %s20 = sadd.s32 %s13, 1
    %s21 = ssub.s32 %s13, %s20
    %p22 = scmp.eq.s32.totalorder %s21, 0
    %s24 = sadd.s32 %s23, 1
    %s25 = scalar_select %p22, %s23, %s24
    %p28 = pneg %p22
    %p29 = scmp.eq.s32.totalorder %s13, 1
    %p30 = por %p28, %p29
    %p31 = scmp.ne.s32.totalorder %s23, %s26
    %p32 = scmp.eq.s32.totalorder %s13, 0
    %p33 = por %p31, %p32
    %p34 = scmp.ne.s32.totalorder %s23, %s26
    %p35 = scmp.eq.s32.totalorder %s18, 1
    %p36 = por %p34, %p35
    %p37 = scmp.ne.s32.totalorder %s26, %s27
    %p38 = scmp.eq.s32.totalorder %s18, 0
    %p39 = por %p37, %p38
    %p40 = scmp.ne.s32.totalorder %s26, %s27
    %p41 = scmp.eq.s32.totalorder %s19, 1
    %p42 = por %p40, %p41
    %p44 = scmp.ne.s32.totalorder %s27, %s43
    %p45 = scmp.eq.s32.totalorder %s19, 0
    %p46 = por %p44, %p45
    %s48 = sadd.s32 %s47, 1
    %p51 = scmp.eq.s32.totalorder %s13, 1
    %p52 = scmp.ne.s32.totalorder %s47, %s49
    %p53 = scmp.eq.s32.totalorder %s13, 0
    %p54 = por %p52, %p53
    %p55 = scmp.ne.s32.totalorder %s47, %s49
    %p56 = scmp.eq.s32.totalorder %s18, 1
    %p57 = por %p55, %p56
    %p58 = scmp.ne.s32.totalorder %s49, %s50
    %p59 = scmp.eq.s32.totalorder %s18, 0
    %p60 = por %p58, %p59
    %p61 = scmp.ne.s32.totalorder %s49, %s50
    %p62 = scmp.eq.s32.totalorder %s19, 1
    %p63 = por %p61, %p62
    %p65 = scmp.ne.s32.totalorder %s50, %s64
    %p66 = scmp.eq.s32.totalorder %s19, 0
    %p67 = por %p65, %p66
    %s69 = sadd.s32 %s68, 1
    %p72 = scmp.eq.s32.totalorder %s13, 1
    %p73 = scmp.ne.s32.totalorder %s68, %s70
    %p74 = scmp.eq.s32.totalorder %s13, 0
    %p75 = por %p73, %p74
    %p76 = scmp.ne.s32.totalorder %s68, %s70
    %p77 = scmp.eq.s32.totalorder %s18, 1
    %p78 = por %p76, %p77
    %p79 = scmp.ne.s32.totalorder %s70, %s71
    %p80 = scmp.eq.s32.totalorder %s18, 0
    %p81 = por %p79, %p80
    %p82 = scmp.ne.s32.totalorder %s70, %s71
    %p83 = scmp.eq.s32.totalorder %s19, 1
    %p84 = por %p82, %p83
    %p86 = scmp.ne.s32.totalorder %s71, %s85
    %p87 = scmp.eq.s32.totalorder %s19, 0
    %p88 = por %p86, %p87
    %s90 = sadd.s32 %s89, 1
    %p93 = scmp.eq.s32.totalorder %s13, 1
    %p94 = scmp.ne.s32.totalorder %s89, %s91
    %p95 = scmp.eq.s32.totalorder %s13, 0
    %p96 = por %p94, %p95
    %p97 = scmp.ne.s32.totalorder %s89, %s91
    %p98 = scmp.eq.s32.totalorder %s18, 1
    %p99 = por %p97, %p98
    %p100 = scmp.ne.s32.totalorder %s91, %s92
    %p101 = scmp.eq.s32.totalorder %s18, 0
    %p102 = por %p100, %p101
    %p103 = scmp.ne.s32.totalorder %s91, %s92
    %p104 = scmp.eq.s32.totalorder %s19, 1
    %p105 = por %p103, %p104
    %p107 = scmp.ne.s32.totalorder %s92, %s106
    %p108 = scmp.eq.s32.totalorder %s19, 0
    %p109 = por %p107, %p108
    %s111 = sadd.s32 %s110, 1
    %p114 = scmp.eq.s32.totalorder %s13, 1
    %p115 = scmp.ne.s32.totalorder %s110, %s112
    %p116 = scmp.eq.s32.totalorder %s13, 0
    %p117 = por %p115, %p116
    %p118 = scmp.ne.s32.totalorder %s110, %s112
    %p119 = scmp.eq.s32.totalorder %s18, 1
    %p120 = por %p118, %p119
    %p121 = scmp.ne.s32.totalorder %s112, %s113
    %p122 = scmp.eq.s32.totalorder %s18, 0
    %p123 = por %p121, %p122
    %p124 = scmp.ne.s32.totalorder %s112, %s113
    %p125 = scmp.eq.s32.totalorder %s19, 1
    %p126 = por %p124, %p125
    %p128 = scmp.ne.s32.totalorder %s113, %s127
    %p129 = scmp.eq.s32.totalorder %s19, 0
    %p130 = por %p128, %p129
    %s131 = ssub.s32 %s13, %s20
    %p132 = scmp.eq.s32.totalorder %s131, 0
    %s134 = sadd.s32 %s133, 1
    %s135 = scalar_select %p132, %s133, %s134
    %p138 = pneg %p132
    %p139 = scmp.eq.s32.totalorder %s13, 1
    %p140 = por %p138, %p139
    %p141 = scmp.ne.s32.totalorder %s133, %s136
    %p142 = scmp.eq.s32.totalorder %s13, 0
    %p143 = por %p141, %p142
    %p144 = scmp.ne.s32.totalorder %s133, %s136
    %p145 = scmp.eq.s32.totalorder %s18, 1
    %p146 = por %p144, %p145
    %p147 = scmp.ne.s32.totalorder %s136, %s137
    %p148 = scmp.eq.s32.totalorder %s18, 0
    %p149 = por %p147, %p148
    %p150 = scmp.ne.s32.totalorder %s136, %s137
    %p151 = scmp.eq.s32.totalorder %s19, 1
    %p152 = por %p150, %p151
    %p154 = scmp.ne.s32.totalorder %s137, %s153
    %p155 = scmp.eq.s32.totalorder %s19, 0
    %p156 = por %p154, %p155
    %s157 = ssub.s32 %s13, %s20
    %p158 = scmp.eq.s32.totalorder %s157, 0
    %s160 = sadd.s32 %s159, 1
    %s161 = scalar_select %p158, %s159, %s160
    %p164 = pneg %p158
    %p165 = scmp.eq.s32.totalorder %s13, 1
    %p166 = por %p164, %p165
    %p167 = scmp.ne.s32.totalorder %s159, %s162
    %p168 = scmp.eq.s32.totalorder %s13, 0
    %p169 = por %p167, %p168
    %p170 = scmp.ne.s32.totalorder %s159, %s162
    %p171 = scmp.eq.s32.totalorder %s18, 1
    %p172 = por %p170, %p171
    %p173 = scmp.ne.s32.totalorder %s162, %s163
    %p174 = scmp.eq.s32.totalorder %s18, 0
    %p175 = por %p173, %p174
    %p176 = scmp.ne.s32.totalorder %s162, %s163
    %p177 = scmp.eq.s32.totalorder %s19, 1
    %p178 = por %p176, %p177
    %p180 = scmp.ne.s32.totalorder %s163, %s179
    %p181 = scmp.eq.s32.totalorder %s19, 0
    %p182 = por %p180, %p181
    %p183 = scmp.le.s32.totalorder 1, %s13
    %p184 = scmp.lt.s32.totalorder %s13, 3
    %p185 = pnand %p183, %p184
    %p186 = pneg %p185
    // Predicated region
    $region9: #{bottleneck_forward.5} parent=5 // pred_check
      _
    $region10: #{bottleneck_forward.5} parent=5 // pred_check_branch
      %188 = sbr.rel (%p185) target = $region12
    $region11: #{bottleneck_forward.5} parent=5 // pred_region
      %s189 = ssub.s32 %s13, 1
      // Predicated region
      $region13: #{bottleneck_forward.5} parent=11 // pred_check
        %p190 = pneg %p60
      $region14: #{bottleneck_forward.5} parent=11 // pred_check_branch
        %192 = sbr.rel (%p190) target = $region16
      $region15: #{bottleneck_forward.5} parent=11 // pred_region
        _
      $region16: #{bottleneck_forward.5} parent=11 // pred_fallthru
        _
      // Predicated region
      $region17: #{bottleneck_forward.5} parent=11 // pred_check
        %p193 = pneg %p81
      $region18: #{bottleneck_forward.5} parent=11 // pred_check_branch
        %195 = sbr.rel (%p193) target = $region20
      $region19: #{bottleneck_forward.5} parent=11 // pred_region
        _
      $region20: #{bottleneck_forward.5} parent=11 // pred_fallthru
        _
      // Predicated region
      $region21: #{bottleneck_forward.5} parent=11 // pred_check
        %p196 = pneg %p102
      $region22: #{bottleneck_forward.5} parent=11 // pred_check_branch
        %198 = sbr.rel (%p196) target = $region24
      $region23: #{bottleneck_forward.5} parent=11 // pred_region
        _
      $region24: #{bottleneck_forward.5} parent=11 // pred_fallthru
        _
      // Predicated region
      $region25: #{bottleneck_forward.5} parent=11 // pred_check
        %p199 = pneg %p123
      $region26: #{bottleneck_forward.5} parent=11 // pred_check_branch
        %201 = sbr.rel (%p199) target = $region28
      $region27: #{bottleneck_forward.5} parent=11 // pred_region
        _
      $region28: #{bottleneck_forward.5} parent=11 // pred_fallthru
        _
    $region12: #{bottleneck_forward.5} parent=5 // pred_fallthru
      _
    %p202 = scmp.lt.s32.totalorder %s13, 2
    // Predicated region
    $region29: #{bottleneck_forward.5} parent=5 // pred_check
      %p203 = pneg %p202
    $region30: #{bottleneck_forward.5} parent=5 // pred_check_branch
      %205 = sbr.rel (%p203) target = $region32
    $region31: #{bottleneck_forward.5} parent=5 // pred_region
      // Predicated region
      $region33: #{bottleneck_forward.5} parent=31 // pred_check
        %p206 = pneg %p33
      $region34: #{bottleneck_forward.5} parent=31 // pred_check_branch
        %208 = sbr.rel (%p206) target = $region36
      $region35: #{bottleneck_forward.5} parent=31 // pred_region
        %p209 = scmp.lt.s32.totalorder %s13, 1
        %s210 = scalar_select %p209, %s13, 1
        %s211 = smul.addr %s210, 8
        %s212 = smul.addr %s211, 4
        %s213 = scalar_lea.vmem %s0, %s212
      $region36: #{bottleneck_forward.5} parent=31 // pred_fallthru
        _
    $region32: #{bottleneck_forward.5} parent=5 // pred_fallthru
      _
    %p214 = scmp.le.s32.totalorder 1, %s13
    %p215 = scmp.lt.s32.totalorder %s13, 3
    %p216 = pnand %p214, %p215
    %p217 = pneg %p216
    // Predicated region
    $region37: #{bottleneck_forward.5} parent=5 // pred_check
      _
    $region38: #{bottleneck_forward.5} parent=5 // pred_check_branch
      %219 = sbr.rel (%p216) target = $region40
    $region39: #{bottleneck_forward.5} parent=5 // pred_region
      %s220 = ssub.s32 %s13, 1
      %p221 = scmp.lt.s32.totalorder %s18, 1
      %s222 = scalar_select %p221, %s18, 1
      %s223 = smul.addr %s222, 8
      %s224 = smul.addr %s223, 4
      %s225 = scalar_lea.vmem %s0, %s224
      %p226 = pneg %p39
      %p227 = pneg %p36
      %p228 = pneg %p60
      %p229 = pneg %p57
      %p230 = pneg %p81
      %p231 = pneg %p78
      %p232 = pneg %p102
      %p233 = pneg %p99
      %p234 = pneg %p123
      %p235 = pneg %p120
      %p236 = pneg %p149
      %p237 = pneg %p146
      %p238 = scmp.lt.s32.totalorder %s18, 1
      %s239 = scalar_select %p238, %s18, 1
      %s240 = smul.addr %s239, 8
      %s241 = smul.addr %s240, 4
      %s242 = scalar_lea.vmem %s5, %s241
      %p243 = pneg %p175
      %p244 = pneg %p172
      %p245 = scmp.lt.s32.totalorder %s18, 1
      %s246 = scalar_select %p245, %s18, 1
      %s247 = smul.addr %s246, 2
      %s248 = scalar_lea.vmem %s6, %s247
      %p249 = scmp.lt.s32.totalorder %s18, 1
      %s250 = scalar_select %p249, %s18, 1
      %s251 = smul.addr %s250, 8
      %s252 = smul.addr %s251, 4
      %s253 = scalar_lea.vmem %s0, %s252
      %p254 = scmp.lt.s32.totalorder %s18, 1
      %s255 = scalar_select %p254, %s18, 1
      %s256 = smul.addr %s255, 8
      %s257 = smul.addr %s256, 4
      %s258 = scalar_lea.vmem %s5, %s257
      %p259 = scmp.lt.s32.totalorder %s18, 1
      %s260 = scalar_select %p259, %s18, 1
      %s261 = smul.addr %s260, 2
      %s262 = scalar_lea.vmem %s6, %s261
      %v264 = vld [vmem:[%s253] sm:$0xf]
      %v265 = vld [vmem:[%s253 + $0x4] sm:$0xf]
      %v266 = vld [vmem:[%s253 + $0x8] sm:$0xf]
      %v267 = vld [vmem:[%s253 + $0xc] sm:$0xf]
      %v268 = vld [vmem:[%s253 + $0x10] sm:$0xf]
      %v269 = vld [vmem:[%s253 + $0x14] sm:$0xf]
      %v270 = vld [vmem:[%s253 + $0x18] sm:$0xf]
      %v271 = vld [vmem:[%s253 + $0x1c] sm:$0xf]
      %v272 = vunpack.c.l.bf16 %v264
      %v273 = vunpack.c.l.bf16 %v265
      %v274 = vunpack.c.l.bf16 %v266
      %v275 = vunpack.c.l.bf16 %v267
      %v276 = vunpack.c.l.bf16 %v268
      %v277 = vunpack.c.l.bf16 %v269
      %v278 = vunpack.c.l.bf16 %v270
      %v279 = vunpack.c.l.bf16 %v271
      %v280 = vld [vmem:[%s1] sm:$0x1]
      %v282 = vlaneseq
      %v283 = vshrl.u32 %v282, 7
      %v284 = vsub.s32 0, %v283
      %v285 = vrot.slane %v280, %v284
      %v287 = vmul.f32 %v272, %v285
      %v288 = vmul.f32 %v273, %v285
      %v289 = vmul.f32 %v274, %v285
      %v290 = vmul.f32 %v275, %v285
      %v291 = vmul.f32 %v276, %v285
      %v292 = vmul.f32 %v277, %v285
      %v293 = vmul.f32 %v278, %v285
      %v294 = vmul.f32 %v279, %v285
      %v295 = vld [vmem:[%s2] sm:$0x1]
      %v297 = vlaneseq
      %v298 = vshrl.u32 %v297, 7
      %v299 = vsub.s32 0, %v298
      %v300 = vrot.slane %v295, %v299
      %v302 = vadd.f32 %v287, %v300
      %v303 = vadd.f32 %v288, %v300
      %v304 = vadd.f32 %v289, %v300
      %v305 = vadd.f32 %v290, %v300
      %v306 = vadd.f32 %v291, %v300
      %v307 = vadd.f32 %v292, %v300
      %v308 = vadd.f32 %v293, %v300
      %v309 = vadd.f32 %v294, %v300
      %v310 = vmax.f32 %v302, 0.0
      %v311 = vmax.f32 %v303, 0.0
      %v312 = vmax.f32 %v304, 0.0
      %v313 = vmax.f32 %v305, 0.0
      %v314 = vmax.f32 %v306, 0.0
      %v315 = vmax.f32 %v307, 0.0
      %v316 = vmax.f32 %v308, 0.0
      %v317 = vmax.f32 %v309, 0.0
      %v318 = vpack.c.bf16 %v310, %v310
      %v319 = vpack.c.bf16 %v311, %v311
      %v320 = vpack.c.bf16 %v312, %v312
      %v321 = vpack.c.bf16 %v313, %v313
      %v322 = vpack.c.bf16 %v314, %v314
      %v323 = vpack.c.bf16 %v315, %v315
      %v324 = vpack.c.bf16 %v316, %v316
      %v325 = vpack.c.bf16 %v317, %v317
      %v327 = vshrl.u32 %v318, 16
      %v329 = vrot.slane %v327, 7
      %v330 = vshll.u32 %v318, 16
      %v332 = vor.u32 %v329, %v330
      %v334 = vshrl.u32 %v319, 16
      %v336 = vrot.slane %v334, 7
      %v337 = vshll.u32 %v319, 16
      %v339 = vor.u32 %v336, %v337
      %v341 = vshrl.u32 %v320, 16
      %v343 = vrot.slane %v341, 7
      %v344 = vshll.u32 %v320, 16
      %v346 = vor.u32 %v343, %v344
      %v348 = vshrl.u32 %v321, 16
      %v350 = vrot.slane %v348, 7
      %v351 = vshll.u32 %v321, 16
      %v353 = vor.u32 %v350, %v351
      %v355 = vshrl.u32 %v322, 16
      %v357 = vrot.slane %v355, 7
      %v358 = vshll.u32 %v322, 16
      %v360 = vor.u32 %v357, %v358
      %v362 = vshrl.u32 %v323, 16
      %v364 = vrot.slane %v362, 7
      %v365 = vshll.u32 %v323, 16
      %v367 = vor.u32 %v364, %v365
      %v369 = vshrl.u32 %v324, 16
      %v371 = vrot.slane %v369, 7
      %v372 = vshll.u32 %v324, 16
      %v374 = vor.u32 %v371, %v372
      %v376 = vshrl.u32 %v325, 16
      %v378 = vrot.slane %v376, 7
      %v379 = vshll.u32 %v325, 16
      %v381 = vor.u32 %v378, %v379
      %vm390 = vcmask 1040384
      %vm391 = vsmask.f32 256
      %vm392 = vmand %vm390, %vm391
      %v393 = vsel %vm392, 0, %v332
      %v394 = vsel %vm392, 0, %v339
      %v395 = vsel %vm392, 0, %v346
      %v396 = vsel %vm392, 0, %v353
      %v397 = vsel %vm392, 0, %v360
      %v398 = vsel %vm392, 0, %v367
      %v399 = vsel %vm392, 0, %v374
      %v400 = vsel %vm392, 0, %v381
      %vm401 = vcmask 1044480
      %vm402 = vsmask.f32 4352
      %vm403 = vmand %vm401, %vm402
      %v404 = vsel %vm403, %v393, 0
      %v405 = vsel %vm403, %v394, 0
      %v406 = vsel %vm403, %v395, 0
      %v407 = vsel %vm403, %v396, 0
      %v408 = vsel %vm403, %v397, 0
      %v409 = vsel %vm403, %v398, 0
      %v410 = vsel %vm403, %v399, 0
      %v411 = vsel %vm403, %v400, 0
      %vm412 = vcmask 519168
      %413 = vst.msk [vmem:[#allocation2] sm:$0xf] %vm412, 0
      %vm414 = vcmask 516096
      %415 = vst.msk [vmem:[#allocation2 + $0x4] sm:$0x1] %vm414, 0
      %s416 = scalar_lea.vmem [#allocation2], 72
      %417 = vst.msk [vmem:[%s416] sm:$0xf] %vm412, 0
      %418 = vst.msk [vmem:[%s416 + $0x4] sm:$0x1] %vm414, 0
      %v427 = vunpack.c.l.b16 %v404
      %v428 = vunpack.c.h.b16 %v404
      %v429 = vunpack.c.l.b16 %v405
      %v430 = vunpack.c.h.b16 %v405
      %v431 = vunpack.c.l.b16 %v406
      %v432 = vunpack.c.h.b16 %v406
      %v433 = vunpack.c.l.b16 %v407
      %v434 = vunpack.c.h.b16 %v407
      %v435 = vunpack.c.l.b16 %v408
      %v436 = vunpack.c.h.b16 %v408
      %v437 = vunpack.c.l.b16 %v409
      %v438 = vunpack.c.h.b16 %v409
      %v439 = vunpack.c.l.b16 %v410
      %v440 = vunpack.c.h.b16 %v410
      %v441 = vunpack.c.l.b16 %v411
      %v442 = vunpack.c.h.b16 %v411
      %v443 = vpack.c.b16 %v427, %v427
      %v444 = vpack.c.b16 %v428, %v428
      %v445 = vpack.c.b16 %v429, %v429
      %v446 = vpack.c.b16 %v430, %v430
      %v447 = vpack.c.b16 %v431, %v431
      %v448 = vpack.c.b16 %v432, %v432
      %v449 = vpack.c.b16 %v433, %v433
      %v450 = vpack.c.b16 %v434, %v434
      %v451 = vpack.c.b16 %v435, %v435
      %v452 = vpack.c.b16 %v436, %v436
      %v453 = vpack.c.b16 %v437, %v437
      %v454 = vpack.c.b16 %v438, %v438
      %v455 = vpack.c.b16 %v439, %v439
      %v456 = vpack.c.b16 %v440, %v440
      %v457 = vpack.c.b16 %v441, %v441
      %v458 = vpack.c.b16 %v442, %v442
      %s475 = scalar_lea.vmem [#allocation2], 8
      %476 = vst.msk [vmem:[%s475] sm:$0xf] %vm412, %v443
      %477 = vst.msk [vmem:[%s475 + $0x4] sm:$0x1] %vm414, %v444
      %478 = vst.msk [vmem:[%s475 + $0x8] sm:$0xf] %vm412, %v445
      %479 = vst.msk [vmem:[%s475 + $0xc] sm:$0x1] %vm414, %v446
      %480 = vst.msk [vmem:[%s475 + $0x10] sm:$0xf] %vm412, %v447
      %481 = vst.msk [vmem:[%s475 + $0x14] sm:$0x1] %vm414, %v448
      %482 = vst.msk [vmem:[%s475 + $0x18] sm:$0xf] %vm412, %v449
      %483 = vst.msk [vmem:[%s475 + $0x1c] sm:$0x1] %vm414, %v450
      %484 = vst.msk [vmem:[%s475 + $0x20] sm:$0xf] %vm412, %v451
      %485 = vst.msk [vmem:[%s475 + $0x24] sm:$0x1] %vm414, %v452
      %486 = vst.msk [vmem:[%s475 + $0x28] sm:$0xf] %vm412, %v453
      %487 = vst.msk [vmem:[%s475 + $0x2c] sm:$0x1] %vm414, %v454
      %488 = vst.msk [vmem:[%s475 + $0x30] sm:$0xf] %vm412, %v455
      %489 = vst.msk [vmem:[%s475 + $0x34] sm:$0x1] %vm414, %v456
      %490 = vst.msk [vmem:[%s475 + $0x38] sm:$0xf] %vm412, %v457
      %491 = vst.msk [vmem:[%s475 + $0x3c] sm:$0x1] %vm414, %v458
      %v492 = vld [vmem:[#allocation2] sm:$0xf]
      %v493 = vld [vmem:[#allocation2 + $0x8] sm:$0xf]
      %v494 = vld [vmem:[#allocation2 + $0x10] sm:$0xf]
      %v495 = vld [vmem:[#allocation2 + $0x18] sm:$0xf]
      %v496 = vld [vmem:[#allocation2 + $0x20] sm:$0xf]
      %v497 = vld [vmem:[#allocation2 + $0x28] sm:$0xf]
      %v498 = vld [vmem:[#allocation2 + $0x30] sm:$0xf]
      %v499 = vld [vmem:[#allocation2 + $0x38] sm:$0xf]
      %v500 = vld [vmem:[%s3] sm:$0xf]
      %v501 = vld [vmem:[%s3 + $0x4] sm:$0xf]
      %v502 = vld [vmem:[%s3 + $0x8] sm:$0xf]
      %v503 = vld [vmem:[%s3 + $0xc] sm:$0xf]
      %v504 = vld [vmem:[%s3 + $0x10] sm:$0xf]
      %v505 = vld [vmem:[%s3 + $0x14] sm:$0xf]
      %v506 = vld [vmem:[%s3 + $0x18] sm:$0xf]
      %v507 = vld [vmem:[%s3 + $0x1c] sm:$0xf]
      %v508 = vld [vmem:[#allocation2 + $0x4] sm:$0x1]
      %v509 = vld [vmem:[#allocation2 + $0xc] sm:$0x1]
      %v510 = vld [vmem:[#allocation2 + $0x14] sm:$0x1]
      %v511 = vld [vmem:[#allocation2 + $0x1c] sm:$0x1]
      %v512 = vld [vmem:[#allocation2 + $0x24] sm:$0x1]
      %v513 = vld [vmem:[#allocation2 + $0x2c] sm:$0x1]
      %v514 = vld [vmem:[#allocation2 + $0x34] sm:$0x1]
      %v515 = vld [vmem:[#allocation2 + $0x3c] sm:$0x1]
      %vm516 = vsmask.f32 3328
      %vm517 = vsmask.f32 7440
      %vm518 = vmor %vm516, %vm517
      %v520 = vshrl.u32 %v492, 16
      %v522 = vrot.slane %v520, 4
      %v523 = vshll.u32 %v492, 16
      %v525 = vrot.slane %v523, 5
      %v526 = vor.u32 %v522, %v525
      %v527 = vrot.slane %v526, 4
      %v529 = vshll.u32 %v508, 16
      %v531 = vrot.slane %v529, 5
      %v532 = vsel %vm518, %v527, %v531
      %v534 = vshrl.u32 %v493, 16
      %v536 = vrot.slane %v534, 4
      %v537 = vshll.u32 %v493, 16
      %v539 = vrot.slane %v537, 5
      %v540 = vor.u32 %v536, %v539
      %v541 = vrot.slane %v540, 4
      %v543 = vshll.u32 %v509, 16
      %v545 = vrot.slane %v543, 5
      %v546 = vsel %vm518, %v541, %v545
      %v548 = vshrl.u32 %v494, 16
      %v550 = vrot.slane %v548, 4
      %v551 = vshll.u32 %v494, 16
      %v553 = vrot.slane %v551, 5
      %v554 = vor.u32 %v550, %v553
      %v555 = vrot.slane %v554, 4
      %v557 = vshll.u32 %v510, 16
      %v559 = vrot.slane %v557, 5
      %v560 = vsel %vm518, %v555, %v559
      %v562 = vshrl.u32 %v495, 16
      %v564 = vrot.slane %v562, 4
      %v565 = vshll.u32 %v495, 16
      %v567 = vrot.slane %v565, 5
      %v568 = vor.u32 %v564, %v567
      %v569 = vrot.slane %v568, 4
      %v571 = vshll.u32 %v511, 16
      %v573 = vrot.slane %v571, 5
      %v574 = vsel %vm518, %v569, %v573
      %v576 = vshrl.u32 %v496, 16
      %v578 = vrot.slane %v576, 4
      %v579 = vshll.u32 %v496, 16
      %v581 = vrot.slane %v579, 5
      %v582 = vor.u32 %v578, %v581
      %v583 = vrot.slane %v582, 4
      %v585 = vshll.u32 %v512, 16
      %v587 = vrot.slane %v585, 5
      %v588 = vsel %vm518, %v583, %v587
      %v590 = vshrl.u32 %v497, 16
      %v592 = vrot.slane %v590, 4
      %v593 = vshll.u32 %v497, 16
      %v595 = vrot.slane %v593, 5
      %v596 = vor.u32 %v592, %v595
      %v597 = vrot.slane %v596, 4
      %v599 = vshll.u32 %v513, 16
      %v601 = vrot.slane %v599, 5
      %v602 = vsel %vm518, %v597, %v601
      %v604 = vshrl.u32 %v498, 16
      %v606 = vrot.slane %v604, 4
      %v607 = vshll.u32 %v498, 16
      %v609 = vrot.slane %v607, 5
      %v610 = vor.u32 %v606, %v609
      %v611 = vrot.slane %v610, 4
      %v613 = vshll.u32 %v514, 16
      %v615 = vrot.slane %v613, 5
      %v616 = vsel %vm518, %v611, %v615
      %v618 = vshrl.u32 %v499, 16
      %v620 = vrot.slane %v618, 4
      %v621 = vshll.u32 %v499, 16
      %v623 = vrot.slane %v621, 5
      %v624 = vor.u32 %v620, %v623
      %v625 = vrot.slane %v624, 4
      %v627 = vshll.u32 %v515, 16
      %v629 = vrot.slane %v627, 5
      %v630 = vsel %vm518, %v625, %v629
      %s631 = scalar_lea.vmem %s3, 32
      %v632 = vld [vmem:[%s631] sm:$0xf]
      %v633 = vld [vmem:[%s631 + $0x4] sm:$0xf]
      %v634 = vld [vmem:[%s631 + $0x8] sm:$0xf]
      %v635 = vld [vmem:[%s631 + $0xc] sm:$0xf]
      %v636 = vld [vmem:[%s631 + $0x10] sm:$0xf]
      %v637 = vld [vmem:[%s631 + $0x14] sm:$0xf]
      %v638 = vld [vmem:[%s631 + $0x18] sm:$0xf]
      %v639 = vld [vmem:[%s631 + $0x1c] sm:$0xf]
      %v640 = vunpack.c.l.b16 %v532
      %v641 = vunpack.c.l.b16 %v546
      %v642 = vunpack.c.l.b16 %v560
      %v643 = vunpack.c.l.b16 %v574
      %v644 = vunpack.c.l.b16 %v588
      %v645 = vunpack.c.l.b16 %v602
      %v646 = vunpack.c.l.b16 %v616
      %v647 = vunpack.c.l.b16 %v630
      %v648 = vpack.c.b16 %v641, %v640
      %v649 = vpack.c.b16 %v643, %v642
      %v650 = vpack.c.b16 %v645, %v644
      %v651 = vpack.c.b16 %v647, %v646
      %v660 = vunpack.c.l.b16 %v632
      %v661 = vunpack.c.l.b16 %v633
      %v662 = vunpack.c.l.b16 %v634
      %v663 = vunpack.c.l.b16 %v635
      %v664 = vunpack.c.l.b16 %v636
      %v665 = vunpack.c.l.b16 %v637
      %v666 = vunpack.c.l.b16 %v638
      %v667 = vunpack.c.l.b16 %v639
      %v668 = vpack.c.b16 %v661, %v660
      %v669 = vpack.c.b16 %v663, %v662
      %v670 = vpack.c.b16 %v665, %v664
      %v671 = vpack.c.b16 %v667, %v666
      %vm676 = vcmask 523264
      %v678 = vsel %vm676, %v648, 0
      %v681 = vsel %vm676, %v649, 0
      %v684 = vsel %vm676, %v650, 0
      %v687 = vsel %vm676, %v651, 0
      %689 = vmatprep.subr.bf16.mxu0 0
      %690 = vmatpush1.bf16.msra.mxu0 %v668
      %691 = vmatprep.subr.bf16.mxu0 0
      %692 = vmatpush1.bf16.msra.mxu0 %v669
      %693 = vmatprep.subr.bf16.mxu0 0
      %694 = vmatpush1.bf16.msra.mxu0 %v670
      %695 = vmatprep.subr.bf16.mxu0 0
      %696 = vmatpush1.bf16.msra.mxu0 %v671
      %697 = vmatprep.subr.bf16.mxu0 0
      %698 = vmatpush1.bf16.msra.mxu0 0
      %699 = vmatprep.subr.bf16.mxu0 0
      %700 = vmatpush1.bf16.msra.mxu0 0
      %701 = vmatprep.subr.bf16.mxu0 0
      %702 = vmatpush1.bf16.msra.mxu0 0
      %703 = vmatprep.subr.bf16.mxu0 0
      %704 = vmatpush1.bf16.msra.mxu0 0
      %705 = vmatprep.subr.bf16.mxu0 0
      %706 = vmatpush1.bf16.msra.mxu0 0
      %707 = vmatprep.subr.bf16.mxu0 0
      %708 = vmatpush1.bf16.msra.mxu0 0
      %709 = vmatprep.subr.bf16.mxu0 0
      %710 = vmatpush1.bf16.msra.mxu0 0
      %711 = vmatprep.subr.bf16.mxu0 0
      %712 = vmatpush1.bf16.msra.mxu0 0
      %713 = vmatprep.subr.bf16.mxu0 0
      %714 = vmatpush1.bf16.msra.mxu0 0
      %715 = vmatprep.subr.bf16.mxu0 0
      %716 = vmatpush1.bf16.msra.mxu0 0
      %717 = vmatprep.subr.bf16.mxu0 0
      %718 = vmatpush1.bf16.msra.mxu0 0
      %719 = vmatprep.subr.bf16.mxu0 0
      %720 = vmatpush1.bf16.msra.mxu0 0
      %721 = vmatprep.mubr.bf16.mxu0 0
      %722 = vmatmul.mubr.bf16.gmra.mrb[0].mxu0 %v678
      %v723 = vpop.f32.mrb[0].mxu0
      %v724 = vadd.f32 0.0, %v723
      %v725 = vpop.f32.mrb[0].mxu0
      %v726 = vpop.f32.mrb[0].mxu0
      %v727 = vadd.f32 0.0, %v726
      %v728 = vpop.f32.mrb[0].mxu0
      %729 = vmatprep.mubr.bf16.mxu0 0
      %730 = vmatmul.mubr.bf16.gmra.mrb[0].mxu0 %v681
      %v731 = vpop.f32.mrb[0].mxu0
      %v732 = vadd.f32 0.0, %v731
      %v733 = vpop.f32.mrb[0].mxu0
      %v734 = vpop.f32.mrb[0].mxu0
      %v735 = vadd.f32 0.0, %v734
      %v736 = vpop.f32.mrb[0].mxu0
      %737 = vmatprep.mubr.bf16.mxu0 0
      %738 = vmatmul.mubr.bf16.gmra.mrb[0].mxu0 %v684
      %v739 = vpop.f32.mrb[0].mxu0
      %v740 = vadd.f32 0.0, %v739
      %v741 = vpop.f32.mrb[0].mxu0
      %v742 = vpop.f32.mrb[0].mxu0
      %v743 = vadd.f32 0.0, %v742
      %v744 = vpop.f32.mrb[0].mxu0
      %745 = vmatprep.mubr.bf16.mxu0 0
      %746 = vmatmul.mubr.bf16.gmra.mrb[0].mxu0 %v687
      %v747 = vpop.f32.mrb[0].mxu0
      %v748 = vadd.f32 0.0, %v747
      %v749 = vpop.f32.mrb[0].mxu0
      %v750 = vpop.f32.mrb[0].mxu0
      %v751 = vadd.f32 0.0, %v750
      %v752 = vpop.f32.mrb[0].mxu0
      %753 = vdwg.mxu0
      %v762 = vunpack.c.l.b16 %v492
      %v763 = vunpack.c.l.b16 %v493
      %v764 = vunpack.c.l.b16 %v494
      %v765 = vunpack.c.l.b16 %v495
      %v766 = vunpack.c.l.b16 %v496
      %v767 = vunpack.c.l.b16 %v497
      %v768 = vunpack.c.l.b16 %v498
      %v769 = vunpack.c.l.b16 %v499
      %v770 = vpack.c.b16 %v763, %v762
      %v771 = vpack.c.b16 %v765, %v764
      %v772 = vpack.c.b16 %v767, %v766
      %v773 = vpack.c.b16 %v769, %v768
      %v782 = vunpack.c.l.b16 %v500
      %v783 = vunpack.c.l.b16 %v501
      %v784 = vunpack.c.l.b16 %v502
      %v785 = vunpack.c.l.b16 %v503
      %v786 = vunpack.c.l.b16 %v504
      %v787 = vunpack.c.l.b16 %v505
      %v788 = vunpack.c.l.b16 %v506
      %v789 = vunpack.c.l.b16 %v507
      %v790 = vpack.c.b16 %v783, %v782
      %v791 = vpack.c.b16 %v785, %v784
      %v792 = vpack.c.b16 %v787, %v786
      %v793 = vpack.c.b16 %v789, %v788
      %v799 = vsel %vm676, %v770, 0
      %v802 = vsel %vm676, %v771, 0
      %v805 = vsel %vm676, %v772, 0
      %v808 = vsel %vm676, %v773, 0
      %810 = vmatprep.subr.bf16.mxu0 0
      %811 = vmatpush1.bf16.msra.mxu0 %v790
      %812 = vmatprep.subr.bf16.mxu0 0
      %813 = vmatpush1.bf16.msra.mxu0 %v791
      %814 = vmatprep.subr.bf16.mxu0 0
      %815 = vmatpush1.bf16.msra.mxu0 %v792
      %816 = vmatprep.subr.bf16.mxu0 0
      %817 = vmatpush1.bf16.msra.mxu0 %v793
      %818 = vmatprep.subr.bf16.mxu0 0
      %819 = vmatpush1.bf16.msra.mxu0 0
      %820 = vmatprep.subr.bf16.mxu0 0
      %821 = vmatpush1.bf16.msra.mxu0 0
      %822 = vmatprep.subr.bf16.mxu0 0
      %823 = vmatpush1.bf16.msra.mxu0 0
      %824 = vmatprep.subr.bf16.mxu0 0
      %825 = vmatpush1.bf16.msra.mxu0 0
      %826 = vmatprep.subr.bf16.mxu0 0
      %827 = vmatpush1.bf16.msra.mxu0 0
      %828 = vmatprep.subr.bf16.mxu0 0
      %829 = vmatpush1.bf16.msra.mxu0 0
      %830 = vmatprep.subr.bf16.mxu0 0
      %831 = vmatpush1.bf16.msra.mxu0 0
      %832 = vmatprep.subr.bf16.mxu0 0
      %833 = vmatpush1.bf16.msra.mxu0 0
      %834 = vmatprep.subr.bf16.mxu0 0
      %835 = vmatpush1.bf16.msra.mxu0 0
      %836 = vmatprep.subr.bf16.mxu0 0
      %837 = vmatpush1.bf16.msra.mxu0 0
      %838 = vmatprep.subr.bf16.mxu0 0
      %839 = vmatpush1.bf16.msra.mxu0 0
      %840 = vmatprep.subr.bf16.mxu0 0
      %841 = vmatpush1.bf16.msra.mxu0 0
      %842 = vmatprep.mubr.bf16.mxu0 0
      %843 = vmatmul.mubr.bf16.gmra.mrb[0].mxu0 %v799
      %v844 = vpop.f32.mrb[0].mxu0
      %v845 = vadd.f32 %v724, %v844
      %v846 = vpop.f32.mrb[0].mxu0
      %v847 = vpop.f32.mrb[0].mxu0
      %v848 = vadd.f32 %v727, %v847
      %v849 = vpop.f32.mrb[0].mxu0
      %850 = vmatprep.mubr.bf16.mxu0 0
      %851 = vmatmul.mubr.bf16.gmra.mrb[0].mxu0 %v802
      %v852 = vpop.f32.mrb[0].mxu0
      %v853 = vadd.f32 %v732, %v852
      %v854 = vpop.f32.mrb[0].mxu0
      %v855 = vpop.f32.mrb[0].mxu0
      %v856 = vadd.f32 %v735, %v855
      %v857 = vpop.f32.mrb[0].mxu0
      %858 = vmatprep.mubr.bf16.mxu0 0
      %859 = vmatmul.mubr.bf16.gmra.mrb[0].mxu0 %v805
      %v860 = vpop.f32.mrb[0].mxu0
      %v861 = vadd.f32 %v740, %v860
      %v862 = vpop.f32.mrb[0].mxu0
      %v863 = vpop.f32.mrb[0].mxu0
      %v864 = vadd.f32 %v743, %v863
      %v865 = vpop.f32.mrb[0].mxu0
      %866 = vmatprep.mubr.bf16.mxu0 0
      %867 = vmatmul.mubr.bf16.gmra.mrb[0].mxu0 %v808
      %v868 = vpop.f32.mrb[0].mxu0
      %v869 = vadd.f32 %v748, %v868
      %v870 = vpop.f32.mrb[0].mxu0
      %v871 = vpop.f32.mrb[0].mxu0
      %v872 = vadd.f32 %v751, %v871
      %v873 = vpop.f32.mrb[0].mxu0
      %874 = vdwg.mxu0
      %v875 = vld [vmem:[#allocation2] sm:$0xe]
      %v876 = vld [vmem:[#allocation2 + $0x8] sm:$0xe]
      %v877 = vld [vmem:[#allocation2 + $0x10] sm:$0xe]
      %v878 = vld [vmem:[#allocation2 + $0x18] sm:$0xe]
      %v879 = vld [vmem:[#allocation2 + $0x20] sm:$0xe]
      %v880 = vld [vmem:[#allocation2 + $0x28] sm:$0xe]
      %v881 = vld [vmem:[#allocation2 + $0x30] sm:$0xe]
      %v882 = vld [vmem:[#allocation2 + $0x38] sm:$0xe]
      %vm899 = vcmask 1042432
      %vm900 = vcmask 1046532
      %vm901 = vmor %vm899, %vm900
      %v902 = vrot.slane %v875, 5
      %v903 = vrot.slane %v902, 4
      %v904 = vrot.slane %v508, 5
      %v905 = vsel %vm901, %v903, %v904
      %v906 = vrot.slane %v876, 5
      %v907 = vrot.slane %v906, 4
      %v908 = vrot.slane %v509, 5
      %v909 = vsel %vm901, %v907, %v908
      %v910 = vrot.slane %v877, 5
      %v911 = vrot.slane %v910, 4
      %v912 = vrot.slane %v510, 5
      %v913 = vsel %vm901, %v911, %v912
      %v914 = vrot.slane %v878, 5
      %v915 = vrot.slane %v914, 4
      %v916 = vrot.slane %v511, 5
      %v917 = vsel %vm901, %v915, %v916
      %v918 = vrot.slane %v879, 5
      %v919 = vrot.slane %v918, 4
      %v920 = vrot.slane %v512, 5
      %v921 = vsel %vm901, %v919, %v920
      %v922 = vrot.slane %v880, 5
      %v923 = vrot.slane %v922, 4
      %v924 = vrot.slane %v513, 5
      %v925 = vsel %vm901, %v923, %v924
      %v926 = vrot.slane %v881, 5
      %v927 = vrot.slane %v926, 4
      %v928 = vrot.slane %v514, 5
      %v929 = vsel %vm901, %v927, %v928
      %v930 = vrot.slane %v882, 5
      %v931 = vrot.slane %v930, 4
      %v932 = vrot.slane %v515, 5
      %v933 = vsel %vm901, %v931, %v932
      %s934 = scalar_lea.vmem %s3, 64
      %v935 = vld [vmem:[%s934] sm:$0xf]
      %v936 = vld [vmem:[%s934 + $0x4] sm:$0xf]
      %v937 = vld [vmem:[%s934 + $0x8] sm:$0xf]
      %v938 = vld [vmem:[%s934 + $0xc] sm:$0xf]
      %v939 = vld [vmem:[%s934 + $0x10] sm:$0xf]
      %v940 = vld [vmem:[%s934 + $0x14] sm:$0xf]
      %v941 = vld [vmem:[%s934 + $0x18] sm:$0xf]
      %v942 = vld [vmem:[%s934 + $0x1c] sm:$0xf]
      %v943 = vunpack.c.l.b16 %v905
      %v944 = vunpack.c.l.b16 %v909
      %v945 = vunpack.c.l.b16 %v913
      %v946 = vunpack.c.l.b16 %v917
      %v947 = vunpack.c.l.b16 %v921
      %v948 = vunpack.c.l.b16 %v925
      %v949 = vunpack.c.l.b16 %v929
      %v950 = vunpack.c.l.b16 %v933
      %v951 = vpack.c.b16 %v944, %v943
      %v952 = vpack.c.b16 %v946, %v945
      %v953 = vpack.c.b16 %v948, %v947
      %v954 = vpack.c.b16 %v950, %v949
      %v963 = vunpack.c.l.b16 %v935
      %v964 = vunpack.c.l.b16 %v936
      %v965 = vunpack.c.l.b16 %v937
      %v966 = vunpack.c.l.b16 %v938
      %v967 = vunpack.c.l.b16 %v939
      %v968 = vunpack.c.l.b16 %v940
      %v969 = vunpack.c.l.b16 %v941
      %v970 = vunpack.c.l.b16 %v942
      %v971 = vpack.c.b16 %v964, %v963
      %v972 = vpack.c.b16 %v966, %v965
      %v973 = vpack.c.b16 %v968, %v967
      %v974 = vpack.c.b16 %v970, %v969
      %v980 = vsel %vm676, %v951, 0
      %v983 = vsel %vm676, %v952, 0
      %v986 = vsel %vm676, %v953, 0
      %v989 = vsel %vm676, %v954, 0
      %991 = vmatprep.subr.bf16.mxu0 0
      %992 = vmatpush1.bf16.msra.mxu0 %v971
      %993 = vmatprep.subr.bf16.mxu0 0
      %994 = vmatpush1.bf16.msra.mxu0 %v972
      %995 = vmatprep.subr.bf16.mxu0 0
      %996 = vmatpush1.bf16.msra.mxu0 %v973
      %997 = vmatprep.subr.bf16.mxu0 0
      %998 = vmatpush1.bf16.msra.mxu0 %v974
      %999 = vmatprep.subr.bf16.mxu0 0
      %1000 = vmatpush1.bf16.msra.mxu0 0
      %1001 = vmatprep.subr.bf16.mxu0 0
      %1002 = vmatpush1.bf16.msra.mxu0 0
      %1003 = vmatprep.subr.bf16.mxu0 0
      %1004 = vmatpush1.bf16.msra.mxu0 0
      %1005 = vmatprep.subr.bf16.mxu0 0
      %1006 = vmatpush1.bf16.msra.mxu0 0
      %1007 = vmatprep.subr.bf16.mxu0 0
      %1008 = vmatpush1.bf16.msra.mxu0 0
      %1009 = vmatprep.subr.bf16.mxu0 0
      %1010 = vmatpush1.bf16.msra.mxu0 0
      %1011 = vmatprep.subr.bf16.mxu0 0
      %1012 = vmatpush1.bf16.msra.mxu0 0
      %1013 = vmatprep.subr.bf16.mxu0 0
      %1014 = vmatpush1.bf16.msra.mxu0 0
      %1015 = vmatprep.subr.bf16.mxu0 0
      %1016 = vmatpush1.bf16.msra.mxu0 0
      %1017 = vmatprep.subr.bf16.mxu0 0
      %1018 = vmatpush1.bf16.msra.mxu0 0
      %1019 = vmatprep.subr.bf16.mxu0 0
      %1020 = vmatpush1.bf16.msra.mxu0 0
      %1021 = vmatprep.subr.bf16.mxu0 0
      %1022 = vmatpush1.bf16.msra.mxu0 0
      %1023 = vmatprep.mubr.bf16.mxu0 0
      %1024 = vmatmul.mubr.bf16.gmra.mrb[0].mxu0 %v980
      %v1025 = vpop.f32.mrb[0].mxu0
      %v1026 = vadd.f32 0.0, %v1025
      %v1027 = vpop.f32.mrb[0].mxu0
      %v1028 = vpop.f32.mrb[0].mxu0
      %v1029 = vadd.f32 0.0, %v1028
      %v1030 = vpop.f32.mrb[0].mxu0
      %1031 = vmatprep.mubr.bf16.mxu0 0
      %1032 = vmatmul.mubr.bf16.gmra.mrb[0].mxu0 %v983
      %v1033 = vpop.f32.mrb[0].mxu0
      %v1034 = vadd.f32 0.0, %v1033
      %v1035 = vpop.f32.mrb[0].mxu0
      %v1036 = vpop.f32.mrb[0].mxu0
      %v1037 = vadd.f32 0.0, %v1036
      %v1038 = vpop.f32.mrb[0].mxu0
      %1039 = vmatprep.mubr.bf16.mxu0 0
      %1040 = vmatmul.mubr.bf16.gmra.mrb[0].mxu0 %v986
      %v1041 = vpop.f32.mrb[0].mxu0
      %v1042 = vadd.f32 0.0, %v1041
      %v1043 = vpop.f32.mrb[0].mxu0
      %v1044 = vpop.f32.mrb[0].mxu0
      %v1045 = vadd.f32 0.0, %v1044
      %v1046 = vpop.f32.mrb[0].mxu0
      %1047 = vmatprep.mubr.bf16.mxu0 0
      %1048 = vmatmul.mubr.bf16.gmra.mrb[0].mxu0 %v989
      %v1049 = vpop.f32.mrb[0].mxu0
      %v1050 = vadd.f32 0.0, %v1049
      %v1051 = vpop.f32.mrb[0].mxu0
      %v1052 = vpop.f32.mrb[0].mxu0
      %v1053 = vadd.f32 0.0, %v1052
      %v1054 = vpop.f32.mrb[0].mxu0
      %1055 = vdwg.mxu0
      %v1056 = vadd.f32 %v845, %v1026
      %v1057 = vadd.f32 %v848, %v1029
      %v1058 = vadd.f32 %v853, %v1034
      %v1059 = vadd.f32 %v856, %v1037
      %v1060 = vadd.f32 %v861, %v1042
      %v1061 = vadd.f32 %v864, %v1045
      %v1062 = vadd.f32 %v869, %v1050
      %v1063 = vadd.f32 %v872, %v1053
      %v1064 = vld [vmem:[%s475] sm:$0xf]
      %v1065 = vld [vmem:[%s475 + $0x8] sm:$0xf]
      %v1066 = vld [vmem:[%s475 + $0x10] sm:$0xf]
      %v1067 = vld [vmem:[%s475 + $0x18] sm:$0xf]
      %v1068 = vld [vmem:[%s475 + $0x20] sm:$0xf]
      %v1069 = vld [vmem:[%s475 + $0x28] sm:$0xf]
      %v1070 = vld [vmem:[%s475 + $0x30] sm:$0xf]
      %v1071 = vld [vmem:[%s475 + $0x38] sm:$0xf]
      %s1072 = scalar_lea.vmem %s3, 96
      %v1073 = vld [vmem:[%s1072] sm:$0xf]
      %v1074 = vld [vmem:[%s1072 + $0x4] sm:$0xf]
      %v1075 = vld [vmem:[%s1072 + $0x8] sm:$0xf]
      %v1076 = vld [vmem:[%s1072 + $0xc] sm:$0xf]
      %v1077 = vld [vmem:[%s1072 + $0x10] sm:$0xf]
      %v1078 = vld [vmem:[%s1072 + $0x14] sm:$0xf]
      %v1079 = vld [vmem:[%s1072 + $0x18] sm:$0xf]
      %v1080 = vld [vmem:[%s1072 + $0x1c] sm:$0xf]
      %v1089 = vunpack.c.l.b16 %v1064
      %v1090 = vunpack.c.l.b16 %v1065
      %v1091 = vunpack.c.l.b16 %v1066
      %v1092 = vunpack.c.l.b16 %v1067
      %v1093 = vunpack.c.l.b16 %v1068
      %v1094 = vunpack.c.l.b16 %v1069
      %v1095 = vunpack.c.l.b16 %v1070
      %v1096 = vunpack.c.l.b16 %v1071
      %v1097 = vpack.c.b16 %v1090, %v1089
      %v1098 = vpack.c.b16 %v1092, %v1091
      %v1099 = vpack.c.b16 %v1094, %v1093
      %v1100 = vpack.c.b16 %v1096, %v1095
      %v1109 = vunpack.c.l.b16 %v1073
      %v1110 = vunpack.c.l.b16 %v1074
      %v1111 = vunpack.c.l.b16 %v1075
      %v1112 = vunpack.c.l.b16 %v1076
      %v1113 = vunpack.c.l.b16 %v1077
      %v1114 = vunpack.c.l.b16 %v1078
      %v1115 = vunpack.c.l.b16 %v1079
      %v1116 = vunpack.c.l.b16 %v1080
      %v1117 = vpack.c.b16 %v1110, %v1109
      %v1118 = vpack.c.b16 %v1112, %v1111
      %v1119 = vpack.c.b16 %v1114, %v1113
      %v1120 = vpack.c.b16 %v1116, %v1115
      %v1126 = vsel %vm676, %v1097, 0
      %v1129 = vsel %vm676, %v1098, 0
      %v1132 = vsel %vm676, %v1099, 0
      %v1135 = vsel %vm676, %v1100, 0
      %1137 = vmatprep.subr.bf16.mxu0 0
      %1138 = vmatpush1.bf16.msra.mxu0 %v1117
      %1139 = vmatprep.subr.bf16.mxu0 0
      %1140 = vmatpush1.bf16.msra.mxu0 %v1118
      %1141 = vmatprep.subr.bf16.mxu0 0
      %1142 = vmatpush1.bf16.msra.mxu0 %v1119
      %1143 = vmatprep.subr.bf16.mxu0 0
      %1144 = vmatpush1.bf16.msra.mxu0 %v1120
      %1145 = vmatprep.subr.bf16.mxu0 0
      %1146 = vmatpush1.bf16.msra.mxu0 0
      %1147 = vmatprep.subr.bf16.mxu0 0
      %1148 = vmatpush1.bf16.msra.mxu0 0
      %1149 = vmatprep.subr.bf16.mxu0 0
      %1150 = vmatpush1.bf16.msra.mxu0 0
      %1151 = vmatprep.subr.bf16.mxu0 0
      %1152 = vmatpush1.bf16.msra.mxu0 0
      %1153 = vmatprep.subr.bf16.mxu0 0
      %1154 = vmatpush1.bf16.msra.mxu0 0
      %1155 = vmatprep.subr.bf16.mxu0 0
      %1156 = vmatpush1.bf16.msra.mxu0 0
      %1157 = vmatprep.subr.bf16.mxu0 0
      %1158 = vmatpush1.bf16.msra.mxu0 0
      %1159 = vmatprep.subr.bf16.mxu0 0
      %1160 = vmatpush1.bf16.msra.mxu0 0
      %1161 = vmatprep.subr.bf16.mxu0 0
      %1162 = vmatpush1.bf16.msra.mxu0 0
      %1163 = vmatprep.subr.bf16.mxu0 0
      %1164 = vmatpush1.bf16.msra.mxu0 0
      %1165 = vmatprep.subr.bf16.mxu0 0
      %1166 = vmatpush1.bf16.msra.mxu0 0
      %1167 = vmatprep.subr.bf16.mxu0 0
      %1168 = vmatpush1.bf16.msra.mxu0 0
      %1169 = vmatprep.mubr.bf16.mxu0 0
      %1170 = vmatmul.mubr.bf16.gmra.mrb[0].mxu0 %v1126
      %v1171 = vpop.f32.mrb[0].mxu0
      %v1172 = vadd.f32 0.0, %v1171
      %v1173 = vpop.f32.mrb[0].mxu0
      %v1174 = vpop.f32.mrb[0].mxu0
      %v1175 = vadd.f32 0.0, %v1174
      %v1176 = vpop.f32.mrb[0].mxu0
      %1177 = vmatprep.mubr.bf16.mxu0 0
      %1178 = vmatmul.mubr.bf16.gmra.mrb[0].mxu0 %v1129
      %v1179 = vpop.f32.mrb[0].mxu0
      %v1180 = vadd.f32 0.0, %v1179
      %v1181 = vpop.f32.mrb[0].mxu0
      %v1182 = vpop.f32.mrb[0].mxu0
      %v1183 = vadd.f32 0.0, %v1182
      %v1184 = vpop.f32.mrb[0].mxu0
      %1185 = vmatprep.mubr.bf16.mxu0 0
      %1186 = vmatmul.mubr.bf16.gmra.mrb[0].mxu0 %v1132
      %v1187 = vpop.f32.mrb[0].mxu0
      %v1188 = vadd.f32 0.0, %v1187
      %v1189 = vpop.f32.mrb[0].mxu0
      %v1190 = vpop.f32.mrb[0].mxu0
      %v1191 = vadd.f32 0.0, %v1190
      %v1192 = vpop.f32.mrb[0].mxu0
      %1193 = vmatprep.mubr.bf16.mxu0 0
      %1194 = vmatmul.mubr.bf16.gmra.mrb[0].mxu0 %v1135
      %v1195 = vpop.f32.mrb[0].mxu0
      %v1196 = vadd.f32 0.0, %v1195
      %v1197 = vpop.f32.mrb[0].mxu0
      %v1198 = vpop.f32.mrb[0].mxu0
      %v1199 = vadd.f32 0.0, %v1198
      %v1200 = vpop.f32.mrb[0].mxu0
      %1201 = vdwg.mxu0
      %v1202 = vadd.f32 %v1056, %v1172
      %v1203 = vadd.f32 %v1057, %v1175
      %v1204 = vadd.f32 %v1058, %v1180
      %v1205 = vadd.f32 %v1059, %v1183
      %v1206 = vadd.f32 %v1060, %v1188
      %v1207 = vadd.f32 %v1061, %v1191
      %v1208 = vadd.f32 %v1062, %v1196
      %v1209 = vadd.f32 %v1063, %v1199
      %v1210 = vld [vmem:[%s475] sm:$0xf]
      %v1211 = vld [vmem:[%s475 + $0x4] sm:$0x1]
      %v1212 = vld [vmem:[%s475 + $0x8] sm:$0xf]
      %v1213 = vld [vmem:[%s475 + $0xc] sm:$0x1]
      %v1214 = vld [vmem:[%s475 + $0x10] sm:$0xf]
      %v1215 = vld [vmem:[%s475 + $0x14] sm:$0x1]
      %v1216 = vld [vmem:[%s475 + $0x18] sm:$0xf]
      %v1217 = vld [vmem:[%s475 + $0x1c] sm:$0x1]
      %v1218 = vld [vmem:[%s475 + $0x20] sm:$0xf]
      %v1219 = vld [vmem:[%s475 + $0x24] sm:$0x1]
      %v1220 = vld [vmem:[%s475 + $0x28] sm:$0xf]
      %v1221 = vld [vmem:[%s475 + $0x2c] sm:$0x1]
      %v1222 = vld [vmem:[%s475 + $0x30] sm:$0xf]
      %v1223 = vld [vmem:[%s475 + $0x34] sm:$0x1]
      %v1224 = vld [vmem:[%s475 + $0x38] sm:$0xf]
      %v1225 = vld [vmem:[%s475 + $0x3c] sm:$0x1]
      %v1227 = vshrl.u32 %v1210, 16
      %v1229 = vrot.slane %v1227, 4
      %v1230 = vshll.u32 %v1210, 16
      %v1232 = vrot.slane %v1230, 5
      %v1233 = vor.u32 %v1229, %v1232
      %v1234 = vrot.slane %v1233, 4
      %v1236 = vshll.u32 %v1211, 16
      %v1238 = vrot.slane %v1236, 5
      %v1239 = vsel %vm518, %v1234, %v1238
      %v1241 = vshrl.u32 %v1212, 16
      %v1243 = vrot.slane %v1241, 4
      %v1244 = vshll.u32 %v1212, 16
      %v1246 = vrot.slane %v1244, 5
      %v1247 = vor.u32 %v1243, %v1246
      %v1248 = vrot.slane %v1247, 4
      %v1250 = vshll.u32 %v1213, 16
      %v1252 = vrot.slane %v1250, 5
      %v1253 = vsel %vm518, %v1248, %v1252
      %v1255 = vshrl.u32 %v1214, 16
      %v1257 = vrot.slane %v1255, 4
      %v1258 = vshll.u32 %v1214, 16
      %v1260 = vrot.slane %v1258, 5
      %v1261 = vor.u32 %v1257, %v1260
      %v1262 = vrot.slane %v1261, 4
      %v1264 = vshll.u32 %v1215, 16
      %v1266 = vrot.slane %v1264, 5
      %v1267 = vsel %vm518, %v1262, %v1266
      %v1269 = vshrl.u32 %v1216, 16
      %v1271 = vrot.slane %v1269, 4
      %v1272 = vshll.u32 %v1216, 16
      %v1274 = vrot.slane %v1272, 5
      %v1275 = vor.u32 %v1271, %v1274
      %v1276 = vrot.slane %v1275, 4
      %v1278 = vshll.u32 %v1217, 16
      %v1280 = vrot.slane %v1278, 5
      %v1281 = vsel %vm518, %v1276, %v1280
      %v1283 = vshrl.u32 %v1218, 16
      %v1285 = vrot.slane %v1283, 4
      %v1286 = vshll.u32 %v1218, 16
      %v1288 = vrot.slane %v1286, 5
      %v1289 = vor.u32 %v1285, %v1288
      %v1290 = vrot.slane %v1289, 4
      %v1292 = vshll.u32 %v1219, 16
      %v1294 = vrot.slane %v1292, 5
      %v1295 = vsel %vm518, %v1290, %v1294
      %v1297 = vshrl.u32 %v1220, 16
      %v1299 = vrot.slane %v1297, 4
      %v1300 = vshll.u32 %v1220, 16
      %v1302 = vrot.slane %v1300, 5
      %v1303 = vor.u32 %v1299, %v1302
      %v1304 = vrot.slane %v1303, 4
      %v1306 = vshll.u32 %v1221, 16
      %v1308 = vrot.slane %v1306, 5
      %v1309 = vsel %vm518, %v1304, %v1308
      %v1311 = vshrl.u32 %v1222, 16
      %v1313 = vrot.slane %v1311, 4
      %v1314 = vshll.u32 %v1222, 16
      %v1316 = vrot.slane %v1314, 5
      %v1317 = vor.u32 %v1313, %v1316
      %v1318 = vrot.slane %v1317, 4
      %v1320 = vshll.u32 %v1223, 16
      %v1322 = vrot.slane %v1320, 5
      %v1323 = vsel %vm518, %v1318, %v1322
      %v1325 = vshrl.u32 %v1224, 16
      %v1327 = vrot.slane %v1325, 4
      %v1328 = vshll.u32 %v1224, 16
      %v1330 = vrot.slane %v1328, 5
      %v1331 = vor.u32 %v1327, %v1330
      %v1332 = vrot.slane %v1331, 4
      %v1334 = vshll.u32 %v1225, 16
      %v1336 = vrot.slane %v1334, 5
      %v1337 = vsel %vm518, %v1332, %v1336
      %s1338 = scalar_lea.vmem %s3, 128
      %v1339 = vld [vmem:[%s1338] sm:$0xf]
      %v1340 = vld [vmem:[%s1338 + $0x4] sm:$0xf]
      %v1341 = vld [vmem:[%s1338 + $0x8] sm:$0xf]
      %v1342 = vld [vmem:[%s1338 + $0xc] sm:$0xf]
      %v1343 = vld [vmem:[%s1338 + $0x10] sm:$0xf]
      %v1344 = vld [vmem:[%s1338 + $0x14] sm:$0xf]
      %v1345 = vld [vmem:[%s1338 + $0x18] sm:$0xf]
      %v1346 = vld [vmem:[%s1338 + $0x1c] sm:$0xf]
      %v1347 = vunpack.c.l.b16 %v1239
      %v1348 = vunpack.c.l.b16 %v1253
      %v1349 = vunpack.c.l.b16 %v1267
      %v1350 = vunpack.c.l.b16 %v1281
      %v1351 = vunpack.c.l.b16 %v1295
      %v1352 = vunpack.c.l.b16 %v1309
      %v1353 = vunpack.c.l.b16 %v1323
      %v1354 = vunpack.c.l.b16 %v1337
      %v1355 = vpack.c.b16 %v1348, %v1347
      %v1356 = vpack.c.b16 %v1350, %v1349
      %v1357 = vpack.c.b16 %v1352, %v1351
      %v1358 = vpack.c.b16 %v1354, %v1353
      %v1367 = vunpack.c.l.b16 %v1339
      %v1368 = vunpack.c.l.b16 %v1340
      %v1369 = vunpack.c.l.b16 %v1341
      %v1370 = vunpack.c.l.b16 %v1342
      %v1371 = vunpack.c.l.b16 %v1343
      %v1372 = vunpack.c.l.b16 %v1344
      %v1373 = vunpack.c.l.b16 %v1345
      %v1374 = vunpack.c.l.b16 %v1346
      %v1375 = vpack.c.b16 %v1368, %v1367
      %v1376 = vpack.c.b16 %v1370, %v1369
      %v1377 = vpack.c.b16 %v1372, %v1371
      %v1378 = vpack.c.b16 %v1374, %v1373
      %v1384 = vsel %vm676, %v1355, 0
      %v1387 = vsel %vm676, %v1356, 0
      %v1390 = vsel %vm676, %v1357, 0
      %v1393 = vsel %vm676, %v1358, 0
      %1395 = vmatprep.subr.bf16.mxu0 0
      %1396 = vmatpush1.bf16.msra.mxu0 %v1375
      %1397 = vmatprep.subr.bf16.mxu0 0
      %1398 = vmatpush1.bf16.msra.mxu0 %v1376
      %1399 = vmatprep.subr.bf16.mxu0 0
      %1400 = vmatpush1.bf16.msra.mxu0 %v1377
      %1401 = vmatprep.subr.bf16.mxu0 0
      %1402 = vmatpush1.bf16.msra.mxu0 %v1378
      %1403 = vmatprep.subr.bf16.mxu0 0
      %1404 = vmatpush1.bf16.msra.mxu0 0
      %1405 = vmatprep.subr.bf16.mxu0 0
      %1406 = vmatpush1.bf16.msra.mxu0 0
      %1407 = vmatprep.subr.bf16.mxu0 0
      %1408 = vmatpush1.bf16.msra.mxu0 0
      %1409 = vmatprep.subr.bf16.mxu0 0
      %1410 = vmatpush1.bf16.msra.mxu0 0
      %1411 = vmatprep.subr.bf16.mxu0 0
      %1412 = vmatpush1.bf16.msra.mxu0 0
      %1413 = vmatprep.subr.bf16.mxu0 0
      %1414 = vmatpush1.bf16.msra.mxu0 0
      %1415 = vmatprep.subr.bf16.mxu0 0
      %1416 = vmatpush1.bf16.msra.mxu0 0
      %1417 = vmatprep.subr.bf16.mxu0 0
      %1418 = vmatpush1.bf16.msra.mxu0 0
      %1419 = vmatprep.subr.bf16.mxu0 0
      %1420 = vmatpush1.bf16.msra.mxu0 0
      %1421 = vmatprep.subr.bf16.mxu0 0
      %1422 = vmatpush1.bf16.msra.mxu0 0
      %1423 = vmatprep.subr.bf16.mxu0 0
      %1424 = vmatpush1.bf16.msra.mxu0 0
      %1425 = vmatprep.subr.bf16.mxu0 0
      %1426 = vmatpush1.bf16.msra.mxu0 0
      %1427 = vmatprep.mubr.bf16.mxu0 0
      %1428 = vmatmul.mubr.bf16.gmra.mrb[0].mxu0 %v1384
      %v1429 = vpop.f32.mrb[0].mxu0
      %v1430 = vadd.f32 0.0, %v1429
      %v1431 = vpop.f32.mrb[0].mxu0
      %v1432 = vpop.f32.mrb[0].mxu0
      %v1433 = vadd.f32 0.0, %v1432
      %v1434 = vpop.f32.mrb[0].mxu0
      %1435 = vmatprep.mubr.bf16.mxu0 0
      %1436 = vmatmul.mubr.bf16.gmra.mrb[0].mxu0 %v1387
      %v1437 = vpop.f32.mrb[0].mxu0
      %v1438 = vadd.f32 0.0, %v1437
      %v1439 = vpop.f32.mrb[0].mxu0
      %v1440 = vpop.f32.mrb[0].mxu0
      %v1441 = vadd.f32 0.0, %v1440
      %v1442 = vpop.f32.mrb[0].mxu0
      %1443 = vmatprep.mubr.bf16.mxu0 0
      %1444 = vmatmul.mubr.bf16.gmra.mrb[0].mxu0 %v1390
      %v1445 = vpop.f32.mrb[0].mxu0
      %v1446 = vadd.f32 0.0, %v1445
      %v1447 = vpop.f32.mrb[0].mxu0
      %v1448 = vpop.f32.mrb[0].mxu0
      %v1449 = vadd.f32 0.0, %v1448
      %v1450 = vpop.f32.mrb[0].mxu0
      %1451 = vmatprep.mubr.bf16.mxu0 0
      %1452 = vmatmul.mubr.bf16.gmra.mrb[0].mxu0 %v1393
      %v1453 = vpop.f32.mrb[0].mxu0
      %v1454 = vadd.f32 0.0, %v1453
      %v1455 = vpop.f32.mrb[0].mxu0
      %v1456 = vpop.f32.mrb[0].mxu0
      %v1457 = vadd.f32 0.0, %v1456
      %v1458 = vpop.f32.mrb[0].mxu0
      %1459 = vdwg.mxu0
      %v1460 = vadd.f32 %v1202, %v1430
      %v1461 = vadd.f32 %v1203, %v1433
      %v1462 = vadd.f32 %v1204, %v1438
      %v1463 = vadd.f32 %v1205, %v1441
      %v1464 = vadd.f32 %v1206, %v1446
      %v1465 = vadd.f32 %v1207, %v1449
      %v1466 = vadd.f32 %v1208, %v1454
      %v1467 = vadd.f32 %v1209, %v1457
      %v1468 = vld [vmem:[%s475] sm:$0xe]
      %v1469 = vld [vmem:[%s475 + $0x8] sm:$0xe]
      %v1470 = vld [vmem:[%s475 + $0x10] sm:$0xe]
      %v1471 = vld [vmem:[%s475 + $0x18] sm:$0xe]
      %v1472 = vld [vmem:[%s475 + $0x20] sm:$0xe]
      %v1473 = vld [vmem:[%s475 + $0x28] sm:$0xe]
      %v1474 = vld [vmem:[%s475 + $0x30] sm:$0xe]
      %v1475 = vld [vmem:[%s475 + $0x38] sm:$0xe]
      %v1492 = vrot.slane %v1468, 5
      %v1493 = vrot.slane %v1492, 4
      %v1494 = vrot.slane %v1211, 5
      %v1495 = vsel %vm901, %v1493, %v1494
      %v1496 = vrot.slane %v1469, 5
      %v1497 = vrot.slane %v1496, 4
      %v1498 = vrot.slane %v1213, 5
      %v1499 = vsel %vm901, %v1497, %v1498
      %v1500 = vrot.slane %v1470, 5
      %v1501 = vrot.slane %v1500, 4
      %v1502 = vrot.slane %v1215, 5
      %v1503 = vsel %vm901, %v1501, %v1502
      %v1504 = vrot.slane %v1471, 5
      %v1505 = vrot.slane %v1504, 4
      %v1506 = vrot.slane %v1217, 5
      %v1507 = vsel %vm901, %v1505, %v1506
      %v1508 = vrot.slane %v1472, 5
      %v1509 = vrot.slane %v1508, 4
      %v1510 = vrot.slane %v1219, 5
      %v1511 = vsel %vm901, %v1509, %v1510
      %v1512 = vrot.slane %v1473, 5
      %v1513 = vrot.slane %v1512, 4
      %v1514 = vrot.slane %v1221, 5
      %v1515 = vsel %vm901, %v1513, %v1514
      %v1516 = vrot.slane %v1474, 5
      %v1517 = vrot.slane %v1516, 4
      %v1518 = vrot.slane %v1223, 5
      %v1519 = vsel %vm901, %v1517, %v1518
      %v1520 = vrot.slane %v1475, 5
      %v1521 = vrot.slane %v1520, 4
      %v1522 = vrot.slane %v1225, 5
      %v1523 = vsel %vm901, %v1521, %v1522
      %s1524 = scalar_lea.vmem %s3, 160
      %v1525 = vld [vmem:[%s1524] sm:$0xf]
      %v1526 = vld [vmem:[%s1524 + $0x4] sm:$0xf]
      %v1527 = vld [vmem:[%s1524 + $0x8] sm:$0xf]
      %v1528 = vld [vmem:[%s1524 + $0xc] sm:$0xf]
      %v1529 = vld [vmem:[%s1524 + $0x10] sm:$0xf]
      %v1530 = vld [vmem:[%s1524 + $0x14] sm:$0xf]
      %v1531 = vld [vmem:[%s1524 + $0x18] sm:$0xf]
      %v1532 = vld [vmem:[%s1524 + $0x1c] sm:$0xf]
      %v1533 = vunpack.c.l.b16 %v1495
      %v1534 = vunpack.c.l.b16 %v1499
      %v1535 = vunpack.c.l.b16 %v1503
      %v1536 = vunpack.c.l.b16 %v1507
      %v1537 = vunpack.c.l.b16 %v1511
      %v1538 = vunpack.c.l.b16 %v1515
      %v1539 = vunpack.c.l.b16 %v1519
      %v1540 = vunpack.c.l.b16 %v1523
      %v1541 = vpack.c.b16 %v1534, %v1533
      %v1542 = vpack.c.b16 %v1536, %v1535
      %v1543 = vpack.c.b16 %v1538, %v1537
      %v1544 = vpack.c.b16 %v1540, %v1539
      %v1553 = vunpack.c.l.b16 %v1525
      %v1554 = vunpack.c.l.b16 %v1526
      %v1555 = vunpack.c.l.b16 %v1527
      %v1556 = vunpack.c.l.b16 %v1528
      %v1557 = vunpack.c.l.b16 %v1529
      %v1558 = vunpack.c.l.b16 %v1530
      %v1559 = vunpack.c.l.b16 %v1531
      %v1560 = vunpack.c.l.b16 %v1532
      %v1561 = vpack.c.b16 %v1554, %v1553
      %v1562 = vpack.c.b16 %v1556, %v1555
      %v1563 = vpack.c.b16 %v1558, %v1557
      %v1564 = vpack.c.b16 %v1560, %v1559
      %v1570 = vsel %vm676, %v1541, 0
      %v1573 = vsel %vm676, %v1542, 0
      %v1576 = vsel %vm676, %v1543, 0
      %v1579 = vsel %vm676, %v1544, 0
      %1581 = vmatprep.subr.bf16.mxu0 0
      %1582 = vmatpush1.bf16.msra.mxu0 %v1561
      %1583 = vmatprep.subr.bf16.mxu0 0
      %1584 = vmatpush1.bf16.msra.mxu0 %v1562
      %1585 = vmatprep.subr.bf16.mxu0 0
      %1586 = vmatpush1.bf16.msra.mxu0 %v1563
      %1587 = vmatprep.subr.bf16.mxu0 0
      %1588 = vmatpush1.bf16.msra.mxu0 %v1564
      %1589 = vmatprep.subr.bf16.mxu0 0
      %1590 = vmatpush1.bf16.msra.mxu0 0
      %1591 = vmatprep.subr.bf16.mxu0 0
      %1592 = vmatpush1.bf16.msra.mxu0 0
      %1593 = vmatprep.subr.bf16.mxu0 0
      %1594 = vmatpush1.bf16.msra.mxu0 0
      %1595 = vmatprep.subr.bf16.mxu0 0
      %1596 = vmatpush1.bf16.msra.mxu0 0
      %1597 = vmatprep.subr.bf16.mxu0 0
      %1598 = vmatpush1.bf16.msra.mxu0 0
      %1599 = vmatprep.subr.bf16.mxu0 0
      %1600 = vmatpush1.bf16.msra.mxu0 0
      %1601 = vmatprep.subr.bf16.mxu0 0
      %1602 = vmatpush1.bf16.msra.mxu0 0
      %1603 = vmatprep.subr.bf16.mxu0 0
      %1604 = vmatpush1.bf16.msra.mxu0 0
      %1605 = vmatprep.subr.bf16.mxu0 0
      %1606 = vmatpush1.bf16.msra.mxu0 0
      %1607 = vmatprep.subr.bf16.mxu0 0
      %1608 = vmatpush1.bf16.msra.mxu0 0
      %1609 = vmatprep.subr.bf16.mxu0 0
      %1610 = vmatpush1.bf16.msra.mxu0 0
      %1611 = vmatprep.subr.bf16.mxu0 0
      %1612 = vmatpush1.bf16.msra.mxu0 0
      %1613 = vmatprep.mubr.bf16.mxu0 0
      %1614 = vmatmul.mubr.bf16.gmra.mrb[0].mxu0 %v1570
      %v1615 = vpop.f32.mrb[0].mxu0
      %v1616 = vadd.f32 0.0, %v1615
      %v1617 = vpop.f32.mrb[0].mxu0
      %v1618 = vpop.f32.mrb[0].mxu0
      %v1619 = vadd.f32 0.0, %v1618
      %v1620 = vpop.f32.mrb[0].mxu0
      %1621 = vmatprep.mubr.bf16.mxu0 0
      %1622 = vmatmul.mubr.bf16.gmra.mrb[0].mxu0 %v1573
      %v1623 = vpop.f32.mrb[0].mxu0
      %v1624 = vadd.f32 0.0, %v1623
      %v1625 = vpop.f32.mrb[0].mxu0
      %v1626 = vpop.f32.mrb[0].mxu0
      %v1627 = vadd.f32 0.0, %v1626
      %v1628 = vpop.f32.mrb[0].mxu0
      %1629 = vmatprep.mubr.bf16.mxu0 0
      %1630 = vmatmul.mubr.bf16.gmra.mrb[0].mxu0 %v1576
      %v1631 = vpop.f32.mrb[0].mxu0
      %v1632 = vadd.f32 0.0, %v1631
      %v1633 = vpop.f32.mrb[0].mxu0
      %v1634 = vpop.f32.mrb[0].mxu0
      %v1635 = vadd.f32 0.0, %v1634
      %v1636 = vpop.f32.mrb[0].mxu0
      %1637 = vmatprep.mubr.bf16.mxu0 0
      %1638 = vmatmul.mubr.bf16.gmra.mrb[0].mxu0 %v1579
      %v1639 = vpop.f32.mrb[0].mxu0
      %v1640 = vadd.f32 0.0, %v1639
      %v1641 = vpop.f32.mrb[0].mxu0
      %v1642 = vpop.f32.mrb[0].mxu0
      %v1643 = vadd.f32 0.0, %v1642
      %v1644 = vpop.f32.mrb[0].mxu0
      %1645 = vdwg.mxu0
      %v1646 = vadd.f32 %v1460, %v1616
      %v1647 = vadd.f32 %v1461, %v1619
      %v1648 = vadd.f32 %v1462, %v1624
      %v1649 = vadd.f32 %v1463, %v1627
      %v1650 = vadd.f32 %v1464, %v1632
      %v1651 = vadd.f32 %v1465, %v1635
      %v1652 = vadd.f32 %v1466, %v1640
      %v1653 = vadd.f32 %v1467, %v1643
      %s1654 = scalar_lea.vmem [#allocation2], 16
      %v1655 = vld [vmem:[%s1654] sm:$0xf]
      %v1656 = vld [vmem:[%s1654 + $0x8] sm:$0xf]
      %v1657 = vld [vmem:[%s1654 + $0x10] sm:$0xf]
      %v1658 = vld [vmem:[%s1654 + $0x18] sm:$0xf]
      %v1659 = vld [vmem:[%s1654 + $0x20] sm:$0xf]
      %v1660 = vld [vmem:[%s1654 + $0x28] sm:$0xf]
      %v1661 = vld [vmem:[%s1654 + $0x30] sm:$0xf]
      %v1662 = vld [vmem:[%s1654 + $0x38] sm:$0xf]
      %s1663 = scalar_lea.vmem %s3, 192
      %v1664 = vld [vmem:[%s1663] sm:$0xf]
      %v1665 = vld [vmem:[%s1663 + $0x4] sm:$0xf]
      %v1666 = vld [vmem:[%s1663 + $0x8] sm:$0xf]
      %v1667 = vld [vmem:[%s1663 + $0xc] sm:$0xf]
      %v1668 = vld [vmem:[%s1663 + $0x10] sm:$0xf]
      %v1669 = vld [vmem:[%s1663 + $0x14] sm:$0xf]
      %v1670 = vld [vmem:[%s1663 + $0x18] sm:$0xf]
      %v1671 = vld [vmem:[%s1663 + $0x1c] sm:$0xf]
      %v1680 = vunpack.c.l.b16 %v1655
      %v1681 = vunpack.c.l.b16 %v1656
      %v1682 = vunpack.c.l.b16 %v1657
      %v1683 = vunpack.c.l.b16 %v1658
      %v1684 = vunpack.c.l.b16 %v1659
      %v1685 = vunpack.c.l.b16 %v1660
      %v1686 = vunpack.c.l.b16 %v1661
      %v1687 = vunpack.c.l.b16 %v1662
      %v1688 = vpack.c.b16 %v1681, %v1680
      %v1689 = vpack.c.b16 %v1683, %v1682
      %v1690 = vpack.c.b16 %v1685, %v1684
      %v1691 = vpack.c.b16 %v1687, %v1686
      %v1700 = vunpack.c.l.b16 %v1664
      %v1701 = vunpack.c.l.b16 %v1665
      %v1702 = vunpack.c.l.b16 %v1666
      %v1703 = vunpack.c.l.b16 %v1667
      %v1704 = vunpack.c.l.b16 %v1668
      %v1705 = vunpack.c.l.b16 %v1669
      %v1706 = vunpack.c.l.b16 %v1670
      %v1707 = vunpack.c.l.b16 %v1671
      %v1708 = vpack.c.b16 %v1701, %v1700
      %v1709 = vpack.c.b16 %v1703, %v1702
      %v1710 = vpack.c.b16 %v1705, %v1704
      %v1711 = vpack.c.b16 %v1707, %v1706
      %v1717 = vsel %vm676, %v1688, 0
      %v1720 = vsel %vm676, %v1689, 0
      %v1723 = vsel %vm676, %v1690, 0
      %v1726 = vsel %vm676, %v1691, 0
      %1728 = vmatprep.subr.bf16.mxu0 0
      %1729 = vmatpush1.bf16.msra.mxu0 %v1708
      %1730 = vmatprep.subr.bf16.mxu0 0
      %1731 = vmatpush1.bf16.msra.mxu0 %v1709
      %1732 = vmatprep.subr.bf16.mxu0 0
      %1733 = vmatpush1.bf16.msra.mxu0 %v1710
      %1734 = vmatprep.subr.bf16.mxu0 0
      %1735 = vmatpush1.bf16.msra.mxu0 %v1711
      %1736 = vmatprep.subr.bf16.mxu0 0
      %1737 = vmatpush1.bf16.msra.mxu0 0
      %1738 = vmatprep.subr.bf16.mxu0 0
      %1739 = vmatpush1.bf16.msra.mxu0 0
      %1740 = vmatprep.subr.bf16.mxu0 0
      %1741 = vmatpush1.bf16.msra.mxu0 0
      %1742 = vmatprep.subr.bf16.mxu0 0
      %1743 = vmatpush1.bf16.msra.mxu0 0
      %1744 = vmatprep.subr.bf16.mxu0 0
      %1745 = vmatpush1.bf16.msra.mxu0 0
      %1746 = vmatprep.subr.bf16.mxu0 0
      %1747 = vmatpush1.bf16.msra.mxu0 0
      %1748 = vmatprep.subr.bf16.mxu0 0
      %1749 = vmatpush1.bf16.msra.mxu0 0
      %1750 = vmatprep.subr.bf16.mxu0 0
      %1751 = vmatpush1.bf16.msra.mxu0 0
      %1752 = vmatprep.subr.bf16.mxu0 0
      %1753 = vmatpush1.bf16.msra.mxu0 0
      %1754 = vmatprep.subr.bf16.mxu0 0
      %1755 = vmatpush1.bf16.msra.mxu0 0
      %1756 = vmatprep.subr.bf16.mxu0 0
      %1757 = vmatpush1.bf16.msra.mxu0 0
      %1758 = vmatprep.subr.bf16.mxu0 0
      %1759 = vmatpush1.bf16.msra.mxu0 0
      %1760 = vmatprep.mubr.bf16.mxu0 0
      %1761 = vmatmul.mubr.bf16.gmra.mrb[0].mxu0 %v1717
      %v1762 = vpop.f32.mrb[0].mxu0
      %v1763 = vadd.f32 0.0, %v1762
      %v1764 = vpop.f32.mrb[0].mxu0
      %v1765 = vpop.f32.mrb[0].mxu0
      %v1766 = vadd.f32 0.0, %v1765
      %v1767 = vpop.f32.mrb[0].mxu0
      %1768 = vmatprep.mubr.bf16.mxu0 0
      %1769 = vmatmul.mubr.bf16.gmra.mrb[0].mxu0 %v1720
      %v1770 = vpop.f32.mrb[0].mxu0
      %v1771 = vadd.f32 0.0, %v1770
      %v1772 = vpop.f32.mrb[0].mxu0
      %v1773 = vpop.f32.mrb[0].mxu0
      %v1774 = vadd.f32 0.0, %v1773
      %v1775 = vpop.f32.mrb[0].mxu0
      %1776 = vmatprep.mubr.bf16.mxu0 0
      %1777 = vmatmul.mubr.bf16.gmra.mrb[0].mxu0 %v1723
      %v1778 = vpop.f32.mrb[0].mxu0
      %v1779 = vadd.f32 0.0, %v1778
      %v1780 = vpop.f32.mrb[0].mxu0
      %v1781 = vpop.f32.mrb[0].mxu0
      %v1782 = vadd.f32 0.0, %v1781
      %v1783 = vpop.f32.mrb[0].mxu0
      %1784 = vmatprep.mubr.bf16.mxu0 0
      %1785 = vmatmul.mubr.bf16.gmra.mrb[0].mxu0 %v1726
      %v1786 = vpop.f32.mrb[0].mxu0
      %v1787 = vadd.f32 0.0, %v1786
      %v1788 = vpop.f32.mrb[0].mxu0
      %v1789 = vpop.f32.mrb[0].mxu0
      %v1790 = vadd.f32 0.0, %v1789
      %v1791 = vpop.f32.mrb[0].mxu0
      %1792 = vdwg.mxu0
      %v1793 = vadd.f32 %v1646, %v1763
      %v1794 = vadd.f32 %v1647, %v1766
      %v1795 = vadd.f32 %v1648, %v1771
      %v1796 = vadd.f32 %v1649, %v1774
      %v1797 = vadd.f32 %v1650, %v1779
      %v1798 = vadd.f32 %v1651, %v1782
      %v1799 = vadd.f32 %v1652, %v1787
      %v1800 = vadd.f32 %v1653, %v1790
      %v1801 = vld [vmem:[%s1654] sm:$0xf]
      %v1802 = vld [vmem:[%s1654 + $0x4] sm:$0x1]
      %v1803 = vld [vmem:[%s1654 + $0x8] sm:$0xf]
      %v1804 = vld [vmem:[%s1654 + $0xc] sm:$0x1]
      %v1805 = vld [vmem:[%s1654 + $0x10] sm:$0xf]
      %v1806 = vld [vmem:[%s1654 + $0x14] sm:$0x1]
      %v1807 = vld [vmem:[%s1654 + $0x18] sm:$0xf]
      %v1808 = vld [vmem:[%s1654 + $0x1c] sm:$0x1]
      %v1809 = vld [vmem:[%s1654 + $0x20] sm:$0xf]
      %v1810 = vld [vmem:[%s1654 + $0x24] sm:$0x1]
      %v1811 = vld [vmem:[%s1654 + $0x28] sm:$0xf]
      %v1812 = vld [vmem:[%s1654 + $0x2c] sm:$0x1]
      %v1813 = vld [vmem:[%s1654 + $0x30] sm:$0xf]
      %v1814 = vld [vmem:[%s1654 + $0x34] sm:$0x1]
      %v1815 = vld [vmem:[%s1654 + $0x38] sm:$0xf]
      %v1816 = vld [vmem:[%s1654 + $0x3c] sm:$0x1]
      %v1818 = vshrl.u32 %v1801, 16
      %v1820 = vrot.slane %v1818, 4
      %v1821 = vshll.u32 %v1801, 16
      %v1823 = vrot.slane %v1821, 5
      %v1824 = vor.u32 %v1820, %v1823
      %v1825 = vrot.slane %v1824, 4
      %v1827 = vshll.u32 %v1802, 16
      %v1829 = vrot.slane %v1827, 5
      %v1830 = vsel %vm518, %v1825, %v1829
      %v1832 = vshrl.u32 %v1803, 16
      %v1834 = vrot.slane %v1832, 4
      %v1835 = vshll.u32 %v1803, 16
      %v1837 = vrot.slane %v1835, 5
      %v1838 = vor.u32 %v1834, %v1837
      %v1839 = vrot.slane %v1838, 4
      %v1841 = vshll.u32 %v1804, 16
      %v1843 = vrot.slane %v1841, 5
      %v1844 = vsel %vm518, %v1839, %v1843
      %v1846 = vshrl.u32 %v1805, 16
      %v1848 = vrot.slane %v1846, 4
      %v1849 = vshll.u32 %v1805, 16
      %v1851 = vrot.slane %v1849, 5
      %v1852 = vor.u32 %v1848, %v1851
      %v1853 = vrot.slane %v1852, 4
      %v1855 = vshll.u32 %v1806, 16
      %v1857 = vrot.slane %v1855, 5
      %v1858 = vsel %vm518, %v1853, %v1857
      %v1860 = vshrl.u32 %v1807, 16
      %v1862 = vrot.slane %v1860, 4
      %v1863 = vshll.u32 %v1807, 16
      %v1865 = vrot.slane %v1863, 5
      %v1866 = vor.u32 %v1862, %v1865
      %v1867 = vrot.slane %v1866, 4
      %v1869 = vshll.u32 %v1808, 16
      %v1871 = vrot.slane %v1869, 5
      %v1872 = vsel %vm518, %v1867, %v1871
      %v1874 = vshrl.u32 %v1809, 16
      %v1876 = vrot.slane %v1874, 4
      %v1877 = vshll.u32 %v1809, 16
      %v1879 = vrot.slane %v1877, 5
      %v1880 = vor.u32 %v1876, %v1879
      %v1881 = vrot.slane %v1880, 4
      %v1883 = vshll.u32 %v1810, 16
      %v1885 = vrot.slane %v1883, 5
      %v1886 = vsel %vm518, %v1881, %v1885
      %v1888 = vshrl.u32 %v1811, 16
      %v1890 = vrot.slane %v1888, 4
      %v1891 = vshll.u32 %v1811, 16
      %v1893 = vrot.slane %v1891, 5
      %v1894 = vor.u32 %v1890, %v1893
      %v1895 = vrot.slane %v1894, 4
      %v1897 = vshll.u32 %v1812, 16
      %v1899 = vrot.slane %v1897, 5
      %v1900 = vsel %vm518, %v1895, %v1899
      %v1902 = vshrl.u32 %v1813, 16
      %v1904 = vrot.slane %v1902, 4
      %v1905 = vshll.u32 %v1813, 16
      %v1907 = vrot.slane %v1905, 5
      %v1908 = vor.u32 %v1904, %v1907
      %v1909 = vrot.slane %v1908, 4
      %v1911 = vshll.u32 %v1814, 16
      %v1913 = vrot.slane %v1911, 5
      %v1914 = vsel %vm518, %v1909, %v1913
      %v1916 = vshrl.u32 %v1815, 16
      %v1918 = vrot.slane %v1916, 4
      %v1919 = vshll.u32 %v1815, 16
      %v1921 = vrot.slane %v1919, 5
      %v1922 = vor.u32 %v1918, %v1921
      %v1923 = vrot.slane %v1922, 4
      %v1925 = vshll.u32 %v1816, 16
      %v1927 = vrot.slane %v1925, 5
      %v1928 = vsel %vm518, %v1923, %v1927
      %s1929 = scalar_lea.vmem %s3, 224
      %v1930 = vld [vmem:[%s1929] sm:$0xf]
      %v1931 = vld [vmem:[%s1929 + $0x4] sm:$0xf]
      %v1932 = vld [vmem:[%s1929 + $0x8] sm:$0xf]
      %v1933 = vld [vmem:[%s1929 + $0xc] sm:$0xf]
      %v1934 = vld [vmem:[%s1929 + $0x10] sm:$0xf]
      %v1935 = vld [vmem:[%s1929 + $0x14] sm:$0xf]
      %v1936 = vld [vmem:[%s1929 + $0x18] sm:$0xf]
      %v1937 = vld [vmem:[%s1929 + $0x1c] sm:$0xf]
      %v1938 = vunpack.c.l.b16 %v1830
      %v1939 = vunpack.c.l.b16 %v1844
      %v1940 = vunpack.c.l.b16 %v1858
      %v1941 = vunpack.c.l.b16 %v1872
      %v1942 = vunpack.c.l.b16 %v1886
      %v1943 = vunpack.c.l.b16 %v1900
      %v1944 = vunpack.c.l.b16 %v1914
      %v1945 = vunpack.c.l.b16 %v1928
      %v1946 = vpack.c.b16 %v1939, %v1938
      %v1947 = vpack.c.b16 %v1941, %v1940
      %v1948 = vpack.c.b16 %v1943, %v1942
      %v1949 = vpack.c.b16 %v1945, %v1944
      %v1958 = vunpack.c.l.b16 %v1930
      %v1959 = vunpack.c.l.b16 %v1931
      %v1960 = vunpack.c.l.b16 %v1932
      %v1961 = vunpack.c.l.b16 %v1933
      %v1962 = vunpack.c.l.b16 %v1934
      %v1963 = vunpack.c.l.b16 %v1935
      %v1964 = vunpack.c.l.b16 %v1936
      %v1965 = vunpack.c.l.b16 %v1937
      %v1966 = vpack.c.b16 %v1959, %v1958
      %v1967 = vpack.c.b16 %v1961, %v1960
      %v1968 = vpack.c.b16 %v1963, %v1962
      %v1969 = vpack.c.b16 %v1965, %v1964
      %v1975 = vsel %vm676, %v1946, 0
      %v1978 = vsel %vm676, %v1947, 0
      %v1981 = vsel %vm676, %v1948, 0
      %v1984 = vsel %vm676, %v1949, 0
      %1986 = vmatprep.subr.bf16.mxu0 0
      %1987 = vmatpush1.bf16.msra.mxu0 %v1966
      %1988 = vmatprep.subr.bf16.mxu0 0
      %1989 = vmatpush1.bf16.msra.mxu0 %v1967
      %1990 = vmatprep.subr.bf16.mxu0 0
      %1991 = vmatpush1.bf16.msra.mxu0 %v1968
      %1992 = vmatprep.subr.bf16.mxu0 0
      %1993 = vmatpush1.bf16.msra.mxu0 %v1969
      %1994 = vmatprep.subr.bf16.mxu0 0
      %1995 = vmatpush1.bf16.msra.mxu0 0
      %1996 = vmatprep.subr.bf16.mxu0 0
      %1997 = vmatpush1.bf16.msra.mxu0 0
      %1998 = vmatprep.subr.bf16.mxu0 0
      %1999 = vmatpush1.bf16.msra.mxu0 0
      %2000 = vmatprep.subr.bf16.mxu0 0
      %2001 = vmatpush1.bf16.msra.mxu0 0
      %2002 = vmatprep.subr.bf16.mxu0 0
      %2003 = vmatpush1.bf16.msra.mxu0 0
      %2004 = vmatprep.subr.bf16.mxu0 0
      %2005 = vmatpush1.bf16.msra.mxu0 0
      %2006 = vmatprep.subr.bf16.mxu0 0
      %2007 = vmatpush1.bf16.msra.mxu0 0
      %2008 = vmatprep.subr.bf16.mxu0 0
      %2009 = vmatpush1.bf16.msra.mxu0 0
      %2010 = vmatprep.subr.bf16.mxu0 0
      %2011 = vmatpush1.bf16.msra.mxu0 0
      %2012 = vmatprep.subr.bf16.mxu0 0
      %2013 = vmatpush1.bf16.msra.mxu0 0
      %2014 = vmatprep.subr.bf16.mxu0 0
      %2015 = vmatpush1.bf16.msra.mxu0 0
      %2016 = vmatprep.subr.bf16.mxu0 0
      %2017 = vmatpush1.bf16.msra.mxu0 0
      %2018 = vmatprep.mubr.bf16.mxu0 0
      %2019 = vmatmul.mubr.bf16.gmra.mrb[0].mxu0 %v1975
      %v2020 = vpop.f32.mrb[0].mxu0
      %v2021 = vadd.f32 0.0, %v2020
      %v2022 = vpop.f32.mrb[0].mxu0
      %v2023 = vpop.f32.mrb[0].mxu0
      %v2024 = vadd.f32 0.0, %v2023
      %v2025 = vpop.f32.mrb[0].mxu0
      %2026 = vmatprep.mubr.bf16.mxu0 0
      %2027 = vmatmul.mubr.bf16.gmra.mrb[0].mxu0 %v1978
      %v2028 = vpop.f32.mrb[0].mxu0
      %v2029 = vadd.f32 0.0, %v2028
      %v2030 = vpop.f32.mrb[0].mxu0
      %v2031 = vpop.f32.mrb[0].mxu0
      %v2032 = vadd.f32 0.0, %v2031
      %v2033 = vpop.f32.mrb[0].mxu0
      %2034 = vmatprep.mubr.bf16.mxu0 0
      %2035 = vmatmul.mubr.bf16.gmra.mrb[0].mxu0 %v1981
      %v2036 = vpop.f32.mrb[0].mxu0
      %v2037 = vadd.f32 0.0, %v2036
      %v2038 = vpop.f32.mrb[0].mxu0
      %v2039 = vpop.f32.mrb[0].mxu0
      %v2040 = vadd.f32 0.0, %v2039
      %v2041 = vpop.f32.mrb[0].mxu0
      %2042 = vmatprep.mubr.bf16.mxu0 0
      %2043 = vmatmul.mubr.bf16.gmra.mrb[0].mxu0 %v1984
      %v2044 = vpop.f32.mrb[0].mxu0
      %v2045 = vadd.f32 0.0, %v2044
      %v2046 = vpop.f32.mrb[0].mxu0
      %v2047 = vpop.f32.mrb[0].mxu0
      %v2048 = vadd.f32 0.0, %v2047
      %v2049 = vpop.f32.mrb[0].mxu0
      %2050 = vdwg.mxu0
      %v2051 = vadd.f32 %v1793, %v2021
      %v2052 = vadd.f32 %v1794, %v2024
      %v2053 = vadd.f32 %v1795, %v2029
      %v2054 = vadd.f32 %v1796, %v2032
      %v2055 = vadd.f32 %v1797, %v2037
      %v2056 = vadd.f32 %v1798, %v2040
      %v2057 = vadd.f32 %v1799, %v2045
      %v2058 = vadd.f32 %v1800, %v2048
      %v2059 = vld [vmem:[%s1654] sm:$0xe]
      %v2060 = vld [vmem:[%s1654 + $0x8] sm:$0xe]
      %v2061 = vld [vmem:[%s1654 + $0x10] sm:$0xe]
      %v2062 = vld [vmem:[%s1654 + $0x18] sm:$0xe]
      %v2063 = vld [vmem:[%s1654 + $0x20] sm:$0xe]
      %v2064 = vld [vmem:[%s1654 + $0x28] sm:$0xe]
      %v2065 = vld [vmem:[%s1654 + $0x30] sm:$0xe]
      %v2066 = vld [vmem:[%s1654 + $0x38] sm:$0xe]
      %v2083 = vrot.slane %v2059, 5
      %v2084 = vrot.slane %v2083, 4
      %v2085 = vrot.slane %v1802, 5
      %v2086 = vsel %vm901, %v2084, %v2085
      %v2087 = vrot.slane %v2060, 5
      %v2088 = vrot.slane %v2087, 4
      %v2089 = vrot.slane %v1804, 5
      %v2090 = vsel %vm901, %v2088, %v2089
      %v2091 = vrot.slane %v2061, 5
      %v2092 = vrot.slane %v2091, 4
      %v2093 = vrot.slane %v1806, 5
      %v2094 = vsel %vm901, %v2092, %v2093
      %v2095 = vrot.slane %v2062, 5
      %v2096 = vrot.slane %v2095, 4
      %v2097 = vrot.slane %v1808, 5
      %v2098 = vsel %vm901, %v2096, %v2097
      %v2099 = vrot.slane %v2063, 5
      %v2100 = vrot.slane %v2099, 4
      %v2101 = vrot.slane %v1810, 5
      %v2102 = vsel %vm901, %v2100, %v2101
      %v2103 = vrot.slane %v2064, 5
      %v2104 = vrot.slane %v2103, 4
      %v2105 = vrot.slane %v1812, 5
      %v2106 = vsel %vm901, %v2104, %v2105
      %v2107 = vrot.slane %v2065, 5
      %v2108 = vrot.slane %v2107, 4
      %v2109 = vrot.slane %v1814, 5
      %v2110 = vsel %vm901, %v2108, %v2109
      %v2111 = vrot.slane %v2066, 5
      %v2112 = vrot.slane %v2111, 4
      %v2113 = vrot.slane %v1816, 5
      %v2114 = vsel %vm901, %v2112, %v2113
      %s2115 = scalar_lea.vmem %s3, 256
      %v2116 = vld [vmem:[%s2115] sm:$0xf]
      %v2117 = vld [vmem:[%s2115 + $0x4] sm:$0xf]
      %v2118 = vld [vmem:[%s2115 + $0x8] sm:$0xf]
      %v2119 = vld [vmem:[%s2115 + $0xc] sm:$0xf]
      %v2120 = vld [vmem:[%s2115 + $0x10] sm:$0xf]
      %v2121 = vld [vmem:[%s2115 + $0x14] sm:$0xf]
      %v2122 = vld [vmem:[%s2115 + $0x18] sm:$0xf]
      %v2123 = vld [vmem:[%s2115 + $0x1c] sm:$0xf]
      %v2124 = vunpack.c.l.b16 %v2086
      %v2125 = vunpack.c.l.b16 %v2090
      %v2126 = vunpack.c.l.b16 %v2094
      %v2127 = vunpack.c.l.b16 %v2098
      %v2128 = vunpack.c.l.b16 %v2102
      %v2129 = vunpack.c.l.b16 %v2106
      %v2130 = vunpack.c.l.b16 %v2110
      %v2131 = vunpack.c.l.b16 %v2114
      %v2132 = vpack.c.b16 %v2125, %v2124
      %v2133 = vpack.c.b16 %v2127, %v2126
      %v2134 = vpack.c.b16 %v2129, %v2128
      %v2135 = vpack.c.b16 %v2131, %v2130
      %v2144 = vunpack.c.l.b16 %v2116
      %v2145 = vunpack.c.l.b16 %v2117
      %v2146 = vunpack.c.l.b16 %v2118
      %v2147 = vunpack.c.l.b16 %v2119
      %v2148 = vunpack.c.l.b16 %v2120
      %v2149 = vunpack.c.l.b16 %v2121
      %v2150 = vunpack.c.l.b16 %v2122
      %v2151 = vunpack.c.l.b16 %v2123
      %v2152 = vpack.c.b16 %v2145, %v2144
      %v2153 = vpack.c.b16 %v2147, %v2146
      %v2154 = vpack.c.b16 %v2149, %v2148
      %v2155 = vpack.c.b16 %v2151, %v2150
      %v2161 = vsel %vm676, %v2132, 0
      %v2164 = vsel %vm676, %v2133, 0
      %v2167 = vsel %vm676, %v2134, 0
      %v2170 = vsel %vm676, %v2135, 0
      %2172 = vmatprep.subr.bf16.mxu0 0
      %2173 = vmatpush1.bf16.msra.mxu0 %v2152
      %2174 = vmatprep.subr.bf16.mxu0 0
      %2175 = vmatpush1.bf16.msra.mxu0 %v2153
      %2176 = vmatprep.subr.bf16.mxu0 0
      %2177 = vmatpush1.bf16.msra.mxu0 %v2154
      %2178 = vmatprep.subr.bf16.mxu0 0
      %2179 = vmatpush1.bf16.msra.mxu0 %v2155
      %2180 = vmatprep.subr.bf16.mxu0 0
      %2181 = vmatpush1.bf16.msra.mxu0 0
      %2182 = vmatprep.subr.bf16.mxu0 0
      %2183 = vmatpush1.bf16.msra.mxu0 0
      %2184 = vmatprep.subr.bf16.mxu0 0
      %2185 = vmatpush1.bf16.msra.mxu0 0
      %2186 = vmatprep.subr.bf16.mxu0 0
      %2187 = vmatpush1.bf16.msra.mxu0 0
      %2188 = vmatprep.subr.bf16.mxu0 0
      %2189 = vmatpush1.bf16.msra.mxu0 0
      %2190 = vmatprep.subr.bf16.mxu0 0
      %2191 = vmatpush1.bf16.msra.mxu0 0
      %2192 = vmatprep.subr.bf16.mxu0 0
      %2193 = vmatpush1.bf16.msra.mxu0 0
      %2194 = vmatprep.subr.bf16.mxu0 0
      %2195 = vmatpush1.bf16.msra.mxu0 0
      %2196 = vmatprep.subr.bf16.mxu0 0
      %2197 = vmatpush1.bf16.msra.mxu0 0
      %2198 = vmatprep.subr.bf16.mxu0 0
      %2199 = vmatpush1.bf16.msra.mxu0 0
      %2200 = vmatprep.subr.bf16.mxu0 0
      %2201 = vmatpush1.bf16.msra.mxu0 0
      %2202 = vmatprep.subr.bf16.mxu0 0
      %2203 = vmatpush1.bf16.msra.mxu0 0
      %2204 = vmatprep.mubr.bf16.mxu0 0
      %2205 = vmatmul.mubr.bf16.gmra.mrb[0].mxu0 %v2161
      %v2206 = vpop.f32.mrb[0].mxu0
      %v2207 = vadd.f32 0.0, %v2206
      %v2208 = vpop.f32.mrb[0].mxu0
      %v2209 = vpop.f32.mrb[0].mxu0
      %v2210 = vadd.f32 0.0, %v2209
      %v2211 = vpop.f32.mrb[0].mxu0
      %2212 = vmatprep.mubr.bf16.mxu0 0
      %2213 = vmatmul.mubr.bf16.gmra.mrb[0].mxu0 %v2164
      %v2214 = vpop.f32.mrb[0].mxu0
      %v2215 = vadd.f32 0.0, %v2214
      %v2216 = vpop.f32.mrb[0].mxu0
      %v2217 = vpop.f32.mrb[0].mxu0
      %v2218 = vadd.f32 0.0, %v2217
      %v2219 = vpop.f32.mrb[0].mxu0
      %2220 = vmatprep.mubr.bf16.mxu0 0
      %2221 = vmatmul.mubr.bf16.gmra.mrb[0].mxu0 %v2167
      %v2222 = vpop.f32.mrb[0].mxu0
      %v2223 = vadd.f32 0.0, %v2222
      %v2224 = vpop.f32.mrb[0].mxu0
      %v2225 = vpop.f32.mrb[0].mxu0
      %v2226 = vadd.f32 0.0, %v2225
      %v2227 = vpop.f32.mrb[0].mxu0
      %2228 = vmatprep.mubr.bf16.mxu0 0
      %2229 = vmatmul.mubr.bf16.gmra.mrb[0].mxu0 %v2170
      %v2230 = vpop.f32.mrb[0].mxu0
      %v2231 = vadd.f32 0.0, %v2230
      %v2232 = vpop.f32.mrb[0].mxu0
      %v2233 = vpop.f32.mrb[0].mxu0
      %v2234 = vadd.f32 0.0, %v2233
      %v2235 = vpop.f32.mrb[0].mxu0
      %2236 = vdwg.mxu0
      %v2237 = vadd.f32 %v2051, %v2207
      %v2238 = vadd.f32 %v2052, %v2210
      %v2239 = vadd.f32 %v2053, %v2215
      %v2240 = vadd.f32 %v2054, %v2218
      %v2241 = vadd.f32 %v2055, %v2223
      %v2242 = vadd.f32 %v2056, %v2226
      %v2243 = vadd.f32 %v2057, %v2231
      %v2244 = vadd.f32 %v2058, %v2234
      %v2245 = vld [vmem:[%s4] sm:$0x1]
      %v2247 = vlaneseq
      %v2248 = vshrl.u32 %v2247, 7
      %v2249 = vsub.s32 0, %v2248
      %v2250 = vrot.slane %v2245, %v2249
      %v2252 = vadd.f32 %v2237, %v2250
      %v2253 = vadd.f32 %v2238, %v2250
      %v2254 = vadd.f32 %v2239, %v2250
      %v2255 = vadd.f32 %v2240, %v2250
      %v2256 = vadd.f32 %v2241, %v2250
      %v2257 = vadd.f32 %v2242, %v2250
      %v2258 = vadd.f32 %v2243, %v2250
      %v2259 = vadd.f32 %v2244, %v2250
      %v2260 = vpack.c.bf16 %v2253, %v2252
      %v2261 = vpack.c.bf16 %v2255, %v2254
      %v2262 = vpack.c.bf16 %v2257, %v2256
      %v2263 = vpack.c.bf16 %v2259, %v2258
      %v2268 = vunpack.c.l.b16 %v2260
      %v2269 = vunpack.c.h.b16 %v2260
      %v2270 = vunpack.c.l.b16 %v2261
      %v2271 = vunpack.c.h.b16 %v2261
      %v2272 = vunpack.c.l.b16 %v2262
      %v2273 = vunpack.c.h.b16 %v2262
      %v2274 = vunpack.c.l.b16 %v2263
      %v2275 = vunpack.c.h.b16 %v2263
      %v2276 = vpack.c.b16 %v2268, %v2268
      %v2277 = vpack.c.b16 %v2269, %v2269
      %v2278 = vpack.c.b16 %v2270, %v2270
      %v2279 = vpack.c.b16 %v2271, %v2271
      %v2280 = vpack.c.b16 %v2272, %v2272
      %v2281 = vpack.c.b16 %v2273, %v2273
      %v2282 = vpack.c.b16 %v2274, %v2274
      %v2283 = vpack.c.b16 %v2275, %v2275
      %2292 = vst.msk [vmem:[%s258] sm:$0xf] %vm412, %v2276
      %2293 = vst.msk [vmem:[%s258 + $0x4] sm:$0xf] %vm412, %v2277
      %2294 = vst.msk [vmem:[%s258 + $0x8] sm:$0xf] %vm412, %v2278
      %2295 = vst.msk [vmem:[%s258 + $0xc] sm:$0xf] %vm412, %v2279
      %2296 = vst.msk [vmem:[%s258 + $0x10] sm:$0xf] %vm412, %v2280
      %2297 = vst.msk [vmem:[%s258 + $0x14] sm:$0xf] %vm412, %v2281
      %2298 = vst.msk [vmem:[%s258 + $0x18] sm:$0xf] %vm412, %v2282
      %2299 = vst.msk [vmem:[%s258 + $0x1c] sm:$0xf] %vm412, %v2283
      %v2300 = vunpack.c.l.bf16 %v2260
      %v2301 = vunpack.c.h.bf16 %v2260
      %v2302 = vunpack.c.l.bf16 %v2261
      %v2303 = vunpack.c.h.bf16 %v2261
      %v2304 = vunpack.c.l.bf16 %v2262
      %v2305 = vunpack.c.h.bf16 %v2262
      %v2306 = vunpack.c.l.bf16 %v2263
      %v2307 = vunpack.c.h.bf16 %v2263
      %v2308 = vsel %vm676, %v2300, 0.0
      %v2309 = vsel %vm676, %v2301, 0.0
      %v2310 = vadd.f32 %v2308, %v2309
      %v2311 = vsel %vm676, %v2302, 0.0
      %v2312 = vadd.f32 %v2310, %v2311
      %v2313 = vsel %vm676, %v2303, 0.0
      %v2314 = vadd.f32 %v2312, %v2313
      %v2315 = vsel %vm676, %v2304, 0.0
      %v2316 = vadd.f32 %v2314, %v2315
      %v2317 = vsel %vm676, %v2305, 0.0
      %v2318 = vadd.f32 %v2316, %v2317
      %v2319 = vsel %vm676, %v2306, 0.0
      %v2320 = vadd.f32 %v2318, %v2319
      %v2321 = vsel %vm676, %v2307, 0.0
      %v2322 = vadd.f32 %v2320, %v2321
      %v2323 = vrot.slane %v2322, 4
      %v2324 = vadd.f32 %v2322, %v2323
      %v2325 = vrot.slane %v2324, 2
      %v2326 = vadd.f32 %v2324, %v2325
      %v2327 = vrot.slane %v2326, 1
      %v2328 = vadd.f32 %v2326, %v2327
      %v2329 = vmul.f32 %v2300, %v2300
      %v2330 = vmul.f32 %v2301, %v2301
      %v2331 = vmul.f32 %v2302, %v2302
      %v2332 = vmul.f32 %v2303, %v2303
      %v2333 = vmul.f32 %v2304, %v2304
      %v2334 = vmul.f32 %v2305, %v2305
      %v2335 = vmul.f32 %v2306, %v2306
      %v2336 = vmul.f32 %v2307, %v2307
      %v2337 = vsel %vm676, %v2329, 0.0
      %v2338 = vsel %vm676, %v2330, 0.0
      %v2339 = vadd.f32 %v2337, %v2338
      %v2340 = vsel %vm676, %v2331, 0.0
      %v2341 = vadd.f32 %v2339, %v2340
      %v2342 = vsel %vm676, %v2332, 0.0
      %v2343 = vadd.f32 %v2341, %v2342
      %v2344 = vsel %vm676, %v2333, 0.0
      %v2345 = vadd.f32 %v2343, %v2344
      %v2346 = vsel %vm676, %v2334, 0.0
      %v2347 = vadd.f32 %v2345, %v2346
      %v2348 = vsel %vm676, %v2335, 0.0
      %v2349 = vadd.f32 %v2347, %v2348
      %v2350 = vsel %vm676, %v2336, 0.0
      %v2351 = vadd.f32 %v2349, %v2350
      %v2352 = vrot.slane %v2351, 4
      %v2353 = vadd.f32 %v2351, %v2352
      %v2354 = vrot.slane %v2353, 2
      %v2355 = vadd.f32 %v2353, %v2354
      %v2356 = vrot.slane %v2355, 1
      %v2357 = vadd.f32 %v2355, %v2356
      %vm2358 = vcmask 1040384
      %v2359 = vsel %vm2358, %v2328, %v2357
      %vm2360 = vcmask 517120
      %2361 = vst.msk [vmem:[%s262] sm:$0x3] %vm2360, %v2359
      %p2362 = scmp.lt.s32.totalorder %s18, 1
      %s2363 = scalar_select %p2362, %s18, 1
      %s2364 = smul.addr %s2363, 8
      %s2365 = smul.addr %s2364, 4
      %s2366 = scalar_lea.vmem %s5, %s2365
      %p2367 = scmp.lt.s32.totalorder %s18, 1
      %s2368 = scalar_select %p2367, %s18, 1
      %s2369 = smul.addr %s2368, 2
      %s2370 = scalar_lea.vmem %s6, %s2369
      // Predicated region
      $region41: #{bottleneck_forward.5} parent=39 // pred_check
        %p2371 = pneg %p146
      $region42: #{bottleneck_forward.5} parent=39 // pred_check_branch
        %2373 = sbr.rel (%p2371) target = $region44
      $region43: #{bottleneck_forward.5} parent=39 // pred_region
        _
      $region44: #{bottleneck_forward.5} parent=39 // pred_fallthru
        _
      // Predicated region
      $region45: #{bottleneck_forward.5} parent=39 // pred_check
        %p2374 = pneg %p172
      $region46: #{bottleneck_forward.5} parent=39 // pred_check_branch
        %2376 = sbr.rel (%p2374) target = $region48
      $region47: #{bottleneck_forward.5} parent=39 // pred_region
        _
      $region48: #{bottleneck_forward.5} parent=39 // pred_fallthru
        _
    $region40: #{bottleneck_forward.5} parent=5 // pred_fallthru
      _
    %p2377 = scmp.le.s32.totalorder 2, %s13
    // Predicated region
    $region49: #{bottleneck_forward.5} parent=5 // pred_check
      %p2378 = pneg %p2377
    $region50: #{bottleneck_forward.5} parent=5 // pred_check_branch
      %2380 = sbr.rel (%p2378) target = $region52
    $region51: #{bottleneck_forward.5} parent=5 // pred_region
      %s2381 = ssub.s32 %s13, 2
      // Predicated region
      $region53: #{bottleneck_forward.5} parent=51 // pred_check
        %p2382 = pneg %p152
      $region54: #{bottleneck_forward.5} parent=51 // pred_check_branch
        %2384 = sbr.rel (%p2382) target = $region56
      $region55: #{bottleneck_forward.5} parent=51 // pred_region
        %p2385 = scmp.lt.s32.totalorder %s19, 1
        %s2386 = scalar_select %p2385, %s19, 1
        %s2387 = smul.addr %s2386, 8
        %s2388 = smul.addr %s2387, 4
        %s2389 = scalar_lea.vmem %s5, %s2388
      $region56: #{bottleneck_forward.5} parent=51 // pred_fallthru
        _
      // Predicated region
      $region57: #{bottleneck_forward.5} parent=51 // pred_check
        %p2390 = pneg %p178
      $region58: #{bottleneck_forward.5} parent=51 // pred_check_branch
        %2392 = sbr.rel (%p2390) target = $region60
      $region59: #{bottleneck_forward.5} parent=51 // pred_region
        %p2393 = scmp.lt.s32.totalorder %s19, 1
        %s2394 = scalar_select %p2393, %s19, 1
        %s2395 = smul.addr %s2394, 2
        %s2396 = scalar_lea.vmem %s6, %s2395
      $region60: #{bottleneck_forward.5} parent=51 // pred_fallthru
        _
    $region52: #{bottleneck_forward.5} parent=5 // pred_fallthru
      _
  $region6: #{bottleneck_forward.5} parent=0 // loop_footer
    %s17 = sadd.s32 1, %s13
  $region7: #{bottleneck_forward.5} parent=0 // loop_footer_branch
    %12 = sbr.rel target = $region3
  $region8: #{bottleneck_forward.5} parent=0 // loop_exit
    _

</llo_original>
